<compile_context>
chip_gen: v7x
topology: tpu7x:2x2x1
jax: 0.10.0
libtpu: 0.0.40
codegen_flags: <defaults>
</compile_context>

<pallas_src>
import functools
import math

import jax
import jax.numpy as jnp
from jax.experimental import pallas as pl
from jax.experimental.pallas import tpu as pltpu

K = 5      # conv kernel size
PAD = 4    # causal left padding (padding=4 followed by [:, :, :-4])
HALO = 8   # sublane-aligned halo region at the top of every staging slab
LANE = 128


def _round_up(x, m):
  return ((x + m - 1) // m) * m


# ----------------------------------------------------------------------------
# Fused kernel
# ----------------------------------------------------------------------------
def _postconvnet_kernel(x_ref, w1_ref, wm_ref, w5_ref, sh1_ref, shm_ref,
                        sh5_ref, o_ref, slab_x, slab_a, slab_b, slab_c, slab_d,
                        *, tl):
  """One (batch, L-tile) step of the whole 5-layer post-net.

  x_ref:   (1, tl, C0p)        input mel tile (channels zero-padded to 128)
  w1_ref:  (K, C0p, Hp)        conv1 weights, BN scale folded in
  wm_ref:  (3, K, Hp, Hp)      hidden conv weights, BN scales folded in
  w5_ref:  (K, Hp, C0p)        final conv weights
  sh*_ref: (., Cout)           folded per-channel shifts (bias*scale + shift)
  o_ref:   (1, tl, C0p)        output mel tile
  slab_*:  (tl + HALO, C)      per-layer VMEM staging slab; rows
                               [HALO-PAD, HALO) hold the causal halo carried
                               over from the previous L-tile, rows [HALO, ...)
                               hold the current tile.  Persists across steps.
  """
  li = pl.program_id(1)

  def conv_layer(slab, tile, get_w, shift, apply_tanh):
    tile = tile.astype(slab.dtype)
    ncols = slab.shape[-1]

    # --- causal halo: first PAD rows of this layer's input.  Tile 0 -> zeros
    # (== conv1d(padding=4)[..., :-4]); otherwise last PAD rows of the
    # previous tile, still sitting at the tail of this persistent slab.
    @pl.when(li == 0)
    def _():
      slab[pl.ds(HALO - PAD, PAD), :] = jnp.zeros((PAD, ncols), slab.dtype)

    @pl.when(li > 0)
    def _():
      slab[pl.ds(HALO - PAD, PAD), :] = slab[pl.ds(HALO + tl - PAD, PAD), :]

    # Stage the current tile (row offset HALO=8 keeps this store aligned).
    slab[pl.ds(HALO, tl), :] = tile

    # --- K-tap causal conv as K MXU matmuls, f32 accumulation.
    # Tap K-1 is the un-shifted tile: reuse it straight from vregs.
    acc = jnp.dot(tile, get_w(K - 1), preferred_element_type=jnp.float32)
    for k in range(K - 1):
      acc = acc + jnp.dot(slab[pl.ds(HALO - PAD + k, tl), :], get_w(k),
                          preferred_element_type=jnp.float32)
    acc = acc + shift
    return jnp.tanh(acc) if apply_tanh else acc

  # Layer 1: mel -> hidden, folded BN, tanh.
  h = conv_layer(slab_x, x_ref[0, :, :], lambda k: w1_ref[k],
                 sh1_ref[0, :], True)

  # Layers 2-4: hidden -> hidden, folded BN, tanh.
  for j, slab in enumerate((slab_a, slab_b, slab_c)):
    h = conv_layer(slab, h, lambda k, j=j: wm_ref[j, k], shm_ref[j, :], True)

  # Layer 5: hidden -> mel, bias only, no tanh.
  out = conv_layer(slab_d, h, lambda k: w5_ref[k], sh5_ref[0, :], False)
  o_ref[0, :, :] = out.astype(o_ref.dtype)


# ----------------------------------------------------------------------------
# Wrapper: fold / pad parameters and launch the fused kernel
# ----------------------------------------------------------------------------
def _fold_and_pad(w, b, scale, shift, cin_p, cout_p, dtype):
  """Fold BN scale into conv weights, bias+BN shift into a single shift; pad
  channel dims to (cin_p, cout_p)."""
  _, cin, cout = w.shape
  wf = (w * scale[None, None, :]).astype(jnp.float32)
  wf = jnp.pad(wf, ((0, 0), (0, cin_p - cin), (0, cout_p - cout))).astype(dtype)
  sh = b * scale + shift
  sh = jnp.pad(sh, (0, cout_p - cout)).reshape(1, cout_p).astype(jnp.float32)
  return wf, sh


def prepare_fused_params(params, dtype):
  c0 = params["conv1_w"].shape[1]            # 80 mel channels
  h = params["conv1_w"].shape[2]             # num_hidden
  c0p = _round_up(c0, LANE)
  hp = _round_up(h, LANE)

  s1, t1 = params["pre_bn"]
  w1, sh1 = _fold_and_pad(params["conv1_w"], params["conv1_b"], s1, t1,
                          c0p, hp, dtype)

  wm_list, shm_list = [], []
  for i in range(3):
    si, ti = params["bns"][i]
    wi, shi = _fold_and_pad(params["convs_w"][i], params["convs_b"][i],
                            si, ti, hp, hp, dtype)
    wm_list.append(wi)
    shm_list.append(shi)
  wm = jnp.stack(wm_list, axis=0)            # (3, K, Hp, Hp)
  shm = jnp.concatenate(shm_list, axis=0)    # (3, Hp)

  ones = jnp.ones((c0,), jnp.float32)
  zeros = jnp.zeros((c0,), jnp.float32)
  w5, sh5 = _fold_and_pad(params["conv2_w"], params["conv2_b"], ones, zeros,
                          hp, c0p, dtype)

  return dict(w1=w1, sh1=sh1, wm=wm, shm=shm, w5=w5, sh5=sh5,
              c0=c0, c0p=c0p, h=h, hp=hp)


def _pick_tile_l(seq_len, hp):
  # Keep the f32 accumulator (tl, hp) around 128 KiB so it stays in vregs.
  tl = max(32, 32768 // hp)
  tl = _round_up(tl, 8)
  tl = min(tl, _round_up(seq_len, 8))
  return max(tl, 8)


def postconvnet_forward(params, x_ncl, *, tile_l=None):
  """x_ncl: (B, 80, T) as in PyTorch.  Returns (B, 80, T)."""
  B, c0, T = x_ncl.shape
  dtype = x_ncl.dtype
  fp = prepare_fused_params(params, dtype)
  c0p, hp = fp["c0p"], fp["hp"]

  tl = _pick_tile_l(T, hp) if tile_l is None else tile_l
  tp = _round_up(T, tl)
  nl = tp // tl

  # NCL -> NLC, pad channels to 128 lanes and length to a tile multiple
  # (one-time input copy; nothing per-layer).
  x = jnp.transpose(x_ncl, (0, 2, 1))
  x = jnp.pad(x, ((0, 0), (0, tp - T), (0, c0p - c0))).astype(dtype)

  kernel = functools.partial(_postconvnet_kernel, tl=tl)
  out = pl.pallas_call(
      kernel,
      out_shape=jax.ShapeDtypeStruct((B, tp, c0p), dtype),
      grid_spec=pltpu.PrefetchScalarGridSpec(
          num_scalar_prefetch=0,
          grid=(B, nl),
          in_specs=[
              pl.BlockSpec((1, tl, c0p), lambda b, l: (b, l, 0)),
              pl.BlockSpec((K, c0p, hp), lambda b, l: (0, 0, 0)),
              pl.BlockSpec((3, K, hp, hp), lambda b, l: (0, 0, 0, 0)),
              pl.BlockSpec((K, hp, c0p), lambda b, l: (0, 0, 0)),
              pl.BlockSpec((1, hp), lambda b, l: (0, 0)),
              pl.BlockSpec((3, hp), lambda b, l: (0, 0)),
              pl.BlockSpec((1, c0p), lambda b, l: (0, 0)),
          ],
          out_specs=pl.BlockSpec((1, tl, c0p), lambda b, l: (b, l, 0)),
          scratch_shapes=[
              pltpu.VMEM((tl + HALO, c0p), dtype),   # layer-1 input slab
              pltpu.VMEM((tl + HALO, hp), dtype),    # layer-2 input slab
              pltpu.VMEM((tl + HALO, hp), dtype),    # layer-3 input slab
              pltpu.VMEM((tl + HALO, hp), dtype),    # layer-4 input slab
              pltpu.VMEM((tl + HALO, hp), dtype),    # layer-5 input slab
          ],
      ),
      compiler_params=pltpu.CompilerParams(
          # Batch is independent (megacore-shardable on v7x); the L axis must
          # stay sequential because of the causal halo carry.
          dimension_semantics=("parallel", "arbitrary"),
          # Explicit limit so resident weights + slabs double-buffer on all of
          # v5e / v6e (128 MiB) and v7x (64 MiB).
          vmem_limit_bytes=64 * 1024 * 1024,
      ),
  )(x, fp["w1"], fp["wm"], fp["w5"], fp["sh1"], fp["shm"], fp["sh5"])

  out = out[:, :T, :c0]
  return jnp.transpose(out, (0, 2, 1))  # back to (B, 80, T)


# ----------------------------------------------------------------------------
# Parameter construction (deterministic, mirrors the PyTorch __init__)
# ----------------------------------------------------------------------------
def _xavier_uniform(key, cout, cin, k, gain):
  fan_in = cin * k
  fan_out = cout * k
  a = gain * math.sqrt(6.0 / (fan_in + fan_out))
  # PyTorch layout (Cout, Cin, K) -> kernel layout (K, Cin, Cout)
  w = jax.random.uniform(key, (cout, cin, k), jnp.float32, -a, a)
  return jnp.transpose(w, (2, 1, 0))


def _conv_bias(key, cin, k, cout):
  bound = 1.0 / math.sqrt(cin * k)
  return jax.random.uniform(key, (cout,), jnp.float32, -bound, bound)


def make_postconvnet_params(key, num_hidden, num_mels=80):
  gain_tanh = 5.0 / 3.0
  gain_linear = 1.0
  keys = jax.random.split(key, 16)
  ki = iter(range(16))

  params = {}
  params["conv1_w"] = _xavier_uniform(keys[next(ki)], num_hidden, num_mels, K,
                                      gain_tanh)
  params["conv1_b"] = _conv_bias(keys[next(ki)], num_mels, K, num_hidden)
  params["convs_w"] = [
      _xavier_uniform(keys[next(ki)], num_hidden, num_hidden, K, gain_tanh)
      for _ in range(3)]
  params["convs_b"] = [
      _conv_bias(keys[next(ki)], num_hidden, K, num_hidden) for _ in range(3)]
  params["conv2_w"] = _xavier_uniform(keys[next(ki)], num_mels, num_hidden, K,
                                      gain_linear)
  params["conv2_b"] = _conv_bias(keys[next(ki)], num_hidden, K, num_mels)

  # BatchNorm1d default init: gamma=1, beta=0, running_mean=0, running_var=1
  eps = 1e-5
  def bn_fold():
    gamma = jnp.ones((num_hidden,), jnp.float32)
    beta = jnp.zeros((num_hidden,), jnp.float32)
    mean = jnp.zeros((num_hidden,), jnp.float32)
    var = jnp.ones((num_hidden,), jnp.float32)
    scale = gamma / jnp.sqrt(var + eps)
    shift = beta - mean * scale
    return scale, shift

  params["pre_bn"] = bn_fold()
  params["bns"] = [bn_fold() for _ in range(3)]
  return params


# ----------------------------------------------------------------------------
# Pure-JAX reference (same inference-mode semantics) for correctness checks
# ----------------------------------------------------------------------------
def _ref_layer(x_nlc, w, b, scale, shift, apply_tanh):
  B, L, _ = x_nlc.shape
  xpad = jnp.pad(x_nlc, ((0, 0), (PAD, 0), (0, 0)))
  out = sum(jnp.einsum("blc,cd->bld", xpad[:, k:k + L, :], w[k])
            for k in range(K)) + b[None, None, :]
  out = out * scale[None, None, :] + shift[None, None, :]
  return jnp.tanh(out) if apply_tanh else out


def postconvnet_reference(params, x_ncl):
  x = jnp.transpose(x_ncl, (0, 2, 1))
  scale, shift = params["pre_bn"]
  x = _ref_layer(x, params["conv1_w"], params["conv1_b"], scale, shift, True)
  for i in range(3):
    scale, shift = params["bns"][i]
    x = _ref_layer(x, params["convs_w"][i], params["convs_b"][i],
                   scale, shift, True)
  cout = params["conv2_w"].shape[-1]
  x = _ref_layer(x, params["conv2_w"], params["conv2_b"],
                 jnp.ones((cout,)), jnp.zeros((cout,)), False)
  return jnp.transpose(x, (0, 2, 1))


if __name__ == "__main__":
  B, NUM_MELS, NUM_HIDDEN = 2, 80, 32

  key = jax.random.PRNGKey(0)
  k_params, k_x1, k_x2 = jax.random.split(key, 3)
  params = make_postconvnet_params(k_params, NUM_HIDDEN, NUM_MELS)

  # Test 1: small sequence, single L-tile (PyTorch NCL layout input).
  T1 = 16
  x1 = jax.random.normal(k_x1, (B, NUM_MELS, T1), jnp.float32)
  out1 = jax.block_until_ready(postconvnet_forward(params, x1))
  ref1 = jax.block_until_ready(postconvnet_reference(params, x1))
  assert out1.shape == (B, NUM_MELS, T1), out1.shape
  assert jnp.allclose(out1, ref1, atol=1e-4, rtol=1e-4), \
      float(jnp.max(jnp.abs(out1 - ref1)))

  # Test 2: multiple L-tiles (exercises the causal halo carry + tail padding).
  T2 = 40
  x2 = jax.random.normal(k_x2, (B, NUM_MELS, T2), jnp.float32)
  out2 = jax.block_until_ready(postconvnet_forward(params, x2, tile_l=16))
  ref2 = jax.block_until_ready(postconvnet_reference(params, x2))
  assert out2.shape == (B, NUM_MELS, T2), out2.shape
  assert jnp.allclose(out2, ref2, atol=1e-4, rtol=1e-4), \
      float(jnp.max(jnp.abs(out2 - ref2)))

  print("KERNEL_OK")
</pallas_src>

<mosaic_0001>
module attributes {stable_mosaic.version = 11 : i64} {
  func.func @_postconvnet_kernel(%arg0: i32, %arg1: i32, %arg2: memref<1x16x128xf32, #tpu.memory_space<vmem>>, %arg3: memref<5x128x128xf32, #tpu.memory_space<vmem>>, %arg4: memref<3x5x128x128xf32, #tpu.memory_space<vmem>>, %arg5: memref<5x128x128xf32, #tpu.memory_space<vmem>>, %arg6: memref<1x128xf32, #tpu.memory_space<vmem>>, %arg7: memref<3x128xf32, #tpu.memory_space<vmem>>, %arg8: memref<1x128xf32, #tpu.memory_space<vmem>>, %arg9: memref<1x16x128xf32, #tpu.memory_space<vmem>>, %arg10: memref<24x128xf32, #tpu.memory_space<vmem>>, %arg11: memref<24x128xf32, #tpu.memory_space<vmem>>, %arg12: memref<24x128xf32, #tpu.memory_space<vmem>>, %arg13: memref<24x128xf32, #tpu.memory_space<vmem>>, %arg14: memref<24x128xf32, #tpu.memory_space<vmem>>) attributes {dimension_semantics = [#tpu.dimension_semantics<parallel>, #tpu.dimension_semantics<arbitrary>], iteration_bounds = array<i64: 2, 1>, scalar_prefetch = 0 : i64, scratch_operands = 5 : i64, tpu.core_type = #tpu.core_type<tc>, window_params = [{transform_indices = @transform_0, window_bounds = array<i64: 1, 16, 128>}, {pipeline_mode = #tpu.pipeline_mode<synchronous>, transform_indices = @transform_1, window_bounds = array<i64: 5, 128, 128>}, {pipeline_mode = #tpu.pipeline_mode<synchronous>, transform_indices = @transform_2, window_bounds = array<i64: 3, 5, 128, 128>}, {pipeline_mode = #tpu.pipeline_mode<synchronous>, transform_indices = @transform_3, window_bounds = array<i64: 5, 128, 128>}, {pipeline_mode = #tpu.pipeline_mode<synchronous>, transform_indices = @transform_4, window_bounds = array<i64: 1, 128>}, {pipeline_mode = #tpu.pipeline_mode<synchronous>, transform_indices = @transform_5, window_bounds = array<i64: 3, 128>}, {pipeline_mode = #tpu.pipeline_mode<synchronous>, transform_indices = @transform_6, window_bounds = array<i64: 1, 128>}, {transform_indices = @transform_7, window_bounds = array<i64: 1, 16, 128>}]} {
    %c0 = arith.constant 0 : index
    %c0_0 = arith.constant 0 : index
    %c0_1 = arith.constant 0 : index
    %0 = vector.load %arg2[%c0, %c0_0, %c0_1] : memref<1x16x128xf32, #tpu.memory_space<vmem>>, vector<1x16x128xf32>
    %1 = vector.shape_cast %0 : vector<1x16x128xf32> to vector<16x128xf32>
    %c0_2 = arith.constant 0 : index
    %c0_3 = arith.constant 0 : index
    %2 = vector.load %arg6[%c0_2, %c0_3] : memref<1x128xf32, #tpu.memory_space<vmem>>, vector<1x128xf32>
    %3 = vector.shape_cast %2 : vector<1x128xf32> to vector<128xf32>
    %c0_i32 = arith.constant 0 : i32
    %4 = arith.cmpi eq, %arg1, %c0_i32 : i32
    %5 = arith.extui %4 : i1 to i32
    %c0_i32_4 = arith.constant 0 : i32
    %6 = arith.cmpi ne, %5, %c0_i32_4 : i32
    scf.if %6 {
      %cst_190 = arith.constant 0.000000e+00 : f32
      %184 = vector.broadcast %cst_190 : f32 to vector<4x128xf32>
      %c4_191 = arith.constant 4 : index
      %c0_192 = arith.constant 0 : index
      %185 = vector.load %arg10[%c4_191, %c0_192] : memref<24x128xf32, #tpu.memory_space<vmem>>, vector<4x128xf32>
      tpu.vector_store %arg10[%c4_191, %c0_192], %184 {strides = array<i32>} : memref<24x128xf32, #tpu.memory_space<vmem>>, vector<4x128xf32>,
    } else {
    }
    %c0_i32_5 = arith.constant 0 : i32
    %7 = arith.cmpi sgt, %arg1, %c0_i32_5 : i32
    %8 = arith.extui %7 : i1 to i32
    %c0_i32_6 = arith.constant 0 : i32
    %9 = arith.cmpi ne, %8, %c0_i32_6 : i32
    scf.if %9 {
      %c20 = arith.constant 20 : index
      %c0_190 = arith.constant 0 : index
      %184 = vector.load %arg10[%c20, %c0_190] : memref<24x128xf32, #tpu.memory_space<vmem>>, vector<4x128xf32>
      %c4_191 = arith.constant 4 : index
      %c0_192 = arith.constant 0 : index
      %185 = vector.load %arg10[%c4_191, %c0_192] : memref<24x128xf32, #tpu.memory_space<vmem>>, vector<4x128xf32>
      tpu.vector_store %arg10[%c4_191, %c0_192], %184 {strides = array<i32>} : memref<24x128xf32, #tpu.memory_space<vmem>>, vector<4x128xf32>,
    } else {
    }
    %c8 = arith.constant 8 : index
    %c0_7 = arith.constant 0 : index
    %10 = vector.load %arg10[%c8, %c0_7] : memref<24x128xf32, #tpu.memory_space<vmem>>, vector<16x128xf32>
    tpu.vector_store %arg10[%c8, %c0_7], %1 {strides = array<i32>} : memref<24x128xf32, #tpu.memory_space<vmem>>, vector<16x128xf32>,
    %c4 = arith.constant 4 : index
    %c0_8 = arith.constant 0 : index
    %c0_9 = arith.constant 0 : index
    %11 = vector.load %arg3[%c4, %c0_8, %c0_9] : memref<5x128x128xf32, #tpu.memory_space<vmem>>, vector<1x128x128xf32>
    %12 = vector.shape_cast %11 : vector<1x128x128xf32> to vector<128x128xf32>
    %cst = arith.constant dense<0.000000e+00> : vector<16x128xf32>
    %13 = tpu.matmul %1, %12, %cst {dimension_numbers = #tpu.dot_dimension_numbers<[1], [0], [0], [1], [0, 0, 1, 1], [], []>} : vector<16x128xf32>, vector<128x128xf32>, vector<16x128xf32> -> vector<16x128xf32>
    %c4_10 = arith.constant 4 : index
    %c0_11 = arith.constant 0 : index
    %14 = vector.load %arg10[%c4_10, %c0_11] : memref<24x128xf32, #tpu.memory_space<vmem>>, vector<16x128xf32>
    %c0_12 = arith.constant 0 : index
    %c0_13 = arith.constant 0 : index
    %c0_14 = arith.constant 0 : index
    %15 = vector.load %arg3[%c0_12, %c0_13, %c0_14] : memref<5x128x128xf32, #tpu.memory_space<vmem>>, vector<1x128x128xf32>
    %16 = vector.shape_cast %15 : vector<1x128x128xf32> to vector<128x128xf32>
    %cst_15 = arith.constant dense<0.000000e+00> : vector<16x128xf32>
    %17 = tpu.matmul %14, %16, %cst_15 {dimension_numbers = #tpu.dot_dimension_numbers<[1], [0], [0], [1], [0, 0, 1, 1], [], []>} : vector<16x128xf32>, vector<128x128xf32>, vector<16x128xf32> -> vector<16x128xf32>
    %18 = arith.addf %13, %17 : vector<16x128xf32>
    %c5 = arith.constant 5 : index
    %c0_16 = arith.constant 0 : index
    %19 = vector.load %arg10[%c5, %c0_16] : memref<24x128xf32, #tpu.memory_space<vmem>>, vector<16x128xf32>
    %c1 = arith.constant 1 : index
    %c0_17 = arith.constant 0 : index
    %c0_18 = arith.constant 0 : index
    %20 = vector.load %arg3[%c1, %c0_17, %c0_18] : memref<5x128x128xf32, #tpu.memory_space<vmem>>, vector<1x128x128xf32>
    %21 = vector.shape_cast %20 : vector<1x128x128xf32> to vector<128x128xf32>
    %cst_19 = arith.constant dense<0.000000e+00> : vector<16x128xf32>
    %22 = tpu.matmul %19, %21, %cst_19 {dimension_numbers = #tpu.dot_dimension_numbers<[1], [0], [0], [1], [0, 0, 1, 1], [], []>} : vector<16x128xf32>, vector<128x128xf32>, vector<16x128xf32> -> vector<16x128xf32>
    %23 = arith.addf %18, %22 : vector<16x128xf32>
    %c6 = arith.constant 6 : index
    %c0_20 = arith.constant 0 : index
    %24 = vector.load %arg10[%c6, %c0_20] : memref<24x128xf32, #tpu.memory_space<vmem>>, vector<16x128xf32>
    %c2 = arith.constant 2 : index
    %c0_21 = arith.constant 0 : index
    %c0_22 = arith.constant 0 : index
    %25 = vector.load %arg3[%c2, %c0_21, %c0_22] : memref<5x128x128xf32, #tpu.memory_space<vmem>>, vector<1x128x128xf32>
    %26 = vector.shape_cast %25 : vector<1x128x128xf32> to vector<128x128xf32>
    %cst_23 = arith.constant dense<0.000000e+00> : vector<16x128xf32>
    %27 = tpu.matmul %24, %26, %cst_23 {dimension_numbers = #tpu.dot_dimension_numbers<[1], [0], [0], [1], [0, 0, 1, 1], [], []>} : vector<16x128xf32>, vector<128x128xf32>, vector<16x128xf32> -> vector<16x128xf32>
    %28 = arith.addf %23, %27 : vector<16x128xf32>
    %c7 = arith.constant 7 : index
    %c0_24 = arith.constant 0 : index
    %29 = vector.load %arg10[%c7, %c0_24] : memref<24x128xf32, #tpu.memory_space<vmem>>, vector<16x128xf32>
    %c3 = arith.constant 3 : index
    %c0_25 = arith.constant 0 : index
    %c0_26 = arith.constant 0 : index
    %30 = vector.load %arg3[%c3, %c0_25, %c0_26] : memref<5x128x128xf32, #tpu.memory_space<vmem>>, vector<1x128x128xf32>
    %31 = vector.shape_cast %30 : vector<1x128x128xf32> to vector<128x128xf32>
    %cst_27 = arith.constant dense<0.000000e+00> : vector<16x128xf32>
    %32 = tpu.matmul %29, %31, %cst_27 {dimension_numbers = #tpu.dot_dimension_numbers<[1], [0], [0], [1], [0, 0, 1, 1], [], []>} : vector<16x128xf32>, vector<128x128xf32>, vector<16x128xf32> -> vector<16x128xf32>
    %33 = arith.addf %28, %32 : vector<16x128xf32>
    %34 = vector.shape_cast %3 : vector<128xf32> to vector<1x128xf32>
    %35 = vector.broadcast %34 : vector<1x128xf32> to vector<16x128xf32>
    %36 = arith.addf %33, %35 : vector<16x128xf32>
    %37 = math.tanh %36 : vector<16x128xf32>
    %c0_28 = arith.constant 0 : index
    %c0_29 = arith.constant 0 : index
    %38 = vector.load %arg7[%c0_28, %c0_29] : memref<3x128xf32, #tpu.memory_space<vmem>>, vector<1x128xf32>
    %39 = vector.shape_cast %38 : vector<1x128xf32> to vector<128xf32>
    %c0_i32_30 = arith.constant 0 : i32
    %40 = arith.cmpi eq, %arg1, %c0_i32_30 : i32
    %41 = arith.extui %40 : i1 to i32
    %c0_i32_31 = arith.constant 0 : i32
    %42 = arith.cmpi ne, %41, %c0_i32_31 : i32
    scf.if %42 {
      %cst_190 = arith.constant 0.000000e+00 : f32
      %184 = vector.broadcast %cst_190 : f32 to vector<4x128xf32>
      %c4_191 = arith.constant 4 : index
      %c0_192 = arith.constant 0 : index
      %185 = vector.load %arg11[%c4_191, %c0_192] : memref<24x128xf32, #tpu.memory_space<vmem>>, vector<4x128xf32>
      tpu.vector_store %arg11[%c4_191, %c0_192], %184 {strides = array<i32>} : memref<24x128xf32, #tpu.memory_space<vmem>>, vector<4x128xf32>,
    } else {
    }
    %c0_i32_32 = arith.constant 0 : i32
    %43 = arith.cmpi sgt, %arg1, %c0_i32_32 : i32
    %44 = arith.extui %43 : i1 to i32
    %c0_i32_33 = arith.constant 0 : i32
    %45 = arith.cmpi ne, %44, %c0_i32_33 : i32
    scf.if %45 {
      %c20 = arith.constant 20 : index
      %c0_190 = arith.constant 0 : index
      %184 = vector.load %arg11[%c20, %c0_190] : memref<24x128xf32, #tpu.memory_space<vmem>>, vector<4x128xf32>
      %c4_191 = arith.constant 4 : index
      %c0_192 = arith.constant 0 : index
      %185 = vector.load %arg11[%c4_191, %c0_192] : memref<24x128xf32, #tpu.memory_space<vmem>>, vector<4x128xf32>
      tpu.vector_store %arg11[%c4_191, %c0_192], %184 {strides = array<i32>} : memref<24x128xf32, #tpu.memory_space<vmem>>, vector<4x128xf32>,
    } else {
    }
    %c8_34 = arith.constant 8 : index
    %c0_35 = arith.constant 0 : index
    %46 = vector.load %arg11[%c8_34, %c0_35] : memref<24x128xf32, #tpu.memory_space<vmem>>, vector<16x128xf32>
    tpu.vector_store %arg11[%c8_34, %c0_35], %37 {strides = array<i32>} : memref<24x128xf32, #tpu.memory_space<vmem>>, vector<16x128xf32>,
    %c0_36 = arith.constant 0 : index
    %c4_37 = arith.constant 4 : index
    %c0_38 = arith.constant 0 : index
    %c0_39 = arith.constant 0 : index
    %47 = vector.load %arg4[%c0_36, %c4_37, %c0_38, %c0_39] : memref<3x5x128x128xf32, #tpu.memory_space<vmem>>, vector<1x1x128x128xf32>
    %48 = vector.shape_cast %47 : vector<1x1x128x128xf32> to vector<128x128xf32>
    %cst_40 = arith.constant dense<0.000000e+00> : vector<16x128xf32>
    %49 = tpu.matmul %37, %48, %cst_40 {dimension_numbers = #tpu.dot_dimension_numbers<[1], [0], [0], [1], [0, 0, 1, 1], [], []>} : vector<16x128xf32>, vector<128x128xf32>, vector<16x128xf32> -> vector<16x128xf32>
    %c4_41 = arith.constant 4 : index
    %c0_42 = arith.constant 0 : index
    %50 = vector.load %arg11[%c4_41, %c0_42] : memref<24x128xf32, #tpu.memory_space<vmem>>, vector<16x128xf32>
    %c0_43 = arith.constant 0 : index
    %c0_44 = arith.constant 0 : index
    %c0_45 = arith.constant 0 : index
    %c0_46 = arith.constant 0 : index
    %51 = vector.load %arg4[%c0_43, %c0_44, %c0_45, %c0_46] : memref<3x5x128x128xf32, #tpu.memory_space<vmem>>, vector<1x1x128x128xf32>
    %52 = vector.shape_cast %51 : vector<1x1x128x128xf32> to vector<128x128xf32>
    %cst_47 = arith.constant dense<0.000000e+00> : vector<16x128xf32>
    %53 = tpu.matmul %50, %52, %cst_47 {dimension_numbers = #tpu.dot_dimension_numbers<[1], [0], [0], [1], [0, 0, 1, 1], [], []>} : vector<16x128xf32>, vector<128x128xf32>, vector<16x128xf32> -> vector<16x128xf32>
    %54 = arith.addf %49, %53 : vector<16x128xf32>
    %c5_48 = arith.constant 5 : index
    %c0_49 = arith.constant 0 : index
    %55 = vector.load %arg11[%c5_48, %c0_49] : memref<24x128xf32, #tpu.memory_space<vmem>>, vector<16x128xf32>
    %c0_50 = arith.constant 0 : index
    %c1_51 = arith.constant 1 : index
    %c0_52 = arith.constant 0 : index
    %c0_53 = arith.constant 0 : index
    %56 = vector.load %arg4[%c0_50, %c1_51, %c0_52, %c0_53] : memref<3x5x128x128xf32, #tpu.memory_space<vmem>>, vector<1x1x128x128xf32>
    %57 = vector.shape_cast %56 : vector<1x1x128x128xf32> to vector<128x128xf32>
    %cst_54 = arith.constant dense<0.000000e+00> : vector<16x128xf32>
    %58 = tpu.matmul %55, %57, %cst_54 {dimension_numbers = #tpu.dot_dimension_numbers<[1], [0], [0], [1], [0, 0, 1, 1], [], []>} : vector<16x128xf32>, vector<128x128xf32>, vector<16x128xf32> -> vector<16x128xf32>
    %59 = arith.addf %54, %58 : vector<16x128xf32>
    %c6_55 = arith.constant 6 : index
    %c0_56 = arith.constant 0 : index
    %60 = vector.load %arg11[%c6_55, %c0_56] : memref<24x128xf32, #tpu.memory_space<vmem>>, vector<16x128xf32>
    %c0_57 = arith.constant 0 : index
    %c2_58 = arith.constant 2 : index
    %c0_59 = arith.constant 0 : index
    %c0_60 = arith.constant 0 : index
    %61 = vector.load %arg4[%c0_57, %c2_58, %c0_59, %c0_60] : memref<3x5x128x128xf32, #tpu.memory_space<vmem>>, vector<1x1x128x128xf32>
    %62 = vector.shape_cast %61 : vector<1x1x128x128xf32> to vector<128x128xf32>
    %cst_61 = arith.constant dense<0.000000e+00> : vector<16x128xf32>
    %63 = tpu.matmul %60, %62, %cst_61 {dimension_numbers = #tpu.dot_dimension_numbers<[1], [0], [0], [1], [0, 0, 1, 1], [], []>} : vector<16x128xf32>, vector<128x128xf32>, vector<16x128xf32> -> vector<16x128xf32>
    %64 = arith.addf %59, %63 : vector<16x128xf32>
    %c7_62 = arith.constant 7 : index
    %c0_63 = arith.constant 0 : index
    %65 = vector.load %arg11[%c7_62, %c0_63] : memref<24x128xf32, #tpu.memory_space<vmem>>, vector<16x128xf32>
    %c0_64 = arith.constant 0 : index
    %c3_65 = arith.constant 3 : index
    %c0_66 = arith.constant 0 : index
    %c0_67 = arith.constant 0 : index
    %66 = vector.load %arg4[%c0_64, %c3_65, %c0_66, %c0_67] : memref<3x5x128x128xf32, #tpu.memory_space<vmem>>, vector<1x1x128x128xf32>
    %67 = vector.shape_cast %66 : vector<1x1x128x128xf32> to vector<128x128xf32>
    %cst_68 = arith.constant dense<0.000000e+00> : vector<16x128xf32>
    %68 = tpu.matmul %65, %67, %cst_68 {dimension_numbers = #tpu.dot_dimension_numbers<[1], [0], [0], [1], [0, 0, 1, 1], [], []>} : vector<16x128xf32>, vector<128x128xf32>, vector<16x128xf32> -> vector<16x128xf32>
    %69 = arith.addf %64, %68 : vector<16x128xf32>
    %70 = vector.shape_cast %39 : vector<128xf32> to vector<1x128xf32>
    %71 = vector.broadcast %70 : vector<1x128xf32> to vector<16x128xf32>
    %72 = arith.addf %69, %71 : vector<16x128xf32>
    %73 = math.tanh %72 : vector<16x128xf32>
    %c1_69 = arith.constant 1 : index
    %c0_70 = arith.constant 0 : index
    %74 = vector.load %arg7[%c1_69, %c0_70] : memref<3x128xf32, #tpu.memory_space<vmem>>, vector<1x128xf32>
    %75 = vector.shape_cast %74 : vector<1x128xf32> to vector<128xf32>
    %c0_i32_71 = arith.constant 0 : i32
    %76 = arith.cmpi eq, %arg1, %c0_i32_71 : i32
    %77 = arith.extui %76 : i1 to i32
    %c0_i32_72 = arith.constant 0 : i32
    %78 = arith.cmpi ne, %77, %c0_i32_72 : i32
    scf.if %78 {
      %cst_190 = arith.constant 0.000000e+00 : f32
      %184 = vector.broadcast %cst_190 : f32 to vector<4x128xf32>
      %c4_191 = arith.constant 4 : index
      %c0_192 = arith.constant 0 : index
      %185 = vector.load %arg12[%c4_191, %c0_192] : memref<24x128xf32, #tpu.memory_space<vmem>>, vector<4x128xf32>
      tpu.vector_store %arg12[%c4_191, %c0_192], %184 {strides = array<i32>} : memref<24x128xf32, #tpu.memory_space<vmem>>, vector<4x128xf32>,
    } else {
    }
    %c0_i32_73 = arith.constant 0 : i32
    %79 = arith.cmpi sgt, %arg1, %c0_i32_73 : i32
    %80 = arith.extui %79 : i1 to i32
    %c0_i32_74 = arith.constant 0 : i32
    %81 = arith.cmpi ne, %80, %c0_i32_74 : i32
    scf.if %81 {
      %c20 = arith.constant 20 : index
      %c0_190 = arith.constant 0 : index
      %184 = vector.load %arg12[%c20, %c0_190] : memref<24x128xf32, #tpu.memory_space<vmem>>, vector<4x128xf32>
      %c4_191 = arith.constant 4 : index
      %c0_192 = arith.constant 0 : index
      %185 = vector.load %arg12[%c4_191, %c0_192] : memref<24x128xf32, #tpu.memory_space<vmem>>, vector<4x128xf32>
      tpu.vector_store %arg12[%c4_191, %c0_192], %184 {strides = array<i32>} : memref<24x128xf32, #tpu.memory_space<vmem>>, vector<4x128xf32>,
    } else {
    }
    %c8_75 = arith.constant 8 : index
    %c0_76 = arith.constant 0 : index
    %82 = vector.load %arg12[%c8_75, %c0_76] : memref<24x128xf32, #tpu.memory_space<vmem>>, vector<16x128xf32>
    tpu.vector_store %arg12[%c8_75, %c0_76], %73 {strides = array<i32>} : memref<24x128xf32, #tpu.memory_space<vmem>>, vector<16x128xf32>,
    %c1_77 = arith.constant 1 : index
    %c4_78 = arith.constant 4 : index
    %c0_79 = arith.constant 0 : index
    %c0_80 = arith.constant 0 : index
    %83 = vector.load %arg4[%c1_77, %c4_78, %c0_79, %c0_80] : memref<3x5x128x128xf32, #tpu.memory_space<vmem>>, vector<1x1x128x128xf32>
    %84 = vector.shape_cast %83 : vector<1x1x128x128xf32> to vector<128x128xf32>
    %cst_81 = arith.constant dense<0.000000e+00> : vector<16x128xf32>
    %85 = tpu.matmul %73, %84, %cst_81 {dimension_numbers = #tpu.dot_dimension_numbers<[1], [0], [0], [1], [0, 0, 1, 1], [], []>} : vector<16x128xf32>, vector<128x128xf32>, vector<16x128xf32> -> vector<16x128xf32>
    %c4_82 = arith.constant 4 : index
    %c0_83 = arith.constant 0 : index
    %86 = vector.load %arg12[%c4_82, %c0_83] : memref<24x128xf32, #tpu.memory_space<vmem>>, vector<16x128xf32>
    %c1_84 = arith.constant 1 : index
    %c0_85 = arith.constant 0 : index
    %c0_86 = arith.constant 0 : index
    %c0_87 = arith.constant 0 : index
    %87 = vector.load %arg4[%c1_84, %c0_85, %c0_86, %c0_87] : memref<3x5x128x128xf32, #tpu.memory_space<vmem>>, vector<1x1x128x128xf32>
    %88 = vector.shape_cast %87 : vector<1x1x128x128xf32> to vector<128x128xf32>
    %cst_88 = arith.constant dense<0.000000e+00> : vector<16x128xf32>
    %89 = tpu.matmul %86, %88, %cst_88 {dimension_numbers = #tpu.dot_dimension_numbers<[1], [0], [0], [1], [0, 0, 1, 1], [], []>} : vector<16x128xf32>, vector<128x128xf32>, vector<16x128xf32> -> vector<16x128xf32>
    %90 = arith.addf %85, %89 : vector<16x128xf32>
    %c5_89 = arith.constant 5 : index
    %c0_90 = arith.constant 0 : index
    %91 = vector.load %arg12[%c5_89, %c0_90] : memref<24x128xf32, #tpu.memory_space<vmem>>, vector<16x128xf32>
    %c1_91 = arith.constant 1 : index
    %c1_92 = arith.constant 1 : index
    %c0_93 = arith.constant 0 : index
    %c0_94 = arith.constant 0 : index
    %92 = vector.load %arg4[%c1_91, %c1_92, %c0_93, %c0_94] : memref<3x5x128x128xf32, #tpu.memory_space<vmem>>, vector<1x1x128x128xf32>
    %93 = vector.shape_cast %92 : vector<1x1x128x128xf32> to vector<128x128xf32>
    %cst_95 = arith.constant dense<0.000000e+00> : vector<16x128xf32>
    %94 = tpu.matmul %91, %93, %cst_95 {dimension_numbers = #tpu.dot_dimension_numbers<[1], [0], [0], [1], [0, 0, 1, 1], [], []>} : vector<16x128xf32>, vector<128x128xf32>, vector<16x128xf32> -> vector<16x128xf32>
    %95 = arith.addf %90, %94 : vector<16x128xf32>
    %c6_96 = arith.constant 6 : index
    %c0_97 = arith.constant 0 : index
    %96 = vector.load %arg12[%c6_96, %c0_97] : memref<24x128xf32, #tpu.memory_space<vmem>>, vector<16x128xf32>
    %c1_98 = arith.constant 1 : index
    %c2_99 = arith.constant 2 : index
    %c0_100 = arith.constant 0 : index
    %c0_101 = arith.constant 0 : index
    %97 = vector.load %arg4[%c1_98, %c2_99, %c0_100, %c0_101] : memref<3x5x128x128xf32, #tpu.memory_space<vmem>>, vector<1x1x128x128xf32>
    %98 = vector.shape_cast %97 : vector<1x1x128x128xf32> to vector<128x128xf32>
    %cst_102 = arith.constant dense<0.000000e+00> : vector<16x128xf32>
    %99 = tpu.matmul %96, %98, %cst_102 {dimension_numbers = #tpu.dot_dimension_numbers<[1], [0], [0], [1], [0, 0, 1, 1], [], []>} : vector<16x128xf32>, vector<128x128xf32>, vector<16x128xf32> -> vector<16x128xf32>
    %100 = arith.addf %95, %99 : vector<16x128xf32>
    %c7_103 = arith.constant 7 : index
    %c0_104 = arith.constant 0 : index
    %101 = vector.load %arg12[%c7_103, %c0_104] : memref<24x128xf32, #tpu.memory_space<vmem>>, vector<16x128xf32>
    %c1_105 = arith.constant 1 : index
    %c3_106 = arith.constant 3 : index
    %c0_107 = arith.constant 0 : index
    %c0_108 = arith.constant 0 : index
    %102 = vector.load %arg4[%c1_105, %c3_106, %c0_107, %c0_108] : memref<3x5x128x128xf32, #tpu.memory_space<vmem>>, vector<1x1x128x128xf32>
    %103 = vector.shape_cast %102 : vector<1x1x128x128xf32> to vector<128x128xf32>
    %cst_109 = arith.constant dense<0.000000e+00> : vector<16x128xf32>
    %104 = tpu.matmul %101, %103, %cst_109 {dimension_numbers = #tpu.dot_dimension_numbers<[1], [0], [0], [1], [0, 0, 1, 1], [], []>} : vector<16x128xf32>, vector<128x128xf32>, vector<16x128xf32> -> vector<16x128xf32>
    %105 = arith.addf %100, %104 : vector<16x128xf32>
    %106 = vector.shape_cast %75 : vector<128xf32> to vector<1x128xf32>
    %107 = vector.broadcast %106 : vector<1x128xf32> to vector<16x128xf32>
    %108 = arith.addf %105, %107 : vector<16x128xf32>
    %109 = math.tanh %108 : vector<16x128xf32>
    %c2_110 = arith.constant 2 : index
    %c0_111 = arith.constant 0 : index
    %110 = vector.load %arg7[%c2_110, %c0_111] : memref<3x128xf32, #tpu.memory_space<vmem>>, vector<1x128xf32>
    %111 = vector.shape_cast %110 : vector<1x128xf32> to vector<128xf32>
    %c0_i32_112 = arith.constant 0 : i32
    %112 = arith.cmpi eq, %arg1, %c0_i32_112 : i32
    %113 = arith.extui %112 : i1 to i32
    %c0_i32_113 = arith.constant 0 : i32
    %114 = arith.cmpi ne, %113, %c0_i32_113 : i32
    scf.if %114 {
      %cst_190 = arith.constant 0.000000e+00 : f32
      %184 = vector.broadcast %cst_190 : f32 to vector<4x128xf32>
      %c4_191 = arith.constant 4 : index
      %c0_192 = arith.constant 0 : index
      %185 = vector.load %arg13[%c4_191, %c0_192] : memref<24x128xf32, #tpu.memory_space<vmem>>, vector<4x128xf32>
      tpu.vector_store %arg13[%c4_191, %c0_192], %184 {strides = array<i32>} : memref<24x128xf32, #tpu.memory_space<vmem>>, vector<4x128xf32>,
    } else {
    }
    %c0_i32_114 = arith.constant 0 : i32
    %115 = arith.cmpi sgt, %arg1, %c0_i32_114 : i32
    %116 = arith.extui %115 : i1 to i32
    %c0_i32_115 = arith.constant 0 : i32
    %117 = arith.cmpi ne, %116, %c0_i32_115 : i32
    scf.if %117 {
      %c20 = arith.constant 20 : index
      %c0_190 = arith.constant 0 : index
      %184 = vector.load %arg13[%c20, %c0_190] : memref<24x128xf32, #tpu.memory_space<vmem>>, vector<4x128xf32>
      %c4_191 = arith.constant 4 : index
      %c0_192 = arith.constant 0 : index
      %185 = vector.load %arg13[%c4_191, %c0_192] : memref<24x128xf32, #tpu.memory_space<vmem>>, vector<4x128xf32>
      tpu.vector_store %arg13[%c4_191, %c0_192], %184 {strides = array<i32>} : memref<24x128xf32, #tpu.memory_space<vmem>>, vector<4x128xf32>,
    } else {
    }
    %c8_116 = arith.constant 8 : index
    %c0_117 = arith.constant 0 : index
    %118 = vector.load %arg13[%c8_116, %c0_117] : memref<24x128xf32, #tpu.memory_space<vmem>>, vector<16x128xf32>
    tpu.vector_store %arg13[%c8_116, %c0_117], %109 {strides = array<i32>} : memref<24x128xf32, #tpu.memory_space<vmem>>, vector<16x128xf32>,
    %c2_118 = arith.constant 2 : index
    %c4_119 = arith.constant 4 : index
    %c0_120 = arith.constant 0 : index
    %c0_121 = arith.constant 0 : index
    %119 = vector.load %arg4[%c2_118, %c4_119, %c0_120, %c0_121] : memref<3x5x128x128xf32, #tpu.memory_space<vmem>>, vector<1x1x128x128xf32>
    %120 = vector.shape_cast %119 : vector<1x1x128x128xf32> to vector<128x128xf32>
    %cst_122 = arith.constant dense<0.000000e+00> : vector<16x128xf32>
    %121 = tpu.matmul %109, %120, %cst_122 {dimension_numbers = #tpu.dot_dimension_numbers<[1], [0], [0], [1], [0, 0, 1, 1], [], []>} : vector<16x128xf32>, vector<128x128xf32>, vector<16x128xf32> -> vector<16x128xf32>
    %c4_123 = arith.constant 4 : index
    %c0_124 = arith.constant 0 : index
    %122 = vector.load %arg13[%c4_123, %c0_124] : memref<24x128xf32, #tpu.memory_space<vmem>>, vector<16x128xf32>
    %c2_125 = arith.constant 2 : index
    %c0_126 = arith.constant 0 : index
    %c0_127 = arith.constant 0 : index
    %c0_128 = arith.constant 0 : index
    %123 = vector.load %arg4[%c2_125, %c0_126, %c0_127, %c0_128] : memref<3x5x128x128xf32, #tpu.memory_space<vmem>>, vector<1x1x128x128xf32>
    %124 = vector.shape_cast %123 : vector<1x1x128x128xf32> to vector<128x128xf32>
    %cst_129 = arith.constant dense<0.000000e+00> : vector<16x128xf32>
    %125 = tpu.matmul %122, %124, %cst_129 {dimension_numbers = #tpu.dot_dimension_numbers<[1], [0], [0], [1], [0, 0, 1, 1], [], []>} : vector<16x128xf32>, vector<128x128xf32>, vector<16x128xf32> -> vector<16x128xf32>
    %126 = arith.addf %121, %125 : vector<16x128xf32>
    %c5_130 = arith.constant 5 : index
    %c0_131 = arith.constant 0 : index
    %127 = vector.load %arg13[%c5_130, %c0_131] : memref<24x128xf32, #tpu.memory_space<vmem>>, vector<16x128xf32>
    %c2_132 = arith.constant 2 : index
    %c1_133 = arith.constant 1 : index
    %c0_134 = arith.constant 0 : index
    %c0_135 = arith.constant 0 : index
    %128 = vector.load %arg4[%c2_132, %c1_133, %c0_134, %c0_135] : memref<3x5x128x128xf32, #tpu.memory_space<vmem>>, vector<1x1x128x128xf32>
    %129 = vector.shape_cast %128 : vector<1x1x128x128xf32> to vector<128x128xf32>
    %cst_136 = arith.constant dense<0.000000e+00> : vector<16x128xf32>
    %130 = tpu.matmul %127, %129, %cst_136 {dimension_numbers = #tpu.dot_dimension_numbers<[1], [0], [0], [1], [0, 0, 1, 1], [], []>} : vector<16x128xf32>, vector<128x128xf32>, vector<16x128xf32> -> vector<16x128xf32>
    %131 = arith.addf %126, %130 : vector<16x128xf32>
    %c6_137 = arith.constant 6 : index
    %c0_138 = arith.constant 0 : index
    %132 = vector.load %arg13[%c6_137, %c0_138] : memref<24x128xf32, #tpu.memory_space<vmem>>, vector<16x128xf32>
    %c2_139 = arith.constant 2 : index
    %c2_140 = arith.constant 2 : index
    %c0_141 = arith.constant 0 : index
    %c0_142 = arith.constant 0 : index
    %133 = vector.load %arg4[%c2_139, %c2_140, %c0_141, %c0_142] : memref<3x5x128x128xf32, #tpu.memory_space<vmem>>, vector<1x1x128x128xf32>
    %134 = vector.shape_cast %133 : vector<1x1x128x128xf32> to vector<128x128xf32>
    %cst_143 = arith.constant dense<0.000000e+00> : vector<16x128xf32>
    %135 = tpu.matmul %132, %134, %cst_143 {dimension_numbers = #tpu.dot_dimension_numbers<[1], [0], [0], [1], [0, 0, 1, 1], [], []>} : vector<16x128xf32>, vector<128x128xf32>, vector<16x128xf32> -> vector<16x128xf32>
    %136 = arith.addf %131, %135 : vector<16x128xf32>
    %c7_144 = arith.constant 7 : index
    %c0_145 = arith.constant 0 : index
    %137 = vector.load %arg13[%c7_144, %c0_145] : memref<24x128xf32, #tpu.memory_space<vmem>>, vector<16x128xf32>
    %c2_146 = arith.constant 2 : index
    %c3_147 = arith.constant 3 : index
    %c0_148 = arith.constant 0 : index
    %c0_149 = arith.constant 0 : index
    %138 = vector.load %arg4[%c2_146, %c3_147, %c0_148, %c0_149] : memref<3x5x128x128xf32, #tpu.memory_space<vmem>>, vector<1x1x128x128xf32>
    %139 = vector.shape_cast %138 : vector<1x1x128x128xf32> to vector<128x128xf32>
    %cst_150 = arith.constant dense<0.000000e+00> : vector<16x128xf32>
    %140 = tpu.matmul %137, %139, %cst_150 {dimension_numbers = #tpu.dot_dimension_numbers<[1], [0], [0], [1], [0, 0, 1, 1], [], []>} : vector<16x128xf32>, vector<128x128xf32>, vector<16x128xf32> -> vector<16x128xf32>
    %141 = arith.addf %136, %140 : vector<16x128xf32>
    %142 = vector.shape_cast %111 : vector<128xf32> to vector<1x128xf32>
    %143 = vector.broadcast %142 : vector<1x128xf32> to vector<16x128xf32>
    %144 = arith.addf %141, %143 : vector<16x128xf32>
    %145 = math.tanh %144 : vector<16x128xf32>
    %c0_151 = arith.constant 0 : index
    %c0_152 = arith.constant 0 : index
    %146 = vector.load %arg8[%c0_151, %c0_152] : memref<1x128xf32, #tpu.memory_space<vmem>>, vector<1x128xf32>
    %147 = vector.shape_cast %146 : vector<1x128xf32> to vector<128xf32>
    %c0_i32_153 = arith.constant 0 : i32
    %148 = arith.cmpi eq, %arg1, %c0_i32_153 : i32
    %149 = arith.extui %148 : i1 to i32
    %c0_i32_154 = arith.constant 0 : i32
    %150 = arith.cmpi ne, %149, %c0_i32_154 : i32
    scf.if %150 {
      %cst_190 = arith.constant 0.000000e+00 : f32
      %184 = vector.broadcast %cst_190 : f32 to vector<4x128xf32>
      %c4_191 = arith.constant 4 : index
      %c0_192 = arith.constant 0 : index
      %185 = vector.load %arg14[%c4_191, %c0_192] : memref<24x128xf32, #tpu.memory_space<vmem>>, vector<4x128xf32>
      tpu.vector_store %arg14[%c4_191, %c0_192], %184 {strides = array<i32>} : memref<24x128xf32, #tpu.memory_space<vmem>>, vector<4x128xf32>,
    } else {
    }
    %c0_i32_155 = arith.constant 0 : i32
    %151 = arith.cmpi sgt, %arg1, %c0_i32_155 : i32
    %152 = arith.extui %151 : i1 to i32
    %c0_i32_156 = arith.constant 0 : i32
    %153 = arith.cmpi ne, %152, %c0_i32_156 : i32
    scf.if %153 {
      %c20 = arith.constant 20 : index
      %c0_190 = arith.constant 0 : index
      %184 = vector.load %arg14[%c20, %c0_190] : memref<24x128xf32, #tpu.memory_space<vmem>>, vector<4x128xf32>
      %c4_191 = arith.constant 4 : index
      %c0_192 = arith.constant 0 : index
      %185 = vector.load %arg14[%c4_191, %c0_192] : memref<24x128xf32, #tpu.memory_space<vmem>>, vector<4x128xf32>
      tpu.vector_store %arg14[%c4_191, %c0_192], %184 {strides = array<i32>} : memref<24x128xf32, #tpu.memory_space<vmem>>, vector<4x128xf32>,
    } else {
    }
    %c8_157 = arith.constant 8 : index
    %c0_158 = arith.constant 0 : index
    %154 = vector.load %arg14[%c8_157, %c0_158] : memref<24x128xf32, #tpu.memory_space<vmem>>, vector<16x128xf32>
    tpu.vector_store %arg14[%c8_157, %c0_158], %145 {strides = array<i32>} : memref<24x128xf32, #tpu.memory_space<vmem>>, vector<16x128xf32>,
    %c4_159 = arith.constant 4 : index
    %c0_160 = arith.constant 0 : index
    %c0_161 = arith.constant 0 : index
    %155 = vector.load %arg5[%c4_159, %c0_160, %c0_161] : memref<5x128x128xf32, #tpu.memory_space<vmem>>, vector<1x128x128xf32>
    %156 = vector.shape_cast %155 : vector<1x128x128xf32> to vector<128x128xf32>
    %cst_162 = arith.constant dense<0.000000e+00> : vector<16x128xf32>
    %157 = tpu.matmul %145, %156, %cst_162 {dimension_numbers = #tpu.dot_dimension_numbers<[1], [0], [0], [1], [0, 0, 1, 1], [], []>} : vector<16x128xf32>, vector<128x128xf32>, vector<16x128xf32> -> vector<16x128xf32>
    %c4_163 = arith.constant 4 : index
    %c0_164 = arith.constant 0 : index
    %158 = vector.load %arg14[%c4_163, %c0_164] : memref<24x128xf32, #tpu.memory_space<vmem>>, vector<16x128xf32>
    %c0_165 = arith.constant 0 : index
    %c0_166 = arith.constant 0 : index
    %c0_167 = arith.constant 0 : index
    %159 = vector.load %arg5[%c0_165, %c0_166, %c0_167] : memref<5x128x128xf32, #tpu.memory_space<vmem>>, vector<1x128x128xf32>
    %160 = vector.shape_cast %159 : vector<1x128x128xf32> to vector<128x128xf32>
    %cst_168 = arith.constant dense<0.000000e+00> : vector<16x128xf32>
    %161 = tpu.matmul %158, %160, %cst_168 {dimension_numbers = #tpu.dot_dimension_numbers<[1], [0], [0], [1], [0, 0, 1, 1], [], []>} : vector<16x128xf32>, vector<128x128xf32>, vector<16x128xf32> -> vector<16x128xf32>
    %162 = arith.addf %157, %161 : vector<16x128xf32>
    %c5_169 = arith.constant 5 : index
    %c0_170 = arith.constant 0 : index
    %163 = vector.load %arg14[%c5_169, %c0_170] : memref<24x128xf32, #tpu.memory_space<vmem>>, vector<16x128xf32>
    %c1_171 = arith.constant 1 : index
    %c0_172 = arith.constant 0 : index
    %c0_173 = arith.constant 0 : index
    %164 = vector.load %arg5[%c1_171, %c0_172, %c0_173] : memref<5x128x128xf32, #tpu.memory_space<vmem>>, vector<1x128x128xf32>
    %165 = vector.shape_cast %164 : vector<1x128x128xf32> to vector<128x128xf32>
    %cst_174 = arith.constant dense<0.000000e+00> : vector<16x128xf32>
    %166 = tpu.matmul %163, %165, %cst_174 {dimension_numbers = #tpu.dot_dimension_numbers<[1], [0], [0], [1], [0, 0, 1, 1], [], []>} : vector<16x128xf32>, vector<128x128xf32>, vector<16x128xf32> -> vector<16x128xf32>
    %167 = arith.addf %162, %166 : vector<16x128xf32>
    %c6_175 = arith.constant 6 : index
    %c0_176 = arith.constant 0 : index
    %168 = vector.load %arg14[%c6_175, %c0_176] : memref<24x128xf32, #tpu.memory_space<vmem>>, vector<16x128xf32>
    %c2_177 = arith.constant 2 : index
    %c0_178 = arith.constant 0 : index
    %c0_179 = arith.constant 0 : index
    %169 = vector.load %arg5[%c2_177, %c0_178, %c0_179] : memref<5x128x128xf32, #tpu.memory_space<vmem>>, vector<1x128x128xf32>
    %170 = vector.shape_cast %169 : vector<1x128x128xf32> to vector<128x128xf32>
    %cst_180 = arith.constant dense<0.000000e+00> : vector<16x128xf32>
    %171 = tpu.matmul %168, %170, %cst_180 {dimension_numbers = #tpu.dot_dimension_numbers<[1], [0], [0], [1], [0, 0, 1, 1], [], []>} : vector<16x128xf32>, vector<128x128xf32>, vector<16x128xf32> -> vector<16x128xf32>
    %172 = arith.addf %167, %171 : vector<16x128xf32>
    %c7_181 = arith.constant 7 : index
    %c0_182 = arith.constant 0 : index
    %173 = vector.load %arg14[%c7_181, %c0_182] : memref<24x128xf32, #tpu.memory_space<vmem>>, vector<16x128xf32>
    %c3_183 = arith.constant 3 : index
    %c0_184 = arith.constant 0 : index
    %c0_185 = arith.constant 0 : index
    %174 = vector.load %arg5[%c3_183, %c0_184, %c0_185] : memref<5x128x128xf32, #tpu.memory_space<vmem>>, vector<1x128x128xf32>
    %175 = vector.shape_cast %174 : vector<1x128x128xf32> to vector<128x128xf32>
    %cst_186 = arith.constant dense<0.000000e+00> : vector<16x128xf32>
    %176 = tpu.matmul %173, %175, %cst_186 {dimension_numbers = #tpu.dot_dimension_numbers<[1], [0], [0], [1], [0, 0, 1, 1], [], []>} : vector<16x128xf32>, vector<128x128xf32>, vector<16x128xf32> -> vector<16x128xf32>
    %177 = arith.addf %172, %176 : vector<16x128xf32>
    %178 = vector.shape_cast %147 : vector<128xf32> to vector<1x128xf32>
    %179 = vector.broadcast %178 : vector<1x128xf32> to vector<16x128xf32>
    %180 = arith.addf %177, %179 : vector<16x128xf32>
    %c0_187 = arith.constant 0 : index
    %c0_188 = arith.constant 0 : index
    %c0_189 = arith.constant 0 : index
    %181 = vector.load %arg9[%c0_187, %c0_188, %c0_189] : memref<1x16x128xf32, #tpu.memory_space<vmem>>, vector<1x16x128xf32>
    %182 = vector.shape_cast %181 : vector<1x16x128xf32> to vector<16x128xf32>
    %183 = vector.shape_cast %180 : vector<16x128xf32> to vector<1x16x128xf32>
    tpu.vector_store %arg9[%c0_187, %c0_188, %c0_189], %183 {strides = array<i32>} : memref<1x16x128xf32, #tpu.memory_space<vmem>>, vector<1x16x128xf32>,
    return
  }
  func.func @transform_0(%arg0: i32, %arg1: i32) -> (i32, i32, i32) {
    %c0_i32 = arith.constant 0 : i32
    %c0_i32_0 = arith.constant 0 : i32
    return %arg0, %arg1, %c0_i32 : i32, i32, i32
  }
  func.func @transform_1(%arg0: i32, %arg1: i32) -> (i32, i32, i32) {
    %c0_i32 = arith.constant 0 : i32
    %c0_i32_0 = arith.constant 0 : i32
    %c0_i32_1 = arith.constant 0 : i32
    %c0_i32_2 = arith.constant 0 : i32
    return %c0_i32, %c0_i32_0, %c0_i32_1 : i32, i32, i32
  }
  func.func @transform_2(%arg0: i32, %arg1: i32) -> (i32, i32, i32, i32) {
    %c0_i32 = arith.constant 0 : i32
    %c0_i32_0 = arith.constant 0 : i32
    %c0_i32_1 = arith.constant 0 : i32
    %c0_i32_2 = arith.constant 0 : i32
    %c0_i32_3 = arith.constant 0 : i32
    return %c0_i32, %c0_i32_0, %c0_i32_1, %c0_i32_2 : i32, i32, i32, i32
  }
  func.func @transform_3(%arg0: i32, %arg1: i32) -> (i32, i32, i32) {
    %c0_i32 = arith.constant 0 : i32
    %c0_i32_0 = arith.constant 0 : i32
    %c0_i32_1 = arith.constant 0 : i32
    %c0_i32_2 = arith.constant 0 : i32
    return %c0_i32, %c0_i32_0, %c0_i32_1 : i32, i32, i32
  }
  func.func @transform_4(%arg0: i32, %arg1: i32) -> (i32, i32) {
    %c0_i32 = arith.constant 0 : i32
    %c0_i32_0 = arith.constant 0 : i32
    %c0_i32_1 = arith.constant 0 : i32
    return %c0_i32, %c0_i32_0 : i32, i32
  }
  func.func @transform_5(%arg0: i32, %arg1: i32) -> (i32, i32) {
    %c0_i32 = arith.constant 0 : i32
    %c0_i32_0 = arith.constant 0 : i32
    %c0_i32_1 = arith.constant 0 : i32
    return %c0_i32, %c0_i32_0 : i32, i32
  }
  func.func @transform_6(%arg0: i32, %arg1: i32) -> (i32, i32) {
    %c0_i32 = arith.constant 0 : i32
    %c0_i32_0 = arith.constant 0 : i32
    %c0_i32_1 = arith.constant 0 : i32
    return %c0_i32, %c0_i32_0 : i32, i32
  }
  func.func @transform_7(%arg0: i32, %arg1: i32) -> (i32, i32, i32) {
    %c0_i32 = arith.constant 0 : i32
    %c0_i32_0 = arith.constant 0 : i32
    return %arg0, %arg1, %c0_i32 : i32, i32, i32
  }
}

</mosaic_0001>

<llo_original>
// kernel: tpu_custom_call.1
$region0: #{tpu_custom_call.1}
  #allocation0 [shape = 'u32[]', space=smem, size = 0x4, offset = 0x4, fixed_abs, tag = 'smem constant byte address 0x4 - core index']
  #allocation1 [shape = 'u32[144,128]{1,0:T(1,128)}', space=vmem, size = 0x12000, scoped, tag = 'internal scratch']
  #allocation2 [shape = 'f32[24,128]{1,0:T(8,128)}', space=vmem, size = 0x3000, scoped, tag = 'scratch operand']
  #allocation3 [shape = 'f32[24,128]{1,0:T(8,128)}', space=vmem, size = 0x3000, scoped, tag = 'scratch operand']
  #allocation4 [shape = 'f32[24,128]{1,0:T(8,128)}', space=vmem, size = 0x3000, scoped, tag = 'scratch operand']
  #allocation5 [shape = 'f32[24,128]{1,0:T(8,128)}', space=vmem, size = 0x3000, scoped, tag = 'scratch operand']
  #allocation6 [shape = 'f32[24,128]{1,0:T(8,128)}', space=vmem, size = 0x3000, scoped, tag = 'scratch operand']
  %s0 = inlined_call_operand.hbm [shape: f32[2,16,128], index: 0, kind: input, shape index: {}]
  %s1 = inlined_call_operand.hbm [shape: f32[5,128,128], index: 1, kind: input, shape index: {}]
  %s2 = inlined_call_operand.hbm [shape: f32[3,5,128,128], index: 2, kind: input, shape index: {}]
  %s3 = inlined_call_operand.hbm [shape: f32[5,128,128], index: 3, kind: input, shape index: {}]
  %s4 = inlined_call_operand.hbm [shape: f32[1,128], index: 4, kind: input, shape index: {}]
  %s5 = inlined_call_operand.hbm [shape: f32[3,128], index: 5, kind: input, shape index: {}]
  %s6 = inlined_call_operand.hbm [shape: f32[1,128], index: 6, kind: input, shape index: {}]
  %s7 = inlined_call_operand.hbm [shape: f32[2,16,128], index: 7, kind: output, shape index: {}]
  %s8 = sld [smem:[#allocation0]]
  $region129: #{tpu_custom_call.1} parent=0
    _
  %s10 = ssub.s32 1, %s8
  %s11 = scalar_select 0, %s10, %s8
  $region1: #{tpu_custom_call.1} parent=0
    #allocation7 [shape = 'u8[16384]{0}', space=vmem, size = 0x4000, scoped, tag = 'input window, operand 0']
    #allocation8 [shape = 's32[2]{0}', space=sflag, size = 0x8, scoped, tag = 'scoped memory for tpu_custom_call.1']
    #allocation9 [shape = 's32[2]{0}', space=sflag, size = 0x8, scoped, tag = 'scoped memory for tpu_custom_call.1']
    #allocation10 [shape = 'u8[327680]{0}', space=vmem, size = 0x50000, scoped, tag = 'input window, operand 1, single buffered']
    #allocation11 [shape = 's32[1]{0}', space=sflag, size = 0x4, scoped, tag = 'scoped memory for tpu_custom_call.1']
    #allocation12 [shape = 'u8[983040]{0}', space=vmem, size = 0xf0000, scoped, tag = 'input window, operand 2, single buffered']
    #allocation13 [shape = 'u8[327680]{0}', space=vmem, size = 0x50000, scoped, tag = 'input window, operand 3, single buffered']
    #allocation14 [shape = 's32[1]{0}', space=sflag, size = 0x4, scoped, tag = 'scoped memory for tpu_custom_call.1']
    #allocation15 [shape = 'u8[512]{0}', space=vmem, size = 0x400, scoped, tag = 'input window, operand 4, single buffered']
    #allocation16 [shape = 'u8[2048]{0}', space=vmem, size = 0x800, scoped, tag = 'input window, operand 5, single buffered']
    #allocation17 [shape = 's32[1]{0}', space=sflag, size = 0x4, scoped, tag = 'scoped memory for tpu_custom_call.1']
    #allocation18 [shape = 'u8[512]{0}', space=vmem, size = 0x400, scoped, tag = 'input window, operand 6, single buffered']
    #allocation19 [shape = 'u8[16384]{0}', space=vmem, size = 0x4000, scoped, tag = 'output window, operand 0']
    %12 = vsyncpa [#allocation8], 0
    %s13 = scalar_lea.sflag [#allocation8], 1
    %14 = vsyncpa %s13, 0
    %15 = vsyncpa [#allocation11], 0
    %16 = vsyncpa [#allocation14], 0
    %17 = vsyncpa [#allocation17], 0
    %18 = vsyncpa [#allocation9], 0
    %s19 = scalar_lea.sflag [#allocation9], 1
    %20 = vsyncpa %s19, 0
    loop: start=0, step=1, limit=4
    $region2: #{tpu_custom_call.1} parent=1 // loop_pre_header
      _
    $region3: #{tpu_custom_call.1} parent=1 // loop_header
      %s22 = sphi 0, %s26
      %p23 = scmp.ge.s32.totalorder %s22, 4
      %s29 = sphi 0, %s41
      %s30 = sphi 0, %s37
      %s31 = sphi 0, %s29
      %s32 = sphi 0, %s30
      %s33 = sphi 0, %s31
      %s34 = sphi 0, %s32
      %s46 = sphi 0, %s48
      %s49 = sphi 0, %s46
      %s50 = sphi 0, %s49
      %s66 = sphi 0, %s50
      %s70 = sphi 0, %s70
      %s72 = sphi 0, %s70
      %s73 = sphi 0, %s72
      %s87 = sphi 0, %s73
      %s91 = sphi 0, %s91
      %s93 = sphi 0, %s91
      %s94 = sphi 0, %s93
      %s108 = sphi 0, %s94
      %s112 = sphi 0, %s112
      %s114 = sphi 0, %s112
      %s115 = sphi 0, %s114
      %s129 = sphi 0, %s115
      %s133 = sphi 0, %s133
      %s135 = sphi 0, %s133
      %s136 = sphi 0, %s135
      %s150 = sphi 0, %s136
      %s154 = sphi 0, %s154
      %s156 = sphi 0, %s154
      %s157 = sphi 0, %s156
      %s171 = sphi 0, %s157
      %s175 = sphi 0, %s175
      %s177 = sphi 0, %s175
      %s178 = sphi 0, %s177
      %s192 = sphi 0, %s178
      %s200 = sphi 0, %s202
      %s203 = sphi 0, %s200
      %s204 = sphi 0, %s203
      %s220 = sphi 0, %s204
    $region4: #{tpu_custom_call.1} parent=1 // loop_header_branch
      %25 = sbr.rel (%p23) target = $region8
    $region5: #{tpu_custom_call.1} parent=1 // loop_body
      %s27 = ssub.s32 %s22, 1
      %s28 = ssub.s32 %s22, 2
      %s35 = sadd.s32 1, %s30
      %p36 = scmp.ge.s32.totalorder %s35, 1
      %s37 = scalar_select %p36, 0, %s35
      %s38 = sadd.s32 1, %s29
      %s39 = scalar_select %p36, %s38, %s29
      %p40 = scmp.ge.s32.totalorder %s39, 2
      %s41 = scalar_select %p40, 0, %s39
      %s42 = ssub.s32 %s29, %s41
      %s43 = ssub.s32 %s30, %s37
      %s44 = sor.u32 %s42, %s43
      %p45 = scmp.eq.s32.totalorder %s44, 0
      %s47 = sadd.s32 %s46, 1
      %s48 = scalar_select %p45, %s46, %s47
      %p51 = pneg %p45
      %p52 = scmp.eq.s32.totalorder %s22, 1
      %p53 = por %p51, %p52
      %p54 = scmp.ne.s32.totalorder %s46, %s49
      %p55 = scmp.eq.s32.totalorder %s22, 0
      %p56 = por %p54, %p55
      %p57 = scmp.ne.s32.totalorder %s46, %s49
      %p58 = scmp.eq.s32.totalorder %s27, 1
      %p59 = por %p57, %p58
      %p60 = scmp.ne.s32.totalorder %s49, %s50
      %p61 = scmp.eq.s32.totalorder %s27, 0
      %p62 = por %p60, %p61
      %p63 = scmp.ne.s32.totalorder %s49, %s50
      %p64 = scmp.eq.s32.totalorder %s28, 1
      %p65 = por %p63, %p64
      %p67 = scmp.ne.s32.totalorder %s50, %s66
      %p68 = scmp.eq.s32.totalorder %s28, 0
      %p69 = por %p67, %p68
      %s71 = sadd.s32 %s70, 1
      %p74 = scmp.eq.s32.totalorder %s22, 1
      %p75 = scmp.ne.s32.totalorder %s70, %s72
      %p76 = scmp.eq.s32.totalorder %s22, 0
      %p77 = por %p75, %p76
      %p78 = scmp.ne.s32.totalorder %s70, %s72
      %p79 = scmp.eq.s32.totalorder %s27, 1
      %p80 = por %p78, %p79
      %p81 = scmp.ne.s32.totalorder %s72, %s73
      %p82 = scmp.eq.s32.totalorder %s27, 0
      %p83 = por %p81, %p82
      %p84 = scmp.ne.s32.totalorder %s72, %s73
      %p85 = scmp.eq.s32.totalorder %s28, 1
      %p86 = por %p84, %p85
      %p88 = scmp.ne.s32.totalorder %s73, %s87
      %p89 = scmp.eq.s32.totalorder %s28, 0
      %p90 = por %p88, %p89
      %s92 = sadd.s32 %s91, 1
      %p95 = scmp.eq.s32.totalorder %s22, 1
      %p96 = scmp.ne.s32.totalorder %s91, %s93
      %p97 = scmp.eq.s32.totalorder %s22, 0
      %p98 = por %p96, %p97
      %p99 = scmp.ne.s32.totalorder %s91, %s93
      %p100 = scmp.eq.s32.totalorder %s27, 1
      %p101 = por %p99, %p100
      %p102 = scmp.ne.s32.totalorder %s93, %s94
      %p103 = scmp.eq.s32.totalorder %s27, 0
      %p104 = por %p102, %p103
      %p105 = scmp.ne.s32.totalorder %s93, %s94
      %p106 = scmp.eq.s32.totalorder %s28, 1
      %p107 = por %p105, %p106
      %p109 = scmp.ne.s32.totalorder %s94, %s108
      %p110 = scmp.eq.s32.totalorder %s28, 0
      %p111 = por %p109, %p110
      %s113 = sadd.s32 %s112, 1
      %p116 = scmp.eq.s32.totalorder %s22, 1
      %p117 = scmp.ne.s32.totalorder %s112, %s114
      %p118 = scmp.eq.s32.totalorder %s22, 0
      %p119 = por %p117, %p118
      %p120 = scmp.ne.s32.totalorder %s112, %s114
      %p121 = scmp.eq.s32.totalorder %s27, 1
      %p122 = por %p120, %p121
      %p123 = scmp.ne.s32.totalorder %s114, %s115
      %p124 = scmp.eq.s32.totalorder %s27, 0
      %p125 = por %p123, %p124
      %p126 = scmp.ne.s32.totalorder %s114, %s115
      %p127 = scmp.eq.s32.totalorder %s28, 1
      %p128 = por %p126, %p127
      %p130 = scmp.ne.s32.totalorder %s115, %s129
      %p131 = scmp.eq.s32.totalorder %s28, 0
      %p132 = por %p130, %p131
      %s134 = sadd.s32 %s133, 1
      %p137 = scmp.eq.s32.totalorder %s22, 1
      %p138 = scmp.ne.s32.totalorder %s133, %s135
      %p139 = scmp.eq.s32.totalorder %s22, 0
      %p140 = por %p138, %p139
      %p141 = scmp.ne.s32.totalorder %s133, %s135
      %p142 = scmp.eq.s32.totalorder %s27, 1
      %p143 = por %p141, %p142
      %p144 = scmp.ne.s32.totalorder %s135, %s136
      %p145 = scmp.eq.s32.totalorder %s27, 0
      %p146 = por %p144, %p145
      %p147 = scmp.ne.s32.totalorder %s135, %s136
      %p148 = scmp.eq.s32.totalorder %s28, 1
      %p149 = por %p147, %p148
      %p151 = scmp.ne.s32.totalorder %s136, %s150
      %p152 = scmp.eq.s32.totalorder %s28, 0
      %p153 = por %p151, %p152
      %s155 = sadd.s32 %s154, 1
      %p158 = scmp.eq.s32.totalorder %s22, 1
      %p159 = scmp.ne.s32.totalorder %s154, %s156
      %p160 = scmp.eq.s32.totalorder %s22, 0
      %p161 = por %p159, %p160
      %p162 = scmp.ne.s32.totalorder %s154, %s156
      %p163 = scmp.eq.s32.totalorder %s27, 1
      %p164 = por %p162, %p163
      %p165 = scmp.ne.s32.totalorder %s156, %s157
      %p166 = scmp.eq.s32.totalorder %s27, 0
      %p167 = por %p165, %p166
      %p168 = scmp.ne.s32.totalorder %s156, %s157
      %p169 = scmp.eq.s32.totalorder %s28, 1
      %p170 = por %p168, %p169
      %p172 = scmp.ne.s32.totalorder %s157, %s171
      %p173 = scmp.eq.s32.totalorder %s28, 0
      %p174 = por %p172, %p173
      %s176 = sadd.s32 %s175, 1
      %p179 = scmp.eq.s32.totalorder %s22, 1
      %p180 = scmp.ne.s32.totalorder %s175, %s177
      %p181 = scmp.eq.s32.totalorder %s22, 0
      %p182 = por %p180, %p181
      %p183 = scmp.ne.s32.totalorder %s175, %s177
      %p184 = scmp.eq.s32.totalorder %s27, 1
      %p185 = por %p183, %p184
      %p186 = scmp.ne.s32.totalorder %s177, %s178
      %p187 = scmp.eq.s32.totalorder %s27, 0
      %p188 = por %p186, %p187
      %p189 = scmp.ne.s32.totalorder %s177, %s178
      %p190 = scmp.eq.s32.totalorder %s28, 1
      %p191 = por %p189, %p190
      %p193 = scmp.ne.s32.totalorder %s178, %s192
      %p194 = scmp.eq.s32.totalorder %s28, 0
      %p195 = por %p193, %p194
      %s196 = ssub.s32 %s29, %s41
      %s197 = ssub.s32 %s30, %s37
      %s198 = sor.u32 %s196, %s197
      %p199 = scmp.eq.s32.totalorder %s198, 0
      %s201 = sadd.s32 %s200, 1
      %s202 = scalar_select %p199, %s200, %s201
      %p205 = pneg %p199
      %p206 = scmp.eq.s32.totalorder %s22, 1
      %p207 = por %p205, %p206
      %p208 = scmp.ne.s32.totalorder %s200, %s203
      %p209 = scmp.eq.s32.totalorder %s22, 0
      %p210 = por %p208, %p209
      %p211 = scmp.ne.s32.totalorder %s200, %s203
      %p212 = scmp.eq.s32.totalorder %s27, 1
      %p213 = por %p211, %p212
      %p214 = scmp.ne.s32.totalorder %s203, %s204
      %p215 = scmp.eq.s32.totalorder %s27, 0
      %p216 = por %p214, %p215
      %p217 = scmp.ne.s32.totalorder %s203, %s204
      %p218 = scmp.eq.s32.totalorder %s28, 1
      %p219 = por %p217, %p218
      %p221 = scmp.ne.s32.totalorder %s204, %s220
      %p222 = scmp.eq.s32.totalorder %s28, 0
      %p223 = por %p221, %p222
      %p224 = scmp.le.s32.totalorder 1, %s22
      %p225 = scmp.lt.s32.totalorder %s22, 3
      %p226 = pnand %p224, %p225
      %p227 = pneg %p226
      // Predicated region
      $region9: #{tpu_custom_call.1} parent=5 // pred_check
        _
      $region10: #{tpu_custom_call.1} parent=5 // pred_check_branch
        %229 = sbr.rel (%p226) target = $region12
      $region11: #{tpu_custom_call.1} parent=5 // pred_region
        %s230 = ssub.s32 %s22, 1
        // Predicated region
        $region13: #{tpu_custom_call.1} parent=11 // pred_check
          %p231 = pneg %p83
        $region14: #{tpu_custom_call.1} parent=11 // pred_check_branch
          %233 = sbr.rel (%p231) target = $region16
        $region15: #{tpu_custom_call.1} parent=11 // pred_region
          %s235 = ssub.s32 10240, 10240
          %236 = vsyncadd [#allocation11], %s235
          %s237 = sshll.u32 [#allocation10], 4
          %s238 = int_to_ptr.vmem [resolvable:$true] %s237
          %243 = dma.hbm_to_vmem [thread:$0]  %s1, 10240, %s238, [#allocation11], 128, 128, 8
        $region16: #{tpu_custom_call.1} parent=11 // pred_fallthru
          _
        // Predicated region
        $region17: #{tpu_custom_call.1} parent=11 // pred_check
          %p244 = pneg %p104
        $region18: #{tpu_custom_call.1} parent=11 // pred_check_branch
          %246 = sbr.rel (%p244) target = $region20
        $region19: #{tpu_custom_call.1} parent=11 // pred_region
          %s248 = ssub.s32 30720, 30720
          %249 = vsyncadd [#allocation11], %s248
          %s250 = sshll.u32 [#allocation12], 4
          %s251 = int_to_ptr.vmem [resolvable:$true] %s250
          %256 = dma.hbm_to_vmem [thread:$0]  %s2, 30720, %s251, [#allocation11], 128, 128, 8
        $region20: #{tpu_custom_call.1} parent=11 // pred_fallthru
          _
        // Predicated region
        $region21: #{tpu_custom_call.1} parent=11 // pred_check
          %p257 = pneg %p125
        $region22: #{tpu_custom_call.1} parent=11 // pred_check_branch
          %259 = sbr.rel (%p257) target = $region24
        $region23: #{tpu_custom_call.1} parent=11 // pred_region
          %s261 = ssub.s32 10240, 10240
          %262 = vsyncadd [#allocation14], %s261
          %s263 = sshll.u32 [#allocation13], 4
          %s264 = int_to_ptr.vmem [resolvable:$true] %s263
          %269 = dma.hbm_to_vmem [thread:$0]  %s3, 10240, %s264, [#allocation14], 128, 128, 8
        $region24: #{tpu_custom_call.1} parent=11 // pred_fallthru
          _
        // Predicated region
        $region25: #{tpu_custom_call.1} parent=11 // pred_check
          %p270 = pneg %p146
        $region26: #{tpu_custom_call.1} parent=11 // pred_check_branch
          %272 = sbr.rel (%p270) target = $region28
        $region27: #{tpu_custom_call.1} parent=11 // pred_region
          %s274 = ssub.s32 16, 16
          %275 = vsyncadd [#allocation14], %s274
          %s277 = sshll.u32 [#allocation15], 4
          %s278 = int_to_ptr.vmem [resolvable:$true] %s277
          %280 = dma.hbm_to_vmem [thread:$0]  %s4, 16, %s278, [#allocation14]
        $region28: #{tpu_custom_call.1} parent=11 // pred_fallthru
          _
        // Predicated region
        $region29: #{tpu_custom_call.1} parent=11 // pred_check
          %p281 = pneg %p167
        $region30: #{tpu_custom_call.1} parent=11 // pred_check_branch
          %283 = sbr.rel (%p281) target = $region32
        $region31: #{tpu_custom_call.1} parent=11 // pred_region
          %s285 = ssub.s32 64, 64
          %286 = vsyncadd [#allocation17], %s285
          %s288 = sshll.u32 [#allocation16], 4
          %s289 = int_to_ptr.vmem [resolvable:$true] %s288
          %291 = dma.hbm_to_vmem [thread:$0]  %s5, 64, %s289, [#allocation17]
        $region32: #{tpu_custom_call.1} parent=11 // pred_fallthru
          _
        // Predicated region
        $region33: #{tpu_custom_call.1} parent=11 // pred_check
          %p292 = pneg %p188
        $region34: #{tpu_custom_call.1} parent=11 // pred_check_branch
          %294 = sbr.rel (%p292) target = $region36
        $region35: #{tpu_custom_call.1} parent=11 // pred_region
          %s296 = ssub.s32 16, 16
          %297 = vsyncadd [#allocation17], %s296
          %s299 = sshll.u32 [#allocation18], 4
          %s300 = int_to_ptr.vmem [resolvable:$true] %s299
          %302 = dma.hbm_to_vmem [thread:$0]  %s6, 16, %s300, [#allocation17]
        $region36: #{tpu_custom_call.1} parent=11 // pred_fallthru
          _
      $region12: #{tpu_custom_call.1} parent=5 // pred_fallthru
        _
      %p303 = scmp.lt.s32.totalorder %s22, 2
      // Predicated region
      $region37: #{tpu_custom_call.1} parent=5 // pred_check
        %p304 = pneg %p303
      $region38: #{tpu_custom_call.1} parent=5 // pred_check_branch
        %306 = sbr.rel (%p304) target = $region40
      $region39: #{tpu_custom_call.1} parent=5 // pred_region
        // Predicated region
        $region41: #{tpu_custom_call.1} parent=39 // pred_check
          %p307 = pneg %p56
        $region42: #{tpu_custom_call.1} parent=39 // pred_check_branch
          %309 = sbr.rel (%p307) target = $region44
        $region43: #{tpu_custom_call.1} parent=39 // pred_region
          %s310 = sand.u32 %s46, 1
          %s311 = scalar_lea.sflag [#allocation8], %s310
          %s312 = sand.u32 %s46, 1
          %s313 = smul.addr %s312, 16
          %s314 = scalar_lea.vmem [#allocation7], %s313
          %s315 = smul.u32 2, %s30
          %s317 = ssub.s32 256, 256
          %318 = vsyncadd %s311, %s317
          %s319 = smul.addr %s29, 2
          %s320 = sadd.s32 %s315, %s319
          %s321 = smul.addr %s320, 128
          %s322 = scalar_lea.hbm %s0, %s321
          %s323 = sshll.u32 %s314, 4
          %s324 = int_to_ptr.vmem [resolvable:$true] %s323
          %329 = dma.hbm_to_vmem [thread:$0]  %s322, 256, %s324, %s311, 128, 128, 8
        $region44: #{tpu_custom_call.1} parent=39 // pred_fallthru
          _
      $region40: #{tpu_custom_call.1} parent=5 // pred_fallthru
        _
      %p330 = scmp.le.s32.totalorder 1, %s22
      %p331 = scmp.lt.s32.totalorder %s22, 3
      %p332 = pnand %p330, %p331
      %p333 = pneg %p332
      // Predicated region
      $region45: #{tpu_custom_call.1} parent=5 // pred_check
        _
      $region46: #{tpu_custom_call.1} parent=5 // pred_check_branch
        %335 = sbr.rel (%p332) target = $region48
      $region47: #{tpu_custom_call.1} parent=5 // pred_region
        %s336 = ssub.s32 %s22, 1
        %s337 = sand.u32 %s49, 1
        %s338 = scalar_lea.sflag [#allocation8], %s337
        %s339 = sand.u32 %s49, 1
        %s340 = smul.addr %s339, 16
        %s341 = scalar_lea.vmem [#allocation7], %s340
        // Predicated region
        $region49: #{tpu_custom_call.1} parent=47 // pred_check
          %p342 = pneg %p62
        $region50: #{tpu_custom_call.1} parent=47 // pred_check_branch
          %344 = sbr.rel (%p342) target = $region52
        $region51: #{tpu_custom_call.1} parent=47 // pred_region
          %345 = dma.done %s338, 256
        $region52: #{tpu_custom_call.1} parent=47 // pred_fallthru
          _
        // Predicated region
        $region53: #{tpu_custom_call.1} parent=47 // pred_check
          %p346 = pneg %p83
        $region54: #{tpu_custom_call.1} parent=47 // pred_check_branch
          %348 = sbr.rel (%p346) target = $region56
        $region55: #{tpu_custom_call.1} parent=47 // pred_region
          %349 = dma.done [#allocation11], 10240
        $region56: #{tpu_custom_call.1} parent=47 // pred_fallthru
          _
        // Predicated region
        $region57: #{tpu_custom_call.1} parent=47 // pred_check
          %p350 = pneg %p104
        $region58: #{tpu_custom_call.1} parent=47 // pred_check_branch
          %352 = sbr.rel (%p350) target = $region60
        $region59: #{tpu_custom_call.1} parent=47 // pred_region
          %353 = dma.done [#allocation11], 30720
        $region60: #{tpu_custom_call.1} parent=47 // pred_fallthru
          _
        // Predicated region
        $region61: #{tpu_custom_call.1} parent=47 // pred_check
          %p354 = pneg %p125
        $region62: #{tpu_custom_call.1} parent=47 // pred_check_branch
          %356 = sbr.rel (%p354) target = $region64
        $region63: #{tpu_custom_call.1} parent=47 // pred_region
          %357 = dma.done [#allocation14], 10240
        $region64: #{tpu_custom_call.1} parent=47 // pred_fallthru
          _
        // Predicated region
        $region65: #{tpu_custom_call.1} parent=47 // pred_check
          %p358 = pneg %p146
        $region66: #{tpu_custom_call.1} parent=47 // pred_check_branch
          %360 = sbr.rel (%p358) target = $region68
        $region67: #{tpu_custom_call.1} parent=47 // pred_region
          %361 = dma.done [#allocation14], 16
        $region68: #{tpu_custom_call.1} parent=47 // pred_fallthru
          _
        // Predicated region
        $region69: #{tpu_custom_call.1} parent=47 // pred_check
          %p362 = pneg %p167
        $region70: #{tpu_custom_call.1} parent=47 // pred_check_branch
          %364 = sbr.rel (%p362) target = $region72
        $region71: #{tpu_custom_call.1} parent=47 // pred_region
          %365 = dma.done [#allocation17], 64
        $region72: #{tpu_custom_call.1} parent=47 // pred_fallthru
          _
        // Predicated region
        $region73: #{tpu_custom_call.1} parent=47 // pred_check
          %p366 = pneg %p188
        $region74: #{tpu_custom_call.1} parent=47 // pred_check_branch
          %368 = sbr.rel (%p366) target = $region76
        $region75: #{tpu_custom_call.1} parent=47 // pred_region
          %369 = dma.done [#allocation17], 16
        $region76: #{tpu_custom_call.1} parent=47 // pred_fallthru
          _
        %s370 = sand.u32 %s49, 1
        %s371 = scalar_lea.sflag [#allocation8], %s370
        %s372 = sand.u32 %s49, 1
        %s373 = smul.addr %s372, 16
        %s374 = scalar_lea.vmem [#allocation7], %s373
        %p375 = pneg %p62
        %p376 = pneg %p59
        %p377 = pneg %p83
        %p378 = pneg %p80
        %p379 = pneg %p104
        %p380 = pneg %p101
        %p381 = pneg %p125
        %p382 = pneg %p122
        %p383 = pneg %p146
        %p384 = pneg %p143
        %p385 = pneg %p167
        %p386 = pneg %p164
        %p387 = pneg %p188
        %p388 = pneg %p185
        %p389 = pneg %p216
        %p390 = pneg %p213
        %s391 = sand.u32 %s203, 1
        %s392 = scalar_lea.sflag [#allocation9], %s391
        %s393 = sand.u32 %s203, 1
        %s394 = smul.addr %s393, 16
        %s395 = scalar_lea.vmem [#allocation19], %s394
        %s396 = smul.u32 2, %s32
        %s397 = smul.u32 2, %s32
        %v398 = vld [vmem:[%s341] sm:$0xff]
        %v399 = vld [vmem:[%s341 + $0x8] sm:$0xff]
        %v400 = vld [vmem:[#allocation15] sm:$0x1]
        %p401 = scmp.eq.s32.totalorder %s32, 0
        // Predicated region
        $region77: #{tpu_custom_call.1} parent=47 // pred_check
          %p402 = pneg %p401
        $region78: #{tpu_custom_call.1} parent=47 // pred_check_branch
          %404 = sbr.rel (%p402) target = $region80
        $region79: #{tpu_custom_call.1} parent=47 // pred_region
          %405 = vst [vmem:[#allocation2 + $0x4] sm:$0xf] 0.0
        $region80: #{tpu_custom_call.1} parent=47 // pred_fallthru
          _
        %p406 = scmp.gt.s32.totalorder %s32, 0
        // Predicated region
        $region81: #{tpu_custom_call.1} parent=47 // pred_check
          %p407 = pneg %p406
        $region82: #{tpu_custom_call.1} parent=47 // pred_check_branch
          %409 = sbr.rel (%p407) target = $region84
        $region83: #{tpu_custom_call.1} parent=47 // pred_region
          %v410 = vld [vmem:[#allocation2 + $0x14] sm:$0xf]
          %411 = vst [vmem:[#allocation2 + $0x4] sm:$0xf] %v410
        $region84: #{tpu_custom_call.1} parent=47 // pred_fallthru
          _
        %412 = vst [vmem:[#allocation2 + $0x8] sm:$0xff] %v398
        %413 = vst [vmem:[#allocation2 + $0x10] sm:$0xff] %v399
        %s414 = scalar_lea.vmem [#allocation10], 512
        %v415 = vld [vmem:[%s414] sm:$0xff]
        %v416 = vld [vmem:[%s414 + $0x8] sm:$0xff]
        %v417 = vld [vmem:[%s414 + $0x10] sm:$0xff]
        %v418 = vld [vmem:[%s414 + $0x18] sm:$0xff]
        %v419 = vld [vmem:[%s414 + $0x20] sm:$0xff]
        %v420 = vld [vmem:[%s414 + $0x28] sm:$0xff]
        %v421 = vld [vmem:[%s414 + $0x30] sm:$0xff]
        %v422 = vld [vmem:[%s414 + $0x38] sm:$0xff]
        %v423 = vld [vmem:[%s414 + $0x40] sm:$0xff]
        %v424 = vld [vmem:[%s414 + $0x48] sm:$0xff]
        %v425 = vld [vmem:[%s414 + $0x50] sm:$0xff]
        %v426 = vld [vmem:[%s414 + $0x58] sm:$0xff]
        %v427 = vld [vmem:[%s414 + $0x60] sm:$0xff]
        %v428 = vld [vmem:[%s414 + $0x68] sm:$0xff]
        %v429 = vld [vmem:[%s414 + $0x70] sm:$0xff]
        %v430 = vld [vmem:[%s414 + $0x78] sm:$0xff]
        %v431 = vld [vmem:[#allocation2 + $0x4] sm:$0xff]
        %v432 = vld [vmem:[#allocation2 + $0xc] sm:$0xff]
        %v433 = vld [vmem:[#allocation10] sm:$0xff]
        %v434 = vld [vmem:[#allocation10 + $0x8] sm:$0xff]
        %v435 = vld [vmem:[#allocation10 + $0x10] sm:$0xff]
        %v436 = vld [vmem:[#allocation10 + $0x18] sm:$0xff]
        %v437 = vld [vmem:[#allocation10 + $0x20] sm:$0xff]
        %v438 = vld [vmem:[#allocation10 + $0x28] sm:$0xff]
        %v439 = vld [vmem:[#allocation10 + $0x30] sm:$0xff]
        %v440 = vld [vmem:[#allocation10 + $0x38] sm:$0xff]
        %v441 = vld [vmem:[#allocation10 + $0x40] sm:$0xff]
        %v442 = vld [vmem:[#allocation10 + $0x48] sm:$0xff]
        %v443 = vld [vmem:[#allocation10 + $0x50] sm:$0xff]
        %v444 = vld [vmem:[#allocation10 + $0x58] sm:$0xff]
        %v445 = vld [vmem:[#allocation10 + $0x60] sm:$0xff]
        %v446 = vld [vmem:[#allocation10 + $0x68] sm:$0xff]
        %v447 = vld [vmem:[#allocation10 + $0x70] sm:$0xff]
        %v448 = vld [vmem:[#allocation10 + $0x78] sm:$0xff]
        %449 = vmatprep.subr.mxu0 0.0
        %450 = vmatpush1.msra.mxu0 %v433
        %451 = vmatprep.subr.mxu0 0.0
        %452 = vmatpush1.msra.mxu0 %v434
        %453 = vmatprep.subr.mxu0 0.0
        %454 = vmatpush1.msra.mxu0 %v435
        %455 = vmatprep.subr.mxu0 0.0
        %456 = vmatpush1.msra.mxu0 %v436
        %457 = vmatprep.subr.mxu0 0.0
        %458 = vmatpush1.msra.mxu0 %v437
        %459 = vmatprep.subr.mxu0 0.0
        %460 = vmatpush1.msra.mxu0 %v438
        %461 = vmatprep.subr.mxu0 0.0
        %462 = vmatpush1.msra.mxu0 %v439
        %463 = vmatprep.subr.mxu0 0.0
        %464 = vmatpush1.msra.mxu0 %v440
        %465 = vmatprep.subr.mxu0 0.0
        %466 = vmatpush1.msra.mxu0 %v441
        %467 = vmatprep.subr.mxu0 0.0
        %468 = vmatpush1.msra.mxu0 %v442
        %469 = vmatprep.subr.mxu0 0.0
        %470 = vmatpush1.msra.mxu0 %v443
        %471 = vmatprep.subr.mxu0 0.0
        %472 = vmatpush1.msra.mxu0 %v444
        %473 = vmatprep.subr.mxu0 0.0
        %474 = vmatpush1.msra.mxu0 %v445
        %475 = vmatprep.subr.mxu0 0.0
        %476 = vmatpush1.msra.mxu0 %v446
        %477 = vmatprep.subr.mxu0 0.0
        %478 = vmatpush1.msra.mxu0 %v447
        %479 = vmatprep.subr.mxu0 0.0
        %480 = vmatpush1.msra.mxu0 %v448
        %481 = vmatprep.subr.mxu0 0.0
        %482 = vmatpush1.msra.mxu0 0.0
        %483 = vmatprep.subr.mxu0 0.0
        %484 = vmatpush1.msra.mxu0 0.0
        %485 = vmatprep.subr.mxu0 0.0
        %486 = vmatpush1.msra.mxu0 0.0
        %487 = vmatprep.subr.mxu0 0.0
        %488 = vmatpush1.msra.mxu0 0.0
        %489 = vmatprep.subr.mxu0 0.0
        %490 = vmatpush1.msra.mxu0 0.0
        %491 = vmatprep.subr.mxu0 0.0
        %492 = vmatpush1.msra.mxu0 0.0
        %493 = vmatprep.subr.mxu0 0.0
        %494 = vmatpush1.msra.mxu0 0.0
        %495 = vmatprep.subr.mxu0 0.0
        %496 = vmatpush1.msra.mxu0 0.0
        %497 = vmatprep.subr.mxu0 0.0
        %498 = vmatpush1.msra.mxu0 0.0
        %499 = vmatprep.subr.mxu0 0.0
        %500 = vmatpush1.msra.mxu0 0.0
        %501 = vmatprep.subr.mxu0 0.0
        %502 = vmatpush1.msra.mxu0 0.0
        %503 = vmatprep.subr.mxu0 0.0
        %504 = vmatpush1.msra.mxu0 0.0
        %505 = vmatprep.subr.mxu0 0.0
        %506 = vmatpush1.msra.mxu0 0.0
        %507 = vmatprep.subr.mxu0 0.0
        %508 = vmatpush1.msra.mxu0 0.0
        %509 = vmatprep.subr.mxu0 0.0
        %510 = vmatpush1.msra.mxu0 0.0
        %511 = vmatprep.subr.mxu0 0.0
        %512 = vmatpush1.msra.mxu0 0.0
        %513 = vmatprep.mubr.f32.mxu0 0.0
        %514 = vmatmul.mubr.f32.gmra.mrb[0].mxu0 %v431
        %v515 = vpop.f32.mrb[0].mxu0
        %v516 = vadd.f32 0.0, %v515
        %v517 = vpop.f32.mrb[0].mxu0
        %518 = vmatprep.mubr.f32.mxu0 0.0
        %519 = vmatmul.mubr.f32.gmra.mrb[0].mxu0 %v432
        %v520 = vpop.f32.mrb[0].mxu0
        %v521 = vadd.f32 0.0, %v520
        %v522 = vpop.f32.mrb[0].mxu0
        %523 = vdwg.mxu0
        %524 = vmatprep.subr.mxu0 0.0
        %525 = vmatpush1.msra.mxu0 %v415
        %526 = vmatprep.subr.mxu0 0.0
        %527 = vmatpush1.msra.mxu0 %v416
        %528 = vmatprep.subr.mxu0 0.0
        %529 = vmatpush1.msra.mxu0 %v417
        %530 = vmatprep.subr.mxu0 0.0
        %531 = vmatpush1.msra.mxu0 %v418
        %532 = vmatprep.subr.mxu0 0.0
        %533 = vmatpush1.msra.mxu0 %v419
        %534 = vmatprep.subr.mxu0 0.0
        %535 = vmatpush1.msra.mxu0 %v420
        %536 = vmatprep.subr.mxu0 0.0
        %537 = vmatpush1.msra.mxu0 %v421
        %538 = vmatprep.subr.mxu0 0.0
        %539 = vmatpush1.msra.mxu0 %v422
        %540 = vmatprep.subr.mxu0 0.0
        %541 = vmatpush1.msra.mxu0 %v423
        %542 = vmatprep.subr.mxu0 0.0
        %543 = vmatpush1.msra.mxu0 %v424
        %544 = vmatprep.subr.mxu0 0.0
        %545 = vmatpush1.msra.mxu0 %v425
        %546 = vmatprep.subr.mxu0 0.0
        %547 = vmatpush1.msra.mxu0 %v426
        %548 = vmatprep.subr.mxu0 0.0
        %549 = vmatpush1.msra.mxu0 %v427
        %550 = vmatprep.subr.mxu0 0.0
        %551 = vmatpush1.msra.mxu0 %v428
        %552 = vmatprep.subr.mxu0 0.0
        %553 = vmatpush1.msra.mxu0 %v429
        %554 = vmatprep.subr.mxu0 0.0
        %555 = vmatpush1.msra.mxu0 %v430
        %556 = vmatprep.subr.mxu0 0.0
        %557 = vmatpush1.msra.mxu0 0.0
        %558 = vmatprep.subr.mxu0 0.0
        %559 = vmatpush1.msra.mxu0 0.0
        %560 = vmatprep.subr.mxu0 0.0
        %561 = vmatpush1.msra.mxu0 0.0
        %562 = vmatprep.subr.mxu0 0.0
        %563 = vmatpush1.msra.mxu0 0.0
        %564 = vmatprep.subr.mxu0 0.0
        %565 = vmatpush1.msra.mxu0 0.0
        %566 = vmatprep.subr.mxu0 0.0
        %567 = vmatpush1.msra.mxu0 0.0
        %568 = vmatprep.subr.mxu0 0.0
        %569 = vmatpush1.msra.mxu0 0.0
        %570 = vmatprep.subr.mxu0 0.0
        %571 = vmatpush1.msra.mxu0 0.0
        %572 = vmatprep.subr.mxu0 0.0
        %573 = vmatpush1.msra.mxu0 0.0
        %574 = vmatprep.subr.mxu0 0.0
        %575 = vmatpush1.msra.mxu0 0.0
        %576 = vmatprep.subr.mxu0 0.0
        %577 = vmatpush1.msra.mxu0 0.0
        %578 = vmatprep.subr.mxu0 0.0
        %579 = vmatpush1.msra.mxu0 0.0
        %580 = vmatprep.subr.mxu0 0.0
        %581 = vmatpush1.msra.mxu0 0.0
        %582 = vmatprep.subr.mxu0 0.0
        %583 = vmatpush1.msra.mxu0 0.0
        %584 = vmatprep.subr.mxu0 0.0
        %585 = vmatpush1.msra.mxu0 0.0
        %586 = vmatprep.subr.mxu0 0.0
        %587 = vmatpush1.msra.mxu0 0.0
        %588 = vmatprep.mubr.f32.mxu0 0.0
        %589 = vmatmul.mubr.f32.gmra.mrb[0].mxu0 %v398
        %v590 = vpop.f32.mrb[0].mxu0
        %v591 = vadd.f32 %v516, %v590
        %v592 = vpop.f32.mrb[0].mxu0
        %593 = vmatprep.mubr.f32.mxu0 0.0
        %594 = vmatmul.mubr.f32.gmra.mrb[0].mxu0 %v399
        %v595 = vpop.f32.mrb[0].mxu0
        %v596 = vadd.f32 %v521, %v595
        %v597 = vpop.f32.mrb[0].mxu0
        %598 = vdwg.mxu0
        %v599 = vld [vmem:[#allocation2 + $0x5] sm:$0xff]
        %v600 = vld [vmem:[#allocation2 + $0xd] sm:$0xff]
        %s601 = scalar_lea.vmem [#allocation10], 128
        %v602 = vld [vmem:[%s601] sm:$0xff]
        %v603 = vld [vmem:[%s601 + $0x8] sm:$0xff]
        %v604 = vld [vmem:[%s601 + $0x10] sm:$0xff]
        %v605 = vld [vmem:[%s601 + $0x18] sm:$0xff]
        %v606 = vld [vmem:[%s601 + $0x20] sm:$0xff]
        %v607 = vld [vmem:[%s601 + $0x28] sm:$0xff]
        %v608 = vld [vmem:[%s601 + $0x30] sm:$0xff]
        %v609 = vld [vmem:[%s601 + $0x38] sm:$0xff]
        %v610 = vld [vmem:[%s601 + $0x40] sm:$0xff]
        %v611 = vld [vmem:[%s601 + $0x48] sm:$0xff]
        %v612 = vld [vmem:[%s601 + $0x50] sm:$0xff]
        %v613 = vld [vmem:[%s601 + $0x58] sm:$0xff]
        %v614 = vld [vmem:[%s601 + $0x60] sm:$0xff]
        %v615 = vld [vmem:[%s601 + $0x68] sm:$0xff]
        %v616 = vld [vmem:[%s601 + $0x70] sm:$0xff]
        %v617 = vld [vmem:[%s601 + $0x78] sm:$0xff]
        %618 = vmatprep.subr.mxu0 0.0
        %619 = vmatpush1.msra.mxu0 %v602
        %620 = vmatprep.subr.mxu0 0.0
        %621 = vmatpush1.msra.mxu0 %v603
        %622 = vmatprep.subr.mxu0 0.0
        %623 = vmatpush1.msra.mxu0 %v604
        %624 = vmatprep.subr.mxu0 0.0
        %625 = vmatpush1.msra.mxu0 %v605
        %626 = vmatprep.subr.mxu0 0.0
        %627 = vmatpush1.msra.mxu0 %v606
        %628 = vmatprep.subr.mxu0 0.0
        %629 = vmatpush1.msra.mxu0 %v607
        %630 = vmatprep.subr.mxu0 0.0
        %631 = vmatpush1.msra.mxu0 %v608
        %632 = vmatprep.subr.mxu0 0.0
        %633 = vmatpush1.msra.mxu0 %v609
        %634 = vmatprep.subr.mxu0 0.0
        %635 = vmatpush1.msra.mxu0 %v610
        %636 = vmatprep.subr.mxu0 0.0
        %637 = vmatpush1.msra.mxu0 %v611
        %638 = vmatprep.subr.mxu0 0.0
        %639 = vmatpush1.msra.mxu0 %v612
        %640 = vmatprep.subr.mxu0 0.0
        %641 = vmatpush1.msra.mxu0 %v613
        %642 = vmatprep.subr.mxu0 0.0
        %643 = vmatpush1.msra.mxu0 %v614
        %644 = vmatprep.subr.mxu0 0.0
        %645 = vmatpush1.msra.mxu0 %v615
        %646 = vmatprep.subr.mxu0 0.0
        %647 = vmatpush1.msra.mxu0 %v616
        %648 = vmatprep.subr.mxu0 0.0
        %649 = vmatpush1.msra.mxu0 %v617
        %650 = vmatprep.subr.mxu0 0.0
        %651 = vmatpush1.msra.mxu0 0.0
        %652 = vmatprep.subr.mxu0 0.0
        %653 = vmatpush1.msra.mxu0 0.0
        %654 = vmatprep.subr.mxu0 0.0
        %655 = vmatpush1.msra.mxu0 0.0
        %656 = vmatprep.subr.mxu0 0.0
        %657 = vmatpush1.msra.mxu0 0.0
        %658 = vmatprep.subr.mxu0 0.0
        %659 = vmatpush1.msra.mxu0 0.0
        %660 = vmatprep.subr.mxu0 0.0
        %661 = vmatpush1.msra.mxu0 0.0
        %662 = vmatprep.subr.mxu0 0.0
        %663 = vmatpush1.msra.mxu0 0.0
        %664 = vmatprep.subr.mxu0 0.0
        %665 = vmatpush1.msra.mxu0 0.0
        %666 = vmatprep.subr.mxu0 0.0
        %667 = vmatpush1.msra.mxu0 0.0
        %668 = vmatprep.subr.mxu0 0.0
        %669 = vmatpush1.msra.mxu0 0.0
        %670 = vmatprep.subr.mxu0 0.0
        %671 = vmatpush1.msra.mxu0 0.0
        %672 = vmatprep.subr.mxu0 0.0
        %673 = vmatpush1.msra.mxu0 0.0
        %674 = vmatprep.subr.mxu0 0.0
        %675 = vmatpush1.msra.mxu0 0.0
        %676 = vmatprep.subr.mxu0 0.0
        %677 = vmatpush1.msra.mxu0 0.0
        %678 = vmatprep.subr.mxu0 0.0
        %679 = vmatpush1.msra.mxu0 0.0
        %680 = vmatprep.subr.mxu0 0.0
        %681 = vmatpush1.msra.mxu0 0.0
        %682 = vmatprep.mubr.f32.mxu0 0.0
        %683 = vmatmul.mubr.f32.gmra.mrb[0].mxu0 %v599
        %v684 = vpop.f32.mrb[0].mxu0
        %v685 = vadd.f32 0.0, %v684
        %v686 = vpop.f32.mrb[0].mxu0
        %687 = vmatprep.mubr.f32.mxu0 0.0
        %688 = vmatmul.mubr.f32.gmra.mrb[0].mxu0 %v600
        %v689 = vpop.f32.mrb[0].mxu0
        %v690 = vadd.f32 0.0, %v689
        %v691 = vpop.f32.mrb[0].mxu0
        %692 = vdwg.mxu0
        %v693 = vadd.f32 %v591, %v685
        %v694 = vadd.f32 %v596, %v690
        %v695 = vld [vmem:[#allocation2 + $0x6] sm:$0xff]
        %v696 = vld [vmem:[#allocation2 + $0xe] sm:$0xff]
        %s697 = scalar_lea.vmem [#allocation10], 256
        %v698 = vld [vmem:[%s697] sm:$0xff]
        %v699 = vld [vmem:[%s697 + $0x8] sm:$0xff]
        %v700 = vld [vmem:[%s697 + $0x10] sm:$0xff]
        %v701 = vld [vmem:[%s697 + $0x18] sm:$0xff]
        %v702 = vld [vmem:[%s697 + $0x20] sm:$0xff]
        %v703 = vld [vmem:[%s697 + $0x28] sm:$0xff]
        %v704 = vld [vmem:[%s697 + $0x30] sm:$0xff]
        %v705 = vld [vmem:[%s697 + $0x38] sm:$0xff]
        %v706 = vld [vmem:[%s697 + $0x40] sm:$0xff]
        %v707 = vld [vmem:[%s697 + $0x48] sm:$0xff]
        %v708 = vld [vmem:[%s697 + $0x50] sm:$0xff]
        %v709 = vld [vmem:[%s697 + $0x58] sm:$0xff]
        %v710 = vld [vmem:[%s697 + $0x60] sm:$0xff]
        %v711 = vld [vmem:[%s697 + $0x68] sm:$0xff]
        %v712 = vld [vmem:[%s697 + $0x70] sm:$0xff]
        %v713 = vld [vmem:[%s697 + $0x78] sm:$0xff]
        %714 = vmatprep.subr.mxu0 0.0
        %715 = vmatpush1.msra.mxu0 %v698
        %716 = vmatprep.subr.mxu0 0.0
        %717 = vmatpush1.msra.mxu0 %v699
        %718 = vmatprep.subr.mxu0 0.0
        %719 = vmatpush1.msra.mxu0 %v700
        %720 = vmatprep.subr.mxu0 0.0
        %721 = vmatpush1.msra.mxu0 %v701
        %722 = vmatprep.subr.mxu0 0.0
        %723 = vmatpush1.msra.mxu0 %v702
        %724 = vmatprep.subr.mxu0 0.0
        %725 = vmatpush1.msra.mxu0 %v703
        %726 = vmatprep.subr.mxu0 0.0
        %727 = vmatpush1.msra.mxu0 %v704
        %728 = vmatprep.subr.mxu0 0.0
        %729 = vmatpush1.msra.mxu0 %v705
        %730 = vmatprep.subr.mxu0 0.0
        %731 = vmatpush1.msra.mxu0 %v706
        %732 = vmatprep.subr.mxu0 0.0
        %733 = vmatpush1.msra.mxu0 %v707
        %734 = vmatprep.subr.mxu0 0.0
        %735 = vmatpush1.msra.mxu0 %v708
        %736 = vmatprep.subr.mxu0 0.0
        %737 = vmatpush1.msra.mxu0 %v709
        %738 = vmatprep.subr.mxu0 0.0
        %739 = vmatpush1.msra.mxu0 %v710
        %740 = vmatprep.subr.mxu0 0.0
        %741 = vmatpush1.msra.mxu0 %v711
        %742 = vmatprep.subr.mxu0 0.0
        %743 = vmatpush1.msra.mxu0 %v712
        %744 = vmatprep.subr.mxu0 0.0
        %745 = vmatpush1.msra.mxu0 %v713
        %746 = vmatprep.subr.mxu0 0.0
        %747 = vmatpush1.msra.mxu0 0.0
        %748 = vmatprep.subr.mxu0 0.0
        %749 = vmatpush1.msra.mxu0 0.0
        %750 = vmatprep.subr.mxu0 0.0
        %751 = vmatpush1.msra.mxu0 0.0
        %752 = vmatprep.subr.mxu0 0.0
        %753 = vmatpush1.msra.mxu0 0.0
        %754 = vmatprep.subr.mxu0 0.0
        %755 = vmatpush1.msra.mxu0 0.0
        %756 = vmatprep.subr.mxu0 0.0
        %757 = vmatpush1.msra.mxu0 0.0
        %758 = vmatprep.subr.mxu0 0.0
        %759 = vmatpush1.msra.mxu0 0.0
        %760 = vmatprep.subr.mxu0 0.0
        %761 = vmatpush1.msra.mxu0 0.0
        %762 = vmatprep.subr.mxu0 0.0
        %763 = vmatpush1.msra.mxu0 0.0
        %764 = vmatprep.subr.mxu0 0.0
        %765 = vmatpush1.msra.mxu0 0.0
        %766 = vmatprep.subr.mxu0 0.0
        %767 = vmatpush1.msra.mxu0 0.0
        %768 = vmatprep.subr.mxu0 0.0
        %769 = vmatpush1.msra.mxu0 0.0
        %770 = vmatprep.subr.mxu0 0.0
        %771 = vmatpush1.msra.mxu0 0.0
        %772 = vmatprep.subr.mxu0 0.0
        %773 = vmatpush1.msra.mxu0 0.0
        %774 = vmatprep.subr.mxu0 0.0
        %775 = vmatpush1.msra.mxu0 0.0
        %776 = vmatprep.subr.mxu0 0.0
        %777 = vmatpush1.msra.mxu0 0.0
        %778 = vmatprep.mubr.f32.mxu0 0.0
        %779 = vmatmul.mubr.f32.gmra.mrb[0].mxu0 %v695
        %v780 = vpop.f32.mrb[0].mxu0
        %v781 = vadd.f32 0.0, %v780
        %v782 = vpop.f32.mrb[0].mxu0
        %783 = vmatprep.mubr.f32.mxu0 0.0
        %784 = vmatmul.mubr.f32.gmra.mrb[0].mxu0 %v696
        %v785 = vpop.f32.mrb[0].mxu0
        %v786 = vadd.f32 0.0, %v785
        %v787 = vpop.f32.mrb[0].mxu0
        %788 = vdwg.mxu0
        %v789 = vadd.f32 %v693, %v781
        %v790 = vadd.f32 %v694, %v786
        %v791 = vld [vmem:[#allocation2 + $0x7] sm:$0xff]
        %v792 = vld [vmem:[#allocation2 + $0xf] sm:$0xff]
        %s793 = scalar_lea.vmem [#allocation10], 384
        %v794 = vld [vmem:[%s793] sm:$0xff]
        %v795 = vld [vmem:[%s793 + $0x8] sm:$0xff]
        %v796 = vld [vmem:[%s793 + $0x10] sm:$0xff]
        %v797 = vld [vmem:[%s793 + $0x18] sm:$0xff]
        %v798 = vld [vmem:[%s793 + $0x20] sm:$0xff]
        %v799 = vld [vmem:[%s793 + $0x28] sm:$0xff]
        %v800 = vld [vmem:[%s793 + $0x30] sm:$0xff]
        %v801 = vld [vmem:[%s793 + $0x38] sm:$0xff]
        %v802 = vld [vmem:[%s793 + $0x40] sm:$0xff]
        %v803 = vld [vmem:[%s793 + $0x48] sm:$0xff]
        %v804 = vld [vmem:[%s793 + $0x50] sm:$0xff]
        %v805 = vld [vmem:[%s793 + $0x58] sm:$0xff]
        %v806 = vld [vmem:[%s793 + $0x60] sm:$0xff]
        %v807 = vld [vmem:[%s793 + $0x68] sm:$0xff]
        %v808 = vld [vmem:[%s793 + $0x70] sm:$0xff]
        %v809 = vld [vmem:[%s793 + $0x78] sm:$0xff]
        %810 = vmatprep.subr.mxu0 0.0
        %811 = vmatpush1.msra.mxu0 %v794
        %812 = vmatprep.subr.mxu0 0.0
        %813 = vmatpush1.msra.mxu0 %v795
        %814 = vmatprep.subr.mxu0 0.0
        %815 = vmatpush1.msra.mxu0 %v796
        %816 = vmatprep.subr.mxu0 0.0
        %817 = vmatpush1.msra.mxu0 %v797
        %818 = vmatprep.subr.mxu0 0.0
        %819 = vmatpush1.msra.mxu0 %v798
        %820 = vmatprep.subr.mxu0 0.0
        %821 = vmatpush1.msra.mxu0 %v799
        %822 = vmatprep.subr.mxu0 0.0
        %823 = vmatpush1.msra.mxu0 %v800
        %824 = vmatprep.subr.mxu0 0.0
        %825 = vmatpush1.msra.mxu0 %v801
        %826 = vmatprep.subr.mxu0 0.0
        %827 = vmatpush1.msra.mxu0 %v802
        %828 = vmatprep.subr.mxu0 0.0
        %829 = vmatpush1.msra.mxu0 %v803
        %830 = vmatprep.subr.mxu0 0.0
        %831 = vmatpush1.msra.mxu0 %v804
        %832 = vmatprep.subr.mxu0 0.0
        %833 = vmatpush1.msra.mxu0 %v805
        %834 = vmatprep.subr.mxu0 0.0
        %835 = vmatpush1.msra.mxu0 %v806
        %836 = vmatprep.subr.mxu0 0.0
        %837 = vmatpush1.msra.mxu0 %v807
        %838 = vmatprep.subr.mxu0 0.0
        %839 = vmatpush1.msra.mxu0 %v808
        %840 = vmatprep.subr.mxu0 0.0
        %841 = vmatpush1.msra.mxu0 %v809
        %842 = vmatprep.subr.mxu0 0.0
        %843 = vmatpush1.msra.mxu0 0.0
        %844 = vmatprep.subr.mxu0 0.0
        %845 = vmatpush1.msra.mxu0 0.0
        %846 = vmatprep.subr.mxu0 0.0
        %847 = vmatpush1.msra.mxu0 0.0
        %848 = vmatprep.subr.mxu0 0.0
        %849 = vmatpush1.msra.mxu0 0.0
        %850 = vmatprep.subr.mxu0 0.0
        %851 = vmatpush1.msra.mxu0 0.0
        %852 = vmatprep.subr.mxu0 0.0
        %853 = vmatpush1.msra.mxu0 0.0
        %854 = vmatprep.subr.mxu0 0.0
        %855 = vmatpush1.msra.mxu0 0.0
        %856 = vmatprep.subr.mxu0 0.0
        %857 = vmatpush1.msra.mxu0 0.0
        %858 = vmatprep.subr.mxu0 0.0
        %859 = vmatpush1.msra.mxu0 0.0
        %860 = vmatprep.subr.mxu0 0.0
        %861 = vmatpush1.msra.mxu0 0.0
        %862 = vmatprep.subr.mxu0 0.0
        %863 = vmatpush1.msra.mxu0 0.0
        %864 = vmatprep.subr.mxu0 0.0
        %865 = vmatpush1.msra.mxu0 0.0
        %866 = vmatprep.subr.mxu0 0.0
        %867 = vmatpush1.msra.mxu0 0.0
        %868 = vmatprep.subr.mxu0 0.0
        %869 = vmatpush1.msra.mxu0 0.0
        %870 = vmatprep.subr.mxu0 0.0
        %871 = vmatpush1.msra.mxu0 0.0
        %872 = vmatprep.subr.mxu0 0.0
        %873 = vmatpush1.msra.mxu0 0.0
        %874 = vmatprep.mubr.f32.mxu0 0.0
        %875 = vmatmul.mubr.f32.gmra.mrb[0].mxu0 %v791
        %v876 = vpop.f32.mrb[0].mxu0
        %v877 = vadd.f32 0.0, %v876
        %v878 = vpop.f32.mrb[0].mxu0
        %879 = vmatprep.mubr.f32.mxu0 0.0
        %880 = vmatmul.mubr.f32.gmra.mrb[0].mxu0 %v792
        %v881 = vpop.f32.mrb[0].mxu0
        %v882 = vadd.f32 0.0, %v881
        %v883 = vpop.f32.mrb[0].mxu0
        %884 = vdwg.mxu0
        %v885 = vadd.f32 %v789, %v877
        %v886 = vadd.f32 %v790, %v882
        %v888 = vlaneseq
        %v889 = vshrl.u32 %v888, 7
        %v890 = vsub.s32 0, %v889
        %v891 = vrot.slane %v400, %v890
        %v893 = vadd.f32 %v885, %v891
        %v894 = vadd.f32 %v886, %v891
        %v895 = vtanh.pop %v893
        %v896 = vtanh.pop %v894
        %v897 = vld [vmem:[#allocation16] sm:$0x1]
        // Predicated region
        $region85: #{tpu_custom_call.1} parent=47 // pred_check
          %p898 = pneg %p401
        $region86: #{tpu_custom_call.1} parent=47 // pred_check_branch
          %900 = sbr.rel (%p898) target = $region88
        $region87: #{tpu_custom_call.1} parent=47 // pred_region
          %901 = vst [vmem:[#allocation3 + $0x4] sm:$0xf] 0.0
        $region88: #{tpu_custom_call.1} parent=47 // pred_fallthru
          _
        // Predicated region
        $region89: #{tpu_custom_call.1} parent=47 // pred_check
          %p902 = pneg %p406
        $region90: #{tpu_custom_call.1} parent=47 // pred_check_branch
          %904 = sbr.rel (%p902) target = $region92
        $region91: #{tpu_custom_call.1} parent=47 // pred_region
          %v905 = vld [vmem:[#allocation3 + $0x14] sm:$0xf]
          %906 = vst [vmem:[#allocation3 + $0x4] sm:$0xf] %v905
        $region92: #{tpu_custom_call.1} parent=47 // pred_fallthru
          _
        %907 = vst [vmem:[#allocation3 + $0x8] sm:$0xff] %v895
        %908 = vst [vmem:[#allocation3 + $0x10] sm:$0xff] %v896
        %s909 = scalar_lea.vmem [#allocation12], 512
        %v910 = vld [vmem:[%s909] sm:$0xff]
        %v911 = vld [vmem:[%s909 + $0x8] sm:$0xff]
        %v912 = vld [vmem:[%s909 + $0x10] sm:$0xff]
        %v913 = vld [vmem:[%s909 + $0x18] sm:$0xff]
        %v914 = vld [vmem:[%s909 + $0x20] sm:$0xff]
        %v915 = vld [vmem:[%s909 + $0x28] sm:$0xff]
        %v916 = vld [vmem:[%s909 + $0x30] sm:$0xff]
        %v917 = vld [vmem:[%s909 + $0x38] sm:$0xff]
        %v918 = vld [vmem:[%s909 + $0x40] sm:$0xff]
        %v919 = vld [vmem:[%s909 + $0x48] sm:$0xff]
        %v920 = vld [vmem:[%s909 + $0x50] sm:$0xff]
        %v921 = vld [vmem:[%s909 + $0x58] sm:$0xff]
        %v922 = vld [vmem:[%s909 + $0x60] sm:$0xff]
        %v923 = vld [vmem:[%s909 + $0x68] sm:$0xff]
        %v924 = vld [vmem:[%s909 + $0x70] sm:$0xff]
        %v925 = vld [vmem:[%s909 + $0x78] sm:$0xff]
        %v926 = vld [vmem:[#allocation3 + $0x4] sm:$0xff]
        %v927 = vld [vmem:[#allocation3 + $0xc] sm:$0xff]
        %v928 = vld [vmem:[#allocation12] sm:$0xff]
        %v929 = vld [vmem:[#allocation12 + $0x8] sm:$0xff]
        %v930 = vld [vmem:[#allocation12 + $0x10] sm:$0xff]
        %v931 = vld [vmem:[#allocation12 + $0x18] sm:$0xff]
        %v932 = vld [vmem:[#allocation12 + $0x20] sm:$0xff]
        %v933 = vld [vmem:[#allocation12 + $0x28] sm:$0xff]
        %v934 = vld [vmem:[#allocation12 + $0x30] sm:$0xff]
        %v935 = vld [vmem:[#allocation12 + $0x38] sm:$0xff]
        %v936 = vld [vmem:[#allocation12 + $0x40] sm:$0xff]
        %v937 = vld [vmem:[#allocation12 + $0x48] sm:$0xff]
        %v938 = vld [vmem:[#allocation12 + $0x50] sm:$0xff]
        %v939 = vld [vmem:[#allocation12 + $0x58] sm:$0xff]
        %v940 = vld [vmem:[#allocation12 + $0x60] sm:$0xff]
        %v941 = vld [vmem:[#allocation12 + $0x68] sm:$0xff]
        %v942 = vld [vmem:[#allocation12 + $0x70] sm:$0xff]
        %v943 = vld [vmem:[#allocation12 + $0x78] sm:$0xff]
        %944 = vmatprep.subr.mxu0 0.0
        %945 = vmatpush1.msra.mxu0 %v928
        %946 = vmatprep.subr.mxu0 0.0
        %947 = vmatpush1.msra.mxu0 %v929
        %948 = vmatprep.subr.mxu0 0.0
        %949 = vmatpush1.msra.mxu0 %v930
        %950 = vmatprep.subr.mxu0 0.0
        %951 = vmatpush1.msra.mxu0 %v931
        %952 = vmatprep.subr.mxu0 0.0
        %953 = vmatpush1.msra.mxu0 %v932
        %954 = vmatprep.subr.mxu0 0.0
        %955 = vmatpush1.msra.mxu0 %v933
        %956 = vmatprep.subr.mxu0 0.0
        %957 = vmatpush1.msra.mxu0 %v934
        %958 = vmatprep.subr.mxu0 0.0
        %959 = vmatpush1.msra.mxu0 %v935
        %960 = vmatprep.subr.mxu0 0.0
        %961 = vmatpush1.msra.mxu0 %v936
        %962 = vmatprep.subr.mxu0 0.0
        %963 = vmatpush1.msra.mxu0 %v937
        %964 = vmatprep.subr.mxu0 0.0
        %965 = vmatpush1.msra.mxu0 %v938
        %966 = vmatprep.subr.mxu0 0.0
        %967 = vmatpush1.msra.mxu0 %v939
        %968 = vmatprep.subr.mxu0 0.0
        %969 = vmatpush1.msra.mxu0 %v940
        %970 = vmatprep.subr.mxu0 0.0
        %971 = vmatpush1.msra.mxu0 %v941
        %972 = vmatprep.subr.mxu0 0.0
        %973 = vmatpush1.msra.mxu0 %v942
        %974 = vmatprep.subr.mxu0 0.0
        %975 = vmatpush1.msra.mxu0 %v943
        %976 = vmatprep.subr.mxu0 0.0
        %977 = vmatpush1.msra.mxu0 0.0
        %978 = vmatprep.subr.mxu0 0.0
        %979 = vmatpush1.msra.mxu0 0.0
        %980 = vmatprep.subr.mxu0 0.0
        %981 = vmatpush1.msra.mxu0 0.0
        %982 = vmatprep.subr.mxu0 0.0
        %983 = vmatpush1.msra.mxu0 0.0
        %984 = vmatprep.subr.mxu0 0.0
        %985 = vmatpush1.msra.mxu0 0.0
        %986 = vmatprep.subr.mxu0 0.0
        %987 = vmatpush1.msra.mxu0 0.0
        %988 = vmatprep.subr.mxu0 0.0
        %989 = vmatpush1.msra.mxu0 0.0
        %990 = vmatprep.subr.mxu0 0.0
        %991 = vmatpush1.msra.mxu0 0.0
        %992 = vmatprep.subr.mxu0 0.0
        %993 = vmatpush1.msra.mxu0 0.0
        %994 = vmatprep.subr.mxu0 0.0
        %995 = vmatpush1.msra.mxu0 0.0
        %996 = vmatprep.subr.mxu0 0.0
        %997 = vmatpush1.msra.mxu0 0.0
        %998 = vmatprep.subr.mxu0 0.0
        %999 = vmatpush1.msra.mxu0 0.0
        %1000 = vmatprep.subr.mxu0 0.0
        %1001 = vmatpush1.msra.mxu0 0.0
        %1002 = vmatprep.subr.mxu0 0.0
        %1003 = vmatpush1.msra.mxu0 0.0
        %1004 = vmatprep.subr.mxu0 0.0
        %1005 = vmatpush1.msra.mxu0 0.0
        %1006 = vmatprep.subr.mxu0 0.0
        %1007 = vmatpush1.msra.mxu0 0.0
        %1008 = vmatprep.mubr.f32.mxu0 0.0
        %1009 = vmatmul.mubr.f32.gmra.mrb[0].mxu0 %v926
        %v1010 = vpop.f32.mrb[0].mxu0
        %v1011 = vadd.f32 0.0, %v1010
        %v1012 = vpop.f32.mrb[0].mxu0
        %1013 = vmatprep.mubr.f32.mxu0 0.0
        %1014 = vmatmul.mubr.f32.gmra.mrb[0].mxu0 %v927
        %v1015 = vpop.f32.mrb[0].mxu0
        %v1016 = vadd.f32 0.0, %v1015
        %v1017 = vpop.f32.mrb[0].mxu0
        %1018 = vdwg.mxu0
        %1019 = vmatprep.subr.mxu0 0.0
        %1020 = vmatpush1.msra.mxu0 %v910
        %1021 = vmatprep.subr.mxu0 0.0
        %1022 = vmatpush1.msra.mxu0 %v911
        %1023 = vmatprep.subr.mxu0 0.0
        %1024 = vmatpush1.msra.mxu0 %v912
        %1025 = vmatprep.subr.mxu0 0.0
        %1026 = vmatpush1.msra.mxu0 %v913
        %1027 = vmatprep.subr.mxu0 0.0
        %1028 = vmatpush1.msra.mxu0 %v914
        %1029 = vmatprep.subr.mxu0 0.0
        %1030 = vmatpush1.msra.mxu0 %v915
        %1031 = vmatprep.subr.mxu0 0.0
        %1032 = vmatpush1.msra.mxu0 %v916
        %1033 = vmatprep.subr.mxu0 0.0
        %1034 = vmatpush1.msra.mxu0 %v917
        %1035 = vmatprep.subr.mxu0 0.0
        %1036 = vmatpush1.msra.mxu0 %v918
        %1037 = vmatprep.subr.mxu0 0.0
        %1038 = vmatpush1.msra.mxu0 %v919
        %1039 = vmatprep.subr.mxu0 0.0
        %1040 = vmatpush1.msra.mxu0 %v920
        %1041 = vmatprep.subr.mxu0 0.0
        %1042 = vmatpush1.msra.mxu0 %v921
        %1043 = vmatprep.subr.mxu0 0.0
        %1044 = vmatpush1.msra.mxu0 %v922
        %1045 = vmatprep.subr.mxu0 0.0
        %1046 = vmatpush1.msra.mxu0 %v923
        %1047 = vmatprep.subr.mxu0 0.0
        %1048 = vmatpush1.msra.mxu0 %v924
        %1049 = vmatprep.subr.mxu0 0.0
        %1050 = vmatpush1.msra.mxu0 %v925
        %1051 = vmatprep.subr.mxu0 0.0
        %1052 = vmatpush1.msra.mxu0 0.0
        %1053 = vmatprep.subr.mxu0 0.0
        %1054 = vmatpush1.msra.mxu0 0.0
        %1055 = vmatprep.subr.mxu0 0.0
        %1056 = vmatpush1.msra.mxu0 0.0
        %1057 = vmatprep.subr.mxu0 0.0
        %1058 = vmatpush1.msra.mxu0 0.0
        %1059 = vmatprep.subr.mxu0 0.0
        %1060 = vmatpush1.msra.mxu0 0.0
        %1061 = vmatprep.subr.mxu0 0.0
        %1062 = vmatpush1.msra.mxu0 0.0
        %1063 = vmatprep.subr.mxu0 0.0
        %1064 = vmatpush1.msra.mxu0 0.0
        %1065 = vmatprep.subr.mxu0 0.0
        %1066 = vmatpush1.msra.mxu0 0.0
        %1067 = vmatprep.subr.mxu0 0.0
        %1068 = vmatpush1.msra.mxu0 0.0
        %1069 = vmatprep.subr.mxu0 0.0
        %1070 = vmatpush1.msra.mxu0 0.0
        %1071 = vmatprep.subr.mxu0 0.0
        %1072 = vmatpush1.msra.mxu0 0.0
        %1073 = vmatprep.subr.mxu0 0.0
        %1074 = vmatpush1.msra.mxu0 0.0
        %1075 = vmatprep.subr.mxu0 0.0
        %1076 = vmatpush1.msra.mxu0 0.0
        %1077 = vmatprep.subr.mxu0 0.0
        %1078 = vmatpush1.msra.mxu0 0.0
        %1079 = vmatprep.subr.mxu0 0.0
        %1080 = vmatpush1.msra.mxu0 0.0
        %1081 = vmatprep.subr.mxu0 0.0
        %1082 = vmatpush1.msra.mxu0 0.0
        %1083 = vmatprep.mubr.f32.mxu0 0.0
        %1084 = vmatmul.mubr.f32.gmra.mrb[0].mxu0 %v895
        %v1085 = vpop.f32.mrb[0].mxu0
        %v1086 = vadd.f32 %v1011, %v1085
        %v1087 = vpop.f32.mrb[0].mxu0
        %1088 = vmatprep.mubr.f32.mxu0 0.0
        %1089 = vmatmul.mubr.f32.gmra.mrb[0].mxu0 %v896
        %v1090 = vpop.f32.mrb[0].mxu0
        %v1091 = vadd.f32 %v1016, %v1090
        %v1092 = vpop.f32.mrb[0].mxu0
        %1093 = vdwg.mxu0
        %v1094 = vld [vmem:[#allocation3 + $0x5] sm:$0xff]
        %v1095 = vld [vmem:[#allocation3 + $0xd] sm:$0xff]
        %s1096 = scalar_lea.vmem [#allocation12], 128
        %v1097 = vld [vmem:[%s1096] sm:$0xff]
        %v1098 = vld [vmem:[%s1096 + $0x8] sm:$0xff]
        %v1099 = vld [vmem:[%s1096 + $0x10] sm:$0xff]
        %v1100 = vld [vmem:[%s1096 + $0x18] sm:$0xff]
        %v1101 = vld [vmem:[%s1096 + $0x20] sm:$0xff]
        %v1102 = vld [vmem:[%s1096 + $0x28] sm:$0xff]
        %v1103 = vld [vmem:[%s1096 + $0x30] sm:$0xff]
        %v1104 = vld [vmem:[%s1096 + $0x38] sm:$0xff]
        %v1105 = vld [vmem:[%s1096 + $0x40] sm:$0xff]
        %v1106 = vld [vmem:[%s1096 + $0x48] sm:$0xff]
        %v1107 = vld [vmem:[%s1096 + $0x50] sm:$0xff]
        %v1108 = vld [vmem:[%s1096 + $0x58] sm:$0xff]
        %v1109 = vld [vmem:[%s1096 + $0x60] sm:$0xff]
        %v1110 = vld [vmem:[%s1096 + $0x68] sm:$0xff]
        %v1111 = vld [vmem:[%s1096 + $0x70] sm:$0xff]
        %v1112 = vld [vmem:[%s1096 + $0x78] sm:$0xff]
        %1113 = vmatprep.subr.mxu0 0.0
        %1114 = vmatpush1.msra.mxu0 %v1097
        %1115 = vmatprep.subr.mxu0 0.0
        %1116 = vmatpush1.msra.mxu0 %v1098
        %1117 = vmatprep.subr.mxu0 0.0
        %1118 = vmatpush1.msra.mxu0 %v1099
        %1119 = vmatprep.subr.mxu0 0.0
        %1120 = vmatpush1.msra.mxu0 %v1100
        %1121 = vmatprep.subr.mxu0 0.0
        %1122 = vmatpush1.msra.mxu0 %v1101
        %1123 = vmatprep.subr.mxu0 0.0
        %1124 = vmatpush1.msra.mxu0 %v1102
        %1125 = vmatprep.subr.mxu0 0.0
        %1126 = vmatpush1.msra.mxu0 %v1103
        %1127 = vmatprep.subr.mxu0 0.0
        %1128 = vmatpush1.msra.mxu0 %v1104
        %1129 = vmatprep.subr.mxu0 0.0
        %1130 = vmatpush1.msra.mxu0 %v1105
        %1131 = vmatprep.subr.mxu0 0.0
        %1132 = vmatpush1.msra.mxu0 %v1106
        %1133 = vmatprep.subr.mxu0 0.0
        %1134 = vmatpush1.msra.mxu0 %v1107
        %1135 = vmatprep.subr.mxu0 0.0
        %1136 = vmatpush1.msra.mxu0 %v1108
        %1137 = vmatprep.subr.mxu0 0.0
        %1138 = vmatpush1.msra.mxu0 %v1109
        %1139 = vmatprep.subr.mxu0 0.0
        %1140 = vmatpush1.msra.mxu0 %v1110
        %1141 = vmatprep.subr.mxu0 0.0
        %1142 = vmatpush1.msra.mxu0 %v1111
        %1143 = vmatprep.subr.mxu0 0.0
        %1144 = vmatpush1.msra.mxu0 %v1112
        %1145 = vmatprep.subr.mxu0 0.0
        %1146 = vmatpush1.msra.mxu0 0.0
        %1147 = vmatprep.subr.mxu0 0.0
        %1148 = vmatpush1.msra.mxu0 0.0
        %1149 = vmatprep.subr.mxu0 0.0
        %1150 = vmatpush1.msra.mxu0 0.0
        %1151 = vmatprep.subr.mxu0 0.0
        %1152 = vmatpush1.msra.mxu0 0.0
        %1153 = vmatprep.subr.mxu0 0.0
        %1154 = vmatpush1.msra.mxu0 0.0
        %1155 = vmatprep.subr.mxu0 0.0
        %1156 = vmatpush1.msra.mxu0 0.0
        %1157 = vmatprep.subr.mxu0 0.0
        %1158 = vmatpush1.msra.mxu0 0.0
        %1159 = vmatprep.subr.mxu0 0.0
        %1160 = vmatpush1.msra.mxu0 0.0
        %1161 = vmatprep.subr.mxu0 0.0
        %1162 = vmatpush1.msra.mxu0 0.0
        %1163 = vmatprep.subr.mxu0 0.0
        %1164 = vmatpush1.msra.mxu0 0.0
        %1165 = vmatprep.subr.mxu0 0.0
        %1166 = vmatpush1.msra.mxu0 0.0
        %1167 = vmatprep.subr.mxu0 0.0
        %1168 = vmatpush1.msra.mxu0 0.0
        %1169 = vmatprep.subr.mxu0 0.0
        %1170 = vmatpush1.msra.mxu0 0.0
        %1171 = vmatprep.subr.mxu0 0.0
        %1172 = vmatpush1.msra.mxu0 0.0
        %1173 = vmatprep.subr.mxu0 0.0
        %1174 = vmatpush1.msra.mxu0 0.0
        %1175 = vmatprep.subr.mxu0 0.0
        %1176 = vmatpush1.msra.mxu0 0.0
        %1177 = vmatprep.mubr.f32.mxu0 0.0
        %1178 = vmatmul.mubr.f32.gmra.mrb[0].mxu0 %v1094
        %v1179 = vpop.f32.mrb[0].mxu0
        %v1180 = vadd.f32 0.0, %v1179
        %v1181 = vpop.f32.mrb[0].mxu0
        %1182 = vmatprep.mubr.f32.mxu0 0.0
        %1183 = vmatmul.mubr.f32.gmra.mrb[0].mxu0 %v1095
        %v1184 = vpop.f32.mrb[0].mxu0
        %v1185 = vadd.f32 0.0, %v1184
        %v1186 = vpop.f32.mrb[0].mxu0
        %1187 = vdwg.mxu0
        %v1188 = vadd.f32 %v1086, %v1180
        %v1189 = vadd.f32 %v1091, %v1185
        %v1190 = vld [vmem:[#allocation3 + $0x6] sm:$0xff]
        %v1191 = vld [vmem:[#allocation3 + $0xe] sm:$0xff]
        %s1192 = scalar_lea.vmem [#allocation12], 256
        %v1193 = vld [vmem:[%s1192] sm:$0xff]
        %v1194 = vld [vmem:[%s1192 + $0x8] sm:$0xff]
        %v1195 = vld [vmem:[%s1192 + $0x10] sm:$0xff]
        %v1196 = vld [vmem:[%s1192 + $0x18] sm:$0xff]
        %v1197 = vld [vmem:[%s1192 + $0x20] sm:$0xff]
        %v1198 = vld [vmem:[%s1192 + $0x28] sm:$0xff]
        %v1199 = vld [vmem:[%s1192 + $0x30] sm:$0xff]
        %v1200 = vld [vmem:[%s1192 + $0x38] sm:$0xff]
        %v1201 = vld [vmem:[%s1192 + $0x40] sm:$0xff]
        %v1202 = vld [vmem:[%s1192 + $0x48] sm:$0xff]
        %v1203 = vld [vmem:[%s1192 + $0x50] sm:$0xff]
        %v1204 = vld [vmem:[%s1192 + $0x58] sm:$0xff]
        %v1205 = vld [vmem:[%s1192 + $0x60] sm:$0xff]
        %v1206 = vld [vmem:[%s1192 + $0x68] sm:$0xff]
        %v1207 = vld [vmem:[%s1192 + $0x70] sm:$0xff]
        %v1208 = vld [vmem:[%s1192 + $0x78] sm:$0xff]
        %1209 = vmatprep.subr.mxu0 0.0
        %1210 = vmatpush1.msra.mxu0 %v1193
        %1211 = vmatprep.subr.mxu0 0.0
        %1212 = vmatpush1.msra.mxu0 %v1194
        %1213 = vmatprep.subr.mxu0 0.0
        %1214 = vmatpush1.msra.mxu0 %v1195
        %1215 = vmatprep.subr.mxu0 0.0
        %1216 = vmatpush1.msra.mxu0 %v1196
        %1217 = vmatprep.subr.mxu0 0.0
        %1218 = vmatpush1.msra.mxu0 %v1197
        %1219 = vmatprep.subr.mxu0 0.0
        %1220 = vmatpush1.msra.mxu0 %v1198
        %1221 = vmatprep.subr.mxu0 0.0
        %1222 = vmatpush1.msra.mxu0 %v1199
        %1223 = vmatprep.subr.mxu0 0.0
        %1224 = vmatpush1.msra.mxu0 %v1200
        %1225 = vmatprep.subr.mxu0 0.0
        %1226 = vmatpush1.msra.mxu0 %v1201
        %1227 = vmatprep.subr.mxu0 0.0
        %1228 = vmatpush1.msra.mxu0 %v1202
        %1229 = vmatprep.subr.mxu0 0.0
        %1230 = vmatpush1.msra.mxu0 %v1203
        %1231 = vmatprep.subr.mxu0 0.0
        %1232 = vmatpush1.msra.mxu0 %v1204
        %1233 = vmatprep.subr.mxu0 0.0
        %1234 = vmatpush1.msra.mxu0 %v1205
        %1235 = vmatprep.subr.mxu0 0.0
        %1236 = vmatpush1.msra.mxu0 %v1206
        %1237 = vmatprep.subr.mxu0 0.0
        %1238 = vmatpush1.msra.mxu0 %v1207
        %1239 = vmatprep.subr.mxu0 0.0
        %1240 = vmatpush1.msra.mxu0 %v1208
        %1241 = vmatprep.subr.mxu0 0.0
        %1242 = vmatpush1.msra.mxu0 0.0
        %1243 = vmatprep.subr.mxu0 0.0
        %1244 = vmatpush1.msra.mxu0 0.0
        %1245 = vmatprep.subr.mxu0 0.0
        %1246 = vmatpush1.msra.mxu0 0.0
        %1247 = vmatprep.subr.mxu0 0.0
        %1248 = vmatpush1.msra.mxu0 0.0
        %1249 = vmatprep.subr.mxu0 0.0
        %1250 = vmatpush1.msra.mxu0 0.0
        %1251 = vmatprep.subr.mxu0 0.0
        %1252 = vmatpush1.msra.mxu0 0.0
        %1253 = vmatprep.subr.mxu0 0.0
        %1254 = vmatpush1.msra.mxu0 0.0
        %1255 = vmatprep.subr.mxu0 0.0
        %1256 = vmatpush1.msra.mxu0 0.0
        %1257 = vmatprep.subr.mxu0 0.0
        %1258 = vmatpush1.msra.mxu0 0.0
        %1259 = vmatprep.subr.mxu0 0.0
        %1260 = vmatpush1.msra.mxu0 0.0
        %1261 = vmatprep.subr.mxu0 0.0
        %1262 = vmatpush1.msra.mxu0 0.0
        %1263 = vmatprep.subr.mxu0 0.0
        %1264 = vmatpush1.msra.mxu0 0.0
        %1265 = vmatprep.subr.mxu0 0.0
        %1266 = vmatpush1.msra.mxu0 0.0
        %1267 = vmatprep.subr.mxu0 0.0
        %1268 = vmatpush1.msra.mxu0 0.0
        %1269 = vmatprep.subr.mxu0 0.0
        %1270 = vmatpush1.msra.mxu0 0.0
        %1271 = vmatprep.subr.mxu0 0.0
        %1272 = vmatpush1.msra.mxu0 0.0
        %1273 = vmatprep.mubr.f32.mxu0 0.0
        %1274 = vmatmul.mubr.f32.gmra.mrb[0].mxu0 %v1190
        %v1275 = vpop.f32.mrb[0].mxu0
        %v1276 = vadd.f32 0.0, %v1275
        %v1277 = vpop.f32.mrb[0].mxu0
        %1278 = vmatprep.mubr.f32.mxu0 0.0
        %1279 = vmatmul.mubr.f32.gmra.mrb[0].mxu0 %v1191
        %v1280 = vpop.f32.mrb[0].mxu0
        %v1281 = vadd.f32 0.0, %v1280
        %v1282 = vpop.f32.mrb[0].mxu0
        %1283 = vdwg.mxu0
        %v1284 = vadd.f32 %v1188, %v1276
        %v1285 = vadd.f32 %v1189, %v1281
        %v1286 = vld [vmem:[#allocation3 + $0x7] sm:$0xff]
        %v1287 = vld [vmem:[#allocation3 + $0xf] sm:$0xff]
        %s1288 = scalar_lea.vmem [#allocation12], 384
        %v1289 = vld [vmem:[%s1288] sm:$0xff]
        %v1290 = vld [vmem:[%s1288 + $0x8] sm:$0xff]
        %v1291 = vld [vmem:[%s1288 + $0x10] sm:$0xff]
        %v1292 = vld [vmem:[%s1288 + $0x18] sm:$0xff]
        %v1293 = vld [vmem:[%s1288 + $0x20] sm:$0xff]
        %v1294 = vld [vmem:[%s1288 + $0x28] sm:$0xff]
        %v1295 = vld [vmem:[%s1288 + $0x30] sm:$0xff]
        %v1296 = vld [vmem:[%s1288 + $0x38] sm:$0xff]
        %v1297 = vld [vmem:[%s1288 + $0x40] sm:$0xff]
        %v1298 = vld [vmem:[%s1288 + $0x48] sm:$0xff]
        %v1299 = vld [vmem:[%s1288 + $0x50] sm:$0xff]
        %v1300 = vld [vmem:[%s1288 + $0x58] sm:$0xff]
        %v1301 = vld [vmem:[%s1288 + $0x60] sm:$0xff]
        %v1302 = vld [vmem:[%s1288 + $0x68] sm:$0xff]
        %v1303 = vld [vmem:[%s1288 + $0x70] sm:$0xff]
        %v1304 = vld [vmem:[%s1288 + $0x78] sm:$0xff]
        %1305 = vmatprep.subr.mxu0 0.0
        %1306 = vmatpush1.msra.mxu0 %v1289
        %1307 = vmatprep.subr.mxu0 0.0
        %1308 = vmatpush1.msra.mxu0 %v1290
        %1309 = vmatprep.subr.mxu0 0.0
        %1310 = vmatpush1.msra.mxu0 %v1291
        %1311 = vmatprep.subr.mxu0 0.0
        %1312 = vmatpush1.msra.mxu0 %v1292
        %1313 = vmatprep.subr.mxu0 0.0
        %1314 = vmatpush1.msra.mxu0 %v1293
        %1315 = vmatprep.subr.mxu0 0.0
        %1316 = vmatpush1.msra.mxu0 %v1294
        %1317 = vmatprep.subr.mxu0 0.0
        %1318 = vmatpush1.msra.mxu0 %v1295
        %1319 = vmatprep.subr.mxu0 0.0
        %1320 = vmatpush1.msra.mxu0 %v1296
        %1321 = vmatprep.subr.mxu0 0.0
        %1322 = vmatpush1.msra.mxu0 %v1297
        %1323 = vmatprep.subr.mxu0 0.0
        %1324 = vmatpush1.msra.mxu0 %v1298
        %1325 = vmatprep.subr.mxu0 0.0
        %1326 = vmatpush1.msra.mxu0 %v1299
        %1327 = vmatprep.subr.mxu0 0.0
        %1328 = vmatpush1.msra.mxu0 %v1300
        %1329 = vmatprep.subr.mxu0 0.0
        %1330 = vmatpush1.msra.mxu0 %v1301
        %1331 = vmatprep.subr.mxu0 0.0
        %1332 = vmatpush1.msra.mxu0 %v1302
        %1333 = vmatprep.subr.mxu0 0.0
        %1334 = vmatpush1.msra.mxu0 %v1303
        %1335 = vmatprep.subr.mxu0 0.0
        %1336 = vmatpush1.msra.mxu0 %v1304
        %1337 = vmatprep.subr.mxu0 0.0
        %1338 = vmatpush1.msra.mxu0 0.0
        %1339 = vmatprep.subr.mxu0 0.0
        %1340 = vmatpush1.msra.mxu0 0.0
        %1341 = vmatprep.subr.mxu0 0.0
        %1342 = vmatpush1.msra.mxu0 0.0
        %1343 = vmatprep.subr.mxu0 0.0
        %1344 = vmatpush1.msra.mxu0 0.0
        %1345 = vmatprep.subr.mxu0 0.0
        %1346 = vmatpush1.msra.mxu0 0.0
        %1347 = vmatprep.subr.mxu0 0.0
        %1348 = vmatpush1.msra.mxu0 0.0
        %1349 = vmatprep.subr.mxu0 0.0
        %1350 = vmatpush1.msra.mxu0 0.0
        %1351 = vmatprep.subr.mxu0 0.0
        %1352 = vmatpush1.msra.mxu0 0.0
        %1353 = vmatprep.subr.mxu0 0.0
        %1354 = vmatpush1.msra.mxu0 0.0
        %1355 = vmatprep.subr.mxu0 0.0
        %1356 = vmatpush1.msra.mxu0 0.0
        %1357 = vmatprep.subr.mxu0 0.0
        %1358 = vmatpush1.msra.mxu0 0.0
        %1359 = vmatprep.subr.mxu0 0.0
        %1360 = vmatpush1.msra.mxu0 0.0
        %1361 = vmatprep.subr.mxu0 0.0
        %1362 = vmatpush1.msra.mxu0 0.0
        %1363 = vmatprep.subr.mxu0 0.0
        %1364 = vmatpush1.msra.mxu0 0.0
        %1365 = vmatprep.subr.mxu0 0.0
        %1366 = vmatpush1.msra.mxu0 0.0
        %1367 = vmatprep.subr.mxu0 0.0
        %1368 = vmatpush1.msra.mxu0 0.0
        %1369 = vmatprep.mubr.f32.mxu0 0.0
        %1370 = vmatmul.mubr.f32.gmra.mrb[0].mxu0 %v1286
        %v1371 = vpop.f32.mrb[0].mxu0
        %v1372 = vadd.f32 0.0, %v1371
        %v1373 = vpop.f32.mrb[0].mxu0
        %1374 = vmatprep.mubr.f32.mxu0 0.0
        %1375 = vmatmul.mubr.f32.gmra.mrb[0].mxu0 %v1287
        %v1376 = vpop.f32.mrb[0].mxu0
        %v1377 = vadd.f32 0.0, %v1376
        %v1378 = vpop.f32.mrb[0].mxu0
        %1379 = vdwg.mxu0
        %v1380 = vadd.f32 %v1284, %v1372
        %v1381 = vadd.f32 %v1285, %v1377
        %v1382 = vlaneseq
        %v1383 = vshrl.u32 %v1382, 7
        %v1384 = vsub.s32 0, %v1383
        %v1385 = vrot.slane %v897, %v1384
        %v1386 = vadd.f32 %v1380, %v1385
        %v1387 = vadd.f32 %v1381, %v1385
        %v1388 = vtanh.pop %v1386
        %v1389 = vtanh.pop %v1387
        %v1390 = vld [vmem:[#allocation16 + $0x1] sm:$0x1]
        // Predicated region
        $region93: #{tpu_custom_call.1} parent=47 // pred_check
          %p1391 = pneg %p401
        $region94: #{tpu_custom_call.1} parent=47 // pred_check_branch
          %1393 = sbr.rel (%p1391) target = $region96
        $region95: #{tpu_custom_call.1} parent=47 // pred_region
          %1394 = vst [vmem:[#allocation4 + $0x4] sm:$0xf] 0.0
        $region96: #{tpu_custom_call.1} parent=47 // pred_fallthru
          _
        // Predicated region
        $region97: #{tpu_custom_call.1} parent=47 // pred_check
          %p1395 = pneg %p406
        $region98: #{tpu_custom_call.1} parent=47 // pred_check_branch
          %1397 = sbr.rel (%p1395) target = $region100
        $region99: #{tpu_custom_call.1} parent=47 // pred_region
          %v1398 = vld [vmem:[#allocation4 + $0x14] sm:$0xf]
          %1399 = vst [vmem:[#allocation4 + $0x4] sm:$0xf] %v1398
        $region100: #{tpu_custom_call.1} parent=47 // pred_fallthru
          _
        %1400 = vst [vmem:[#allocation4 + $0x8] sm:$0xff] %v1388
        %1401 = vst [vmem:[#allocation4 + $0x10] sm:$0xff] %v1389
        %s1402 = scalar_lea.vmem [#allocation12], 1152
        %v1403 = vld [vmem:[%s1402] sm:$0xff]
        %v1404 = vld [vmem:[%s1402 + $0x8] sm:$0xff]
        %v1405 = vld [vmem:[%s1402 + $0x10] sm:$0xff]
        %v1406 = vld [vmem:[%s1402 + $0x18] sm:$0xff]
        %v1407 = vld [vmem:[%s1402 + $0x20] sm:$0xff]
        %v1408 = vld [vmem:[%s1402 + $0x28] sm:$0xff]
        %v1409 = vld [vmem:[%s1402 + $0x30] sm:$0xff]
        %v1410 = vld [vmem:[%s1402 + $0x38] sm:$0xff]
        %v1411 = vld [vmem:[%s1402 + $0x40] sm:$0xff]
        %v1412 = vld [vmem:[%s1402 + $0x48] sm:$0xff]
        %v1413 = vld [vmem:[%s1402 + $0x50] sm:$0xff]
        %v1414 = vld [vmem:[%s1402 + $0x58] sm:$0xff]
        %v1415 = vld [vmem:[%s1402 + $0x60] sm:$0xff]
        %v1416 = vld [vmem:[%s1402 + $0x68] sm:$0xff]
        %v1417 = vld [vmem:[%s1402 + $0x70] sm:$0xff]
        %v1418 = vld [vmem:[%s1402 + $0x78] sm:$0xff]
        %v1419 = vld [vmem:[#allocation4 + $0x4] sm:$0xff]
        %v1420 = vld [vmem:[#allocation4 + $0xc] sm:$0xff]
        %s1421 = scalar_lea.vmem [#allocation12], 640
        %v1422 = vld [vmem:[%s1421] sm:$0xff]
        %v1423 = vld [vmem:[%s1421 + $0x8] sm:$0xff]
        %v1424 = vld [vmem:[%s1421 + $0x10] sm:$0xff]
        %v1425 = vld [vmem:[%s1421 + $0x18] sm:$0xff]
        %v1426 = vld [vmem:[%s1421 + $0x20] sm:$0xff]
        %v1427 = vld [vmem:[%s1421 + $0x28] sm:$0xff]
        %v1428 = vld [vmem:[%s1421 + $0x30] sm:$0xff]
        %v1429 = vld [vmem:[%s1421 + $0x38] sm:$0xff]
        %v1430 = vld [vmem:[%s1421 + $0x40] sm:$0xff]
        %v1431 = vld [vmem:[%s1421 + $0x48] sm:$0xff]
        %v1432 = vld [vmem:[%s1421 + $0x50] sm:$0xff]
        %v1433 = vld [vmem:[%s1421 + $0x58] sm:$0xff]
        %v1434 = vld [vmem:[%s1421 + $0x60] sm:$0xff]
        %v1435 = vld [vmem:[%s1421 + $0x68] sm:$0xff]
        %v1436 = vld [vmem:[%s1421 + $0x70] sm:$0xff]
        %v1437 = vld [vmem:[%s1421 + $0x78] sm:$0xff]
        %1438 = vmatprep.subr.mxu0 0.0
        %1439 = vmatpush1.msra.mxu0 %v1422
        %1440 = vmatprep.subr.mxu0 0.0
        %1441 = vmatpush1.msra.mxu0 %v1423
        %1442 = vmatprep.subr.mxu0 0.0
        %1443 = vmatpush1.msra.mxu0 %v1424
        %1444 = vmatprep.subr.mxu0 0.0
        %1445 = vmatpush1.msra.mxu0 %v1425
        %1446 = vmatprep.subr.mxu0 0.0
        %1447 = vmatpush1.msra.mxu0 %v1426
        %1448 = vmatprep.subr.mxu0 0.0
        %1449 = vmatpush1.msra.mxu0 %v1427
        %1450 = vmatprep.subr.mxu0 0.0
        %1451 = vmatpush1.msra.mxu0 %v1428
        %1452 = vmatprep.subr.mxu0 0.0
        %1453 = vmatpush1.msra.mxu0 %v1429
        %1454 = vmatprep.subr.mxu0 0.0
        %1455 = vmatpush1.msra.mxu0 %v1430
        %1456 = vmatprep.subr.mxu0 0.0
        %1457 = vmatpush1.msra.mxu0 %v1431
        %1458 = vmatprep.subr.mxu0 0.0
        %1459 = vmatpush1.msra.mxu0 %v1432
        %1460 = vmatprep.subr.mxu0 0.0
        %1461 = vmatpush1.msra.mxu0 %v1433
        %1462 = vmatprep.subr.mxu0 0.0
        %1463 = vmatpush1.msra.mxu0 %v1434
        %1464 = vmatprep.subr.mxu0 0.0
        %1465 = vmatpush1.msra.mxu0 %v1435
        %1466 = vmatprep.subr.mxu0 0.0
        %1467 = vmatpush1.msra.mxu0 %v1436
        %1468 = vmatprep.subr.mxu0 0.0
        %1469 = vmatpush1.msra.mxu0 %v1437
        %1470 = vmatprep.subr.mxu0 0.0
        %1471 = vmatpush1.msra.mxu0 0.0
        %1472 = vmatprep.subr.mxu0 0.0
        %1473 = vmatpush1.msra.mxu0 0.0
        %1474 = vmatprep.subr.mxu0 0.0
        %1475 = vmatpush1.msra.mxu0 0.0
        %1476 = vmatprep.subr.mxu0 0.0
        %1477 = vmatpush1.msra.mxu0 0.0
        %1478 = vmatprep.subr.mxu0 0.0
        %1479 = vmatpush1.msra.mxu0 0.0
        %1480 = vmatprep.subr.mxu0 0.0
        %1481 = vmatpush1.msra.mxu0 0.0
        %1482 = vmatprep.subr.mxu0 0.0
        %1483 = vmatpush1.msra.mxu0 0.0
        %1484 = vmatprep.subr.mxu0 0.0
        %1485 = vmatpush1.msra.mxu0 0.0
        %1486 = vmatprep.subr.mxu0 0.0
        %1487 = vmatpush1.msra.mxu0 0.0
        %1488 = vmatprep.subr.mxu0 0.0
        %1489 = vmatpush1.msra.mxu0 0.0
        %1490 = vmatprep.subr.mxu0 0.0
        %1491 = vmatpush1.msra.mxu0 0.0
        %1492 = vmatprep.subr.mxu0 0.0
        %1493 = vmatpush1.msra.mxu0 0.0
        %1494 = vmatprep.subr.mxu0 0.0
        %1495 = vmatpush1.msra.mxu0 0.0
        %1496 = vmatprep.subr.mxu0 0.0
        %1497 = vmatpush1.msra.mxu0 0.0
        %1498 = vmatprep.subr.mxu0 0.0
        %1499 = vmatpush1.msra.mxu0 0.0
        %1500 = vmatprep.subr.mxu0 0.0
        %1501 = vmatpush1.msra.mxu0 0.0
        %1502 = vmatprep.mubr.f32.mxu0 0.0
        %1503 = vmatmul.mubr.f32.gmra.mrb[0].mxu0 %v1419
        %v1504 = vpop.f32.mrb[0].mxu0
        %v1505 = vadd.f32 0.0, %v1504
        %v1506 = vpop.f32.mrb[0].mxu0
        %1507 = vmatprep.mubr.f32.mxu0 0.0
        %1508 = vmatmul.mubr.f32.gmra.mrb[0].mxu0 %v1420
        %v1509 = vpop.f32.mrb[0].mxu0
        %v1510 = vadd.f32 0.0, %v1509
        %v1511 = vpop.f32.mrb[0].mxu0
        %1512 = vdwg.mxu0
        %1513 = vmatprep.subr.mxu0 0.0
        %1514 = vmatpush1.msra.mxu0 %v1403
        %1515 = vmatprep.subr.mxu0 0.0
        %1516 = vmatpush1.msra.mxu0 %v1404
        %1517 = vmatprep.subr.mxu0 0.0
        %1518 = vmatpush1.msra.mxu0 %v1405
        %1519 = vmatprep.subr.mxu0 0.0
        %1520 = vmatpush1.msra.mxu0 %v1406
        %1521 = vmatprep.subr.mxu0 0.0
        %1522 = vmatpush1.msra.mxu0 %v1407
        %1523 = vmatprep.subr.mxu0 0.0
        %1524 = vmatpush1.msra.mxu0 %v1408
        %1525 = vmatprep.subr.mxu0 0.0
        %1526 = vmatpush1.msra.mxu0 %v1409
        %1527 = vmatprep.subr.mxu0 0.0
        %1528 = vmatpush1.msra.mxu0 %v1410
        %1529 = vmatprep.subr.mxu0 0.0
        %1530 = vmatpush1.msra.mxu0 %v1411
        %1531 = vmatprep.subr.mxu0 0.0
        %1532 = vmatpush1.msra.mxu0 %v1412
        %1533 = vmatprep.subr.mxu0 0.0
        %1534 = vmatpush1.msra.mxu0 %v1413
        %1535 = vmatprep.subr.mxu0 0.0
        %1536 = vmatpush1.msra.mxu0 %v1414
        %1537 = vmatprep.subr.mxu0 0.0
        %1538 = vmatpush1.msra.mxu0 %v1415
        %1539 = vmatprep.subr.mxu0 0.0
        %1540 = vmatpush1.msra.mxu0 %v1416
        %1541 = vmatprep.subr.mxu0 0.0
        %1542 = vmatpush1.msra.mxu0 %v1417
        %1543 = vmatprep.subr.mxu0 0.0
        %1544 = vmatpush1.msra.mxu0 %v1418
        %1545 = vmatprep.subr.mxu0 0.0
        %1546 = vmatpush1.msra.mxu0 0.0
        %1547 = vmatprep.subr.mxu0 0.0
        %1548 = vmatpush1.msra.mxu0 0.0
        %1549 = vmatprep.subr.mxu0 0.0
        %1550 = vmatpush1.msra.mxu0 0.0
        %1551 = vmatprep.subr.mxu0 0.0
        %1552 = vmatpush1.msra.mxu0 0.0
        %1553 = vmatprep.subr.mxu0 0.0
        %1554 = vmatpush1.msra.mxu0 0.0
        %1555 = vmatprep.subr.mxu0 0.0
        %1556 = vmatpush1.msra.mxu0 0.0
        %1557 = vmatprep.subr.mxu0 0.0
        %1558 = vmatpush1.msra.mxu0 0.0
        %1559 = vmatprep.subr.mxu0 0.0
        %1560 = vmatpush1.msra.mxu0 0.0
        %1561 = vmatprep.subr.mxu0 0.0
        %1562 = vmatpush1.msra.mxu0 0.0
        %1563 = vmatprep.subr.mxu0 0.0
        %1564 = vmatpush1.msra.mxu0 0.0
        %1565 = vmatprep.subr.mxu0 0.0
        %1566 = vmatpush1.msra.mxu0 0.0
        %1567 = vmatprep.subr.mxu0 0.0
        %1568 = vmatpush1.msra.mxu0 0.0
        %1569 = vmatprep.subr.mxu0 0.0
        %1570 = vmatpush1.msra.mxu0 0.0
        %1571 = vmatprep.subr.mxu0 0.0
        %1572 = vmatpush1.msra.mxu0 0.0
        %1573 = vmatprep.subr.mxu0 0.0
        %1574 = vmatpush1.msra.mxu0 0.0
        %1575 = vmatprep.subr.mxu0 0.0
        %1576 = vmatpush1.msra.mxu0 0.0
        %1577 = vmatprep.mubr.f32.mxu0 0.0
        %1578 = vmatmul.mubr.f32.gmra.mrb[0].mxu0 %v1388
        %v1579 = vpop.f32.mrb[0].mxu0
        %v1580 = vadd.f32 %v1505, %v1579
        %v1581 = vpop.f32.mrb[0].mxu0
        %1582 = vmatprep.mubr.f32.mxu0 0.0
        %1583 = vmatmul.mubr.f32.gmra.mrb[0].mxu0 %v1389
        %v1584 = vpop.f32.mrb[0].mxu0
        %v1585 = vadd.f32 %v1510, %v1584
        %v1586 = vpop.f32.mrb[0].mxu0
        %1587 = vdwg.mxu0
        %v1588 = vld [vmem:[#allocation4 + $0x5] sm:$0xff]
        %v1589 = vld [vmem:[#allocation4 + $0xd] sm:$0xff]
        %s1590 = scalar_lea.vmem [#allocation12], 768
        %v1591 = vld [vmem:[%s1590] sm:$0xff]
        %v1592 = vld [vmem:[%s1590 + $0x8] sm:$0xff]
        %v1593 = vld [vmem:[%s1590 + $0x10] sm:$0xff]
        %v1594 = vld [vmem:[%s1590 + $0x18] sm:$0xff]
        %v1595 = vld [vmem:[%s1590 + $0x20] sm:$0xff]
        %v1596 = vld [vmem:[%s1590 + $0x28] sm:$0xff]
        %v1597 = vld [vmem:[%s1590 + $0x30] sm:$0xff]
        %v1598 = vld [vmem:[%s1590 + $0x38] sm:$0xff]
        %v1599 = vld [vmem:[%s1590 + $0x40] sm:$0xff]
        %v1600 = vld [vmem:[%s1590 + $0x48] sm:$0xff]
        %v1601 = vld [vmem:[%s1590 + $0x50] sm:$0xff]
        %v1602 = vld [vmem:[%s1590 + $0x58] sm:$0xff]
        %v1603 = vld [vmem:[%s1590 + $0x60] sm:$0xff]
        %v1604 = vld [vmem:[%s1590 + $0x68] sm:$0xff]
        %v1605 = vld [vmem:[%s1590 + $0x70] sm:$0xff]
        %v1606 = vld [vmem:[%s1590 + $0x78] sm:$0xff]
        %1607 = vmatprep.subr.mxu0 0.0
        %1608 = vmatpush1.msra.mxu0 %v1591
        %1609 = vmatprep.subr.mxu0 0.0
        %1610 = vmatpush1.msra.mxu0 %v1592
        %1611 = vmatprep.subr.mxu0 0.0
        %1612 = vmatpush1.msra.mxu0 %v1593
        %1613 = vmatprep.subr.mxu0 0.0
        %1614 = vmatpush1.msra.mxu0 %v1594
        %1615 = vmatprep.subr.mxu0 0.0
        %1616 = vmatpush1.msra.mxu0 %v1595
        %1617 = vmatprep.subr.mxu0 0.0
        %1618 = vmatpush1.msra.mxu0 %v1596
        %1619 = vmatprep.subr.mxu0 0.0
        %1620 = vmatpush1.msra.mxu0 %v1597
        %1621 = vmatprep.subr.mxu0 0.0
        %1622 = vmatpush1.msra.mxu0 %v1598
        %1623 = vmatprep.subr.mxu0 0.0
        %1624 = vmatpush1.msra.mxu0 %v1599
        %1625 = vmatprep.subr.mxu0 0.0
        %1626 = vmatpush1.msra.mxu0 %v1600
        %1627 = vmatprep.subr.mxu0 0.0
        %1628 = vmatpush1.msra.mxu0 %v1601
        %1629 = vmatprep.subr.mxu0 0.0
        %1630 = vmatpush1.msra.mxu0 %v1602
        %1631 = vmatprep.subr.mxu0 0.0
        %1632 = vmatpush1.msra.mxu0 %v1603
        %1633 = vmatprep.subr.mxu0 0.0
        %1634 = vmatpush1.msra.mxu0 %v1604
        %1635 = vmatprep.subr.mxu0 0.0
        %1636 = vmatpush1.msra.mxu0 %v1605
        %1637 = vmatprep.subr.mxu0 0.0
        %1638 = vmatpush1.msra.mxu0 %v1606
        %1639 = vmatprep.subr.mxu0 0.0
        %1640 = vmatpush1.msra.mxu0 0.0
        %1641 = vmatprep.subr.mxu0 0.0
        %1642 = vmatpush1.msra.mxu0 0.0
        %1643 = vmatprep.subr.mxu0 0.0
        %1644 = vmatpush1.msra.mxu0 0.0
        %1645 = vmatprep.subr.mxu0 0.0
        %1646 = vmatpush1.msra.mxu0 0.0
        %1647 = vmatprep.subr.mxu0 0.0
        %1648 = vmatpush1.msra.mxu0 0.0
        %1649 = vmatprep.subr.mxu0 0.0
        %1650 = vmatpush1.msra.mxu0 0.0
        %1651 = vmatprep.subr.mxu0 0.0
        %1652 = vmatpush1.msra.mxu0 0.0
        %1653 = vmatprep.subr.mxu0 0.0
        %1654 = vmatpush1.msra.mxu0 0.0
        %1655 = vmatprep.subr.mxu0 0.0
        %1656 = vmatpush1.msra.mxu0 0.0
        %1657 = vmatprep.subr.mxu0 0.0
        %1658 = vmatpush1.msra.mxu0 0.0
        %1659 = vmatprep.subr.mxu0 0.0
        %1660 = vmatpush1.msra.mxu0 0.0
        %1661 = vmatprep.subr.mxu0 0.0
        %1662 = vmatpush1.msra.mxu0 0.0
        %1663 = vmatprep.subr.mxu0 0.0
        %1664 = vmatpush1.msra.mxu0 0.0
        %1665 = vmatprep.subr.mxu0 0.0
        %1666 = vmatpush1.msra.mxu0 0.0
        %1667 = vmatprep.subr.mxu0 0.0
        %1668 = vmatpush1.msra.mxu0 0.0
        %1669 = vmatprep.subr.mxu0 0.0
        %1670 = vmatpush1.msra.mxu0 0.0
        %1671 = vmatprep.mubr.f32.mxu0 0.0
        %1672 = vmatmul.mubr.f32.gmra.mrb[0].mxu0 %v1588
        %v1673 = vpop.f32.mrb[0].mxu0
        %v1674 = vadd.f32 0.0, %v1673
        %v1675 = vpop.f32.mrb[0].mxu0
        %1676 = vmatprep.mubr.f32.mxu0 0.0
        %1677 = vmatmul.mubr.f32.gmra.mrb[0].mxu0 %v1589
        %v1678 = vpop.f32.mrb[0].mxu0
        %v1679 = vadd.f32 0.0, %v1678
        %v1680 = vpop.f32.mrb[0].mxu0
        %1681 = vdwg.mxu0
        %v1682 = vadd.f32 %v1580, %v1674
        %v1683 = vadd.f32 %v1585, %v1679
        %v1684 = vld [vmem:[#allocation4 + $0x6] sm:$0xff]
        %v1685 = vld [vmem:[#allocation4 + $0xe] sm:$0xff]
        %s1686 = scalar_lea.vmem [#allocation12], 896
        %v1687 = vld [vmem:[%s1686] sm:$0xff]
        %v1688 = vld [vmem:[%s1686 + $0x8] sm:$0xff]
        %v1689 = vld [vmem:[%s1686 + $0x10] sm:$0xff]
        %v1690 = vld [vmem:[%s1686 + $0x18] sm:$0xff]
        %v1691 = vld [vmem:[%s1686 + $0x20] sm:$0xff]
        %v1692 = vld [vmem:[%s1686 + $0x28] sm:$0xff]
        %v1693 = vld [vmem:[%s1686 + $0x30] sm:$0xff]
        %v1694 = vld [vmem:[%s1686 + $0x38] sm:$0xff]
        %v1695 = vld [vmem:[%s1686 + $0x40] sm:$0xff]
        %v1696 = vld [vmem:[%s1686 + $0x48] sm:$0xff]
        %v1697 = vld [vmem:[%s1686 + $0x50] sm:$0xff]
        %v1698 = vld [vmem:[%s1686 + $0x58] sm:$0xff]
        %v1699 = vld [vmem:[%s1686 + $0x60] sm:$0xff]
        %v1700 = vld [vmem:[%s1686 + $0x68] sm:$0xff]
        %v1701 = vld [vmem:[%s1686 + $0x70] sm:$0xff]
        %v1702 = vld [vmem:[%s1686 + $0x78] sm:$0xff]
        %1703 = vmatprep.subr.mxu0 0.0
        %1704 = vmatpush1.msra.mxu0 %v1687
        %1705 = vmatprep.subr.mxu0 0.0
        %1706 = vmatpush1.msra.mxu0 %v1688
        %1707 = vmatprep.subr.mxu0 0.0
        %1708 = vmatpush1.msra.mxu0 %v1689
        %1709 = vmatprep.subr.mxu0 0.0
        %1710 = vmatpush1.msra.mxu0 %v1690
        %1711 = vmatprep.subr.mxu0 0.0
        %1712 = vmatpush1.msra.mxu0 %v1691
        %1713 = vmatprep.subr.mxu0 0.0
        %1714 = vmatpush1.msra.mxu0 %v1692
        %1715 = vmatprep.subr.mxu0 0.0
        %1716 = vmatpush1.msra.mxu0 %v1693
        %1717 = vmatprep.subr.mxu0 0.0
        %1718 = vmatpush1.msra.mxu0 %v1694
        %1719 = vmatprep.subr.mxu0 0.0
        %1720 = vmatpush1.msra.mxu0 %v1695
        %1721 = vmatprep.subr.mxu0 0.0
        %1722 = vmatpush1.msra.mxu0 %v1696
        %1723 = vmatprep.subr.mxu0 0.0
        %1724 = vmatpush1.msra.mxu0 %v1697
        %1725 = vmatprep.subr.mxu0 0.0
        %1726 = vmatpush1.msra.mxu0 %v1698
        %1727 = vmatprep.subr.mxu0 0.0
        %1728 = vmatpush1.msra.mxu0 %v1699
        %1729 = vmatprep.subr.mxu0 0.0
        %1730 = vmatpush1.msra.mxu0 %v1700
        %1731 = vmatprep.subr.mxu0 0.0
        %1732 = vmatpush1.msra.mxu0 %v1701
        %1733 = vmatprep.subr.mxu0 0.0
        %1734 = vmatpush1.msra.mxu0 %v1702
        %1735 = vmatprep.subr.mxu0 0.0
        %1736 = vmatpush1.msra.mxu0 0.0
        %1737 = vmatprep.subr.mxu0 0.0
        %1738 = vmatpush1.msra.mxu0 0.0
        %1739 = vmatprep.subr.mxu0 0.0
        %1740 = vmatpush1.msra.mxu0 0.0
        %1741 = vmatprep.subr.mxu0 0.0
        %1742 = vmatpush1.msra.mxu0 0.0
        %1743 = vmatprep.subr.mxu0 0.0
        %1744 = vmatpush1.msra.mxu0 0.0
        %1745 = vmatprep.subr.mxu0 0.0
        %1746 = vmatpush1.msra.mxu0 0.0
        %1747 = vmatprep.subr.mxu0 0.0
        %1748 = vmatpush1.msra.mxu0 0.0
        %1749 = vmatprep.subr.mxu0 0.0
        %1750 = vmatpush1.msra.mxu0 0.0
        %1751 = vmatprep.subr.mxu0 0.0
        %1752 = vmatpush1.msra.mxu0 0.0
        %1753 = vmatprep.subr.mxu0 0.0
        %1754 = vmatpush1.msra.mxu0 0.0
        %1755 = vmatprep.subr.mxu0 0.0
        %1756 = vmatpush1.msra.mxu0 0.0
        %1757 = vmatprep.subr.mxu0 0.0
        %1758 = vmatpush1.msra.mxu0 0.0
        %1759 = vmatprep.subr.mxu0 0.0
        %1760 = vmatpush1.msra.mxu0 0.0
        %1761 = vmatprep.subr.mxu0 0.0
        %1762 = vmatpush1.msra.mxu0 0.0
        %1763 = vmatprep.subr.mxu0 0.0
        %1764 = vmatpush1.msra.mxu0 0.0
        %1765 = vmatprep.subr.mxu0 0.0
        %1766 = vmatpush1.msra.mxu0 0.0
        %1767 = vmatprep.mubr.f32.mxu0 0.0
        %1768 = vmatmul.mubr.f32.gmra.mrb[0].mxu0 %v1684
        %v1769 = vpop.f32.mrb[0].mxu0
        %v1770 = vadd.f32 0.0, %v1769
        %v1771 = vpop.f32.mrb[0].mxu0
        %1772 = vmatprep.mubr.f32.mxu0 0.0
        %1773 = vmatmul.mubr.f32.gmra.mrb[0].mxu0 %v1685
        %v1774 = vpop.f32.mrb[0].mxu0
        %v1775 = vadd.f32 0.0, %v1774
        %v1776 = vpop.f32.mrb[0].mxu0
        %1777 = vdwg.mxu0
        %v1778 = vadd.f32 %v1682, %v1770
        %v1779 = vadd.f32 %v1683, %v1775
        %v1780 = vld [vmem:[#allocation4 + $0x7] sm:$0xff]
        %v1781 = vld [vmem:[#allocation4 + $0xf] sm:$0xff]
        %s1782 = scalar_lea.vmem [#allocation12], 1024
        %v1783 = vld [vmem:[%s1782] sm:$0xff]
        %v1784 = vld [vmem:[%s1782 + $0x8] sm:$0xff]
        %v1785 = vld [vmem:[%s1782 + $0x10] sm:$0xff]
        %v1786 = vld [vmem:[%s1782 + $0x18] sm:$0xff]
        %v1787 = vld [vmem:[%s1782 + $0x20] sm:$0xff]
        %v1788 = vld [vmem:[%s1782 + $0x28] sm:$0xff]
        %v1789 = vld [vmem:[%s1782 + $0x30] sm:$0xff]
        %v1790 = vld [vmem:[%s1782 + $0x38] sm:$0xff]
        %v1791 = vld [vmem:[%s1782 + $0x40] sm:$0xff]
        %v1792 = vld [vmem:[%s1782 + $0x48] sm:$0xff]
        %v1793 = vld [vmem:[%s1782 + $0x50] sm:$0xff]
        %v1794 = vld [vmem:[%s1782 + $0x58] sm:$0xff]
        %v1795 = vld [vmem:[%s1782 + $0x60] sm:$0xff]
        %v1796 = vld [vmem:[%s1782 + $0x68] sm:$0xff]
        %v1797 = vld [vmem:[%s1782 + $0x70] sm:$0xff]
        %v1798 = vld [vmem:[%s1782 + $0x78] sm:$0xff]
        %1799 = vmatprep.subr.mxu0 0.0
        %1800 = vmatpush1.msra.mxu0 %v1783
        %1801 = vmatprep.subr.mxu0 0.0
        %1802 = vmatpush1.msra.mxu0 %v1784
        %1803 = vmatprep.subr.mxu0 0.0
        %1804 = vmatpush1.msra.mxu0 %v1785
        %1805 = vmatprep.subr.mxu0 0.0
        %1806 = vmatpush1.msra.mxu0 %v1786
        %1807 = vmatprep.subr.mxu0 0.0
        %1808 = vmatpush1.msra.mxu0 %v1787
        %1809 = vmatprep.subr.mxu0 0.0
        %1810 = vmatpush1.msra.mxu0 %v1788
        %1811 = vmatprep.subr.mxu0 0.0
        %1812 = vmatpush1.msra.mxu0 %v1789
        %1813 = vmatprep.subr.mxu0 0.0
        %1814 = vmatpush1.msra.mxu0 %v1790
        %1815 = vmatprep.subr.mxu0 0.0
        %1816 = vmatpush1.msra.mxu0 %v1791
        %1817 = vmatprep.subr.mxu0 0.0
        %1818 = vmatpush1.msra.mxu0 %v1792
        %1819 = vmatprep.subr.mxu0 0.0
        %1820 = vmatpush1.msra.mxu0 %v1793
        %1821 = vmatprep.subr.mxu0 0.0
        %1822 = vmatpush1.msra.mxu0 %v1794
        %1823 = vmatprep.subr.mxu0 0.0
        %1824 = vmatpush1.msra.mxu0 %v1795
        %1825 = vmatprep.subr.mxu0 0.0
        %1826 = vmatpush1.msra.mxu0 %v1796
        %1827 = vmatprep.subr.mxu0 0.0
        %1828 = vmatpush1.msra.mxu0 %v1797
        %1829 = vmatprep.subr.mxu0 0.0
        %1830 = vmatpush1.msra.mxu0 %v1798
        %1831 = vmatprep.subr.mxu0 0.0
        %1832 = vmatpush1.msra.mxu0 0.0
        %1833 = vmatprep.subr.mxu0 0.0
        %1834 = vmatpush1.msra.mxu0 0.0
        %1835 = vmatprep.subr.mxu0 0.0
        %1836 = vmatpush1.msra.mxu0 0.0
        %1837 = vmatprep.subr.mxu0 0.0
        %1838 = vmatpush1.msra.mxu0 0.0
        %1839 = vmatprep.subr.mxu0 0.0
        %1840 = vmatpush1.msra.mxu0 0.0
        %1841 = vmatprep.subr.mxu0 0.0
        %1842 = vmatpush1.msra.mxu0 0.0
        %1843 = vmatprep.subr.mxu0 0.0
        %1844 = vmatpush1.msra.mxu0 0.0
        %1845 = vmatprep.subr.mxu0 0.0
        %1846 = vmatpush1.msra.mxu0 0.0
        %1847 = vmatprep.subr.mxu0 0.0
        %1848 = vmatpush1.msra.mxu0 0.0
        %1849 = vmatprep.subr.mxu0 0.0
        %1850 = vmatpush1.msra.mxu0 0.0
        %1851 = vmatprep.subr.mxu0 0.0
        %1852 = vmatpush1.msra.mxu0 0.0
        %1853 = vmatprep.subr.mxu0 0.0
        %1854 = vmatpush1.msra.mxu0 0.0
        %1855 = vmatprep.subr.mxu0 0.0
        %1856 = vmatpush1.msra.mxu0 0.0
        %1857 = vmatprep.subr.mxu0 0.0
        %1858 = vmatpush1.msra.mxu0 0.0
        %1859 = vmatprep.subr.mxu0 0.0
        %1860 = vmatpush1.msra.mxu0 0.0
        %1861 = vmatprep.subr.mxu0 0.0
        %1862 = vmatpush1.msra.mxu0 0.0
        %1863 = vmatprep.mubr.f32.mxu0 0.0
        %1864 = vmatmul.mubr.f32.gmra.mrb[0].mxu0 %v1780
        %v1865 = vpop.f32.mrb[0].mxu0
        %v1866 = vadd.f32 0.0, %v1865
        %v1867 = vpop.f32.mrb[0].mxu0
        %1868 = vmatprep.mubr.f32.mxu0 0.0
        %1869 = vmatmul.mubr.f32.gmra.mrb[0].mxu0 %v1781
        %v1870 = vpop.f32.mrb[0].mxu0
        %v1871 = vadd.f32 0.0, %v1870
        %v1872 = vpop.f32.mrb[0].mxu0
        %1873 = vdwg.mxu0
        %v1874 = vadd.f32 %v1778, %v1866
        %v1875 = vadd.f32 %v1779, %v1871
        %v1876 = vlaneseq
        %v1877 = vshrl.u32 %v1876, 7
        %v1878 = vsub.s32 0, %v1877
        %v1879 = vrot.slane %v1390, %v1878
        %v1880 = vadd.f32 %v1874, %v1879
        %v1881 = vadd.f32 %v1875, %v1879
        %v1882 = vtanh.pop %v1880
        %v1883 = vtanh.pop %v1881
        %v1884 = vld [vmem:[#allocation16 + $0x2] sm:$0x1]
        // Predicated region
        $region101: #{tpu_custom_call.1} parent=47 // pred_check
          %p1885 = pneg %p401
        $region102: #{tpu_custom_call.1} parent=47 // pred_check_branch
          %1887 = sbr.rel (%p1885) target = $region104
        $region103: #{tpu_custom_call.1} parent=47 // pred_region
          %1888 = vst [vmem:[#allocation5 + $0x4] sm:$0xf] 0.0
        $region104: #{tpu_custom_call.1} parent=47 // pred_fallthru
          _
        // Predicated region
        $region105: #{tpu_custom_call.1} parent=47 // pred_check
          %p1889 = pneg %p406
        $region106: #{tpu_custom_call.1} parent=47 // pred_check_branch
          %1891 = sbr.rel (%p1889) target = $region108
        $region107: #{tpu_custom_call.1} parent=47 // pred_region
          %v1892 = vld [vmem:[#allocation5 + $0x14] sm:$0xf]
          %1893 = vst [vmem:[#allocation5 + $0x4] sm:$0xf] %v1892
        $region108: #{tpu_custom_call.1} parent=47 // pred_fallthru
          _
        %1894 = vst [vmem:[#allocation5 + $0x8] sm:$0xff] %v1882
        %1895 = vst [vmem:[#allocation5 + $0x10] sm:$0xff] %v1883
        %s1896 = scalar_lea.vmem [#allocation12], 1792
        %v1897 = vld [vmem:[%s1896] sm:$0xff]
        %v1898 = vld [vmem:[%s1896 + $0x8] sm:$0xff]
        %v1899 = vld [vmem:[%s1896 + $0x10] sm:$0xff]
        %v1900 = vld [vmem:[%s1896 + $0x18] sm:$0xff]
        %v1901 = vld [vmem:[%s1896 + $0x20] sm:$0xff]
        %v1902 = vld [vmem:[%s1896 + $0x28] sm:$0xff]
        %v1903 = vld [vmem:[%s1896 + $0x30] sm:$0xff]
        %v1904 = vld [vmem:[%s1896 + $0x38] sm:$0xff]
        %v1905 = vld [vmem:[%s1896 + $0x40] sm:$0xff]
        %v1906 = vld [vmem:[%s1896 + $0x48] sm:$0xff]
        %v1907 = vld [vmem:[%s1896 + $0x50] sm:$0xff]
        %v1908 = vld [vmem:[%s1896 + $0x58] sm:$0xff]
        %v1909 = vld [vmem:[%s1896 + $0x60] sm:$0xff]
        %v1910 = vld [vmem:[%s1896 + $0x68] sm:$0xff]
        %v1911 = vld [vmem:[%s1896 + $0x70] sm:$0xff]
        %v1912 = vld [vmem:[%s1896 + $0x78] sm:$0xff]
        %v1913 = vld [vmem:[#allocation5 + $0x4] sm:$0xff]
        %v1914 = vld [vmem:[#allocation5 + $0xc] sm:$0xff]
        %s1915 = scalar_lea.vmem [#allocation12], 1280
        %v1916 = vld [vmem:[%s1915] sm:$0xff]
        %v1917 = vld [vmem:[%s1915 + $0x8] sm:$0xff]
        %v1918 = vld [vmem:[%s1915 + $0x10] sm:$0xff]
        %v1919 = vld [vmem:[%s1915 + $0x18] sm:$0xff]
        %v1920 = vld [vmem:[%s1915 + $0x20] sm:$0xff]
        %v1921 = vld [vmem:[%s1915 + $0x28] sm:$0xff]
        %v1922 = vld [vmem:[%s1915 + $0x30] sm:$0xff]
        %v1923 = vld [vmem:[%s1915 + $0x38] sm:$0xff]
        %v1924 = vld [vmem:[%s1915 + $0x40] sm:$0xff]
        %v1925 = vld [vmem:[%s1915 + $0x48] sm:$0xff]
        %v1926 = vld [vmem:[%s1915 + $0x50] sm:$0xff]
        %v1927 = vld [vmem:[%s1915 + $0x58] sm:$0xff]
        %v1928 = vld [vmem:[%s1915 + $0x60] sm:$0xff]
        %v1929 = vld [vmem:[%s1915 + $0x68] sm:$0xff]
        %v1930 = vld [vmem:[%s1915 + $0x70] sm:$0xff]
        %v1931 = vld [vmem:[%s1915 + $0x78] sm:$0xff]
        %1932 = vmatprep.subr.mxu0 0.0
        %1933 = vmatpush1.msra.mxu0 %v1916
        %1934 = vmatprep.subr.mxu0 0.0
        %1935 = vmatpush1.msra.mxu0 %v1917
        %1936 = vmatprep.subr.mxu0 0.0
        %1937 = vmatpush1.msra.mxu0 %v1918
        %1938 = vmatprep.subr.mxu0 0.0
        %1939 = vmatpush1.msra.mxu0 %v1919
        %1940 = vmatprep.subr.mxu0 0.0
        %1941 = vmatpush1.msra.mxu0 %v1920
        %1942 = vmatprep.subr.mxu0 0.0
        %1943 = vmatpush1.msra.mxu0 %v1921
        %1944 = vmatprep.subr.mxu0 0.0
        %1945 = vmatpush1.msra.mxu0 %v1922
        %1946 = vmatprep.subr.mxu0 0.0
        %1947 = vmatpush1.msra.mxu0 %v1923
        %1948 = vmatprep.subr.mxu0 0.0
        %1949 = vmatpush1.msra.mxu0 %v1924
        %1950 = vmatprep.subr.mxu0 0.0
        %1951 = vmatpush1.msra.mxu0 %v1925
        %1952 = vmatprep.subr.mxu0 0.0
        %1953 = vmatpush1.msra.mxu0 %v1926
        %1954 = vmatprep.subr.mxu0 0.0
        %1955 = vmatpush1.msra.mxu0 %v1927
        %1956 = vmatprep.subr.mxu0 0.0
        %1957 = vmatpush1.msra.mxu0 %v1928
        %1958 = vmatprep.subr.mxu0 0.0
        %1959 = vmatpush1.msra.mxu0 %v1929
        %1960 = vmatprep.subr.mxu0 0.0
        %1961 = vmatpush1.msra.mxu0 %v1930
        %1962 = vmatprep.subr.mxu0 0.0
        %1963 = vmatpush1.msra.mxu0 %v1931
        %1964 = vmatprep.subr.mxu0 0.0
        %1965 = vmatpush1.msra.mxu0 0.0
        %1966 = vmatprep.subr.mxu0 0.0
        %1967 = vmatpush1.msra.mxu0 0.0
        %1968 = vmatprep.subr.mxu0 0.0
        %1969 = vmatpush1.msra.mxu0 0.0
        %1970 = vmatprep.subr.mxu0 0.0
        %1971 = vmatpush1.msra.mxu0 0.0
        %1972 = vmatprep.subr.mxu0 0.0
        %1973 = vmatpush1.msra.mxu0 0.0
        %1974 = vmatprep.subr.mxu0 0.0
        %1975 = vmatpush1.msra.mxu0 0.0
        %1976 = vmatprep.subr.mxu0 0.0
        %1977 = vmatpush1.msra.mxu0 0.0
        %1978 = vmatprep.subr.mxu0 0.0
        %1979 = vmatpush1.msra.mxu0 0.0
        %1980 = vmatprep.subr.mxu0 0.0
        %1981 = vmatpush1.msra.mxu0 0.0
        %1982 = vmatprep.subr.mxu0 0.0
        %1983 = vmatpush1.msra.mxu0 0.0
        %1984 = vmatprep.subr.mxu0 0.0
        %1985 = vmatpush1.msra.mxu0 0.0
        %1986 = vmatprep.subr.mxu0 0.0
        %1987 = vmatpush1.msra.mxu0 0.0
        %1988 = vmatprep.subr.mxu0 0.0
        %1989 = vmatpush1.msra.mxu0 0.0
        %1990 = vmatprep.subr.mxu0 0.0
        %1991 = vmatpush1.msra.mxu0 0.0
        %1992 = vmatprep.subr.mxu0 0.0
        %1993 = vmatpush1.msra.mxu0 0.0
        %1994 = vmatprep.subr.mxu0 0.0
        %1995 = vmatpush1.msra.mxu0 0.0
        %1996 = vmatprep.mubr.f32.mxu0 0.0
        %1997 = vmatmul.mubr.f32.gmra.mrb[0].mxu0 %v1913
        %v1998 = vpop.f32.mrb[0].mxu0
        %v1999 = vadd.f32 0.0, %v1998
        %v2000 = vpop.f32.mrb[0].mxu0
        %2001 = vmatprep.mubr.f32.mxu0 0.0
        %2002 = vmatmul.mubr.f32.gmra.mrb[0].mxu0 %v1914
        %v2003 = vpop.f32.mrb[0].mxu0
        %v2004 = vadd.f32 0.0, %v2003
        %v2005 = vpop.f32.mrb[0].mxu0
        %2006 = vdwg.mxu0
        %2007 = vmatprep.subr.mxu0 0.0
        %2008 = vmatpush1.msra.mxu0 %v1897
        %2009 = vmatprep.subr.mxu0 0.0
        %2010 = vmatpush1.msra.mxu0 %v1898
        %2011 = vmatprep.subr.mxu0 0.0
        %2012 = vmatpush1.msra.mxu0 %v1899
        %2013 = vmatprep.subr.mxu0 0.0
        %2014 = vmatpush1.msra.mxu0 %v1900
        %2015 = vmatprep.subr.mxu0 0.0
        %2016 = vmatpush1.msra.mxu0 %v1901
        %2017 = vmatprep.subr.mxu0 0.0
        %2018 = vmatpush1.msra.mxu0 %v1902
        %2019 = vmatprep.subr.mxu0 0.0
        %2020 = vmatpush1.msra.mxu0 %v1903
        %2021 = vmatprep.subr.mxu0 0.0
        %2022 = vmatpush1.msra.mxu0 %v1904
        %2023 = vmatprep.subr.mxu0 0.0
        %2024 = vmatpush1.msra.mxu0 %v1905
        %2025 = vmatprep.subr.mxu0 0.0
        %2026 = vmatpush1.msra.mxu0 %v1906
        %2027 = vmatprep.subr.mxu0 0.0
        %2028 = vmatpush1.msra.mxu0 %v1907
        %2029 = vmatprep.subr.mxu0 0.0
        %2030 = vmatpush1.msra.mxu0 %v1908
        %2031 = vmatprep.subr.mxu0 0.0
        %2032 = vmatpush1.msra.mxu0 %v1909
        %2033 = vmatprep.subr.mxu0 0.0
        %2034 = vmatpush1.msra.mxu0 %v1910
        %2035 = vmatprep.subr.mxu0 0.0
        %2036 = vmatpush1.msra.mxu0 %v1911
        %2037 = vmatprep.subr.mxu0 0.0
        %2038 = vmatpush1.msra.mxu0 %v1912
        %2039 = vmatprep.subr.mxu0 0.0
        %2040 = vmatpush1.msra.mxu0 0.0
        %2041 = vmatprep.subr.mxu0 0.0
        %2042 = vmatpush1.msra.mxu0 0.0
        %2043 = vmatprep.subr.mxu0 0.0
        %2044 = vmatpush1.msra.mxu0 0.0
        %2045 = vmatprep.subr.mxu0 0.0
        %2046 = vmatpush1.msra.mxu0 0.0
        %2047 = vmatprep.subr.mxu0 0.0
        %2048 = vmatpush1.msra.mxu0 0.0
        %2049 = vmatprep.subr.mxu0 0.0
        %2050 = vmatpush1.msra.mxu0 0.0
        %2051 = vmatprep.subr.mxu0 0.0
        %2052 = vmatpush1.msra.mxu0 0.0
        %2053 = vmatprep.subr.mxu0 0.0
        %2054 = vmatpush1.msra.mxu0 0.0
        %2055 = vmatprep.subr.mxu0 0.0
        %2056 = vmatpush1.msra.mxu0 0.0
        %2057 = vmatprep.subr.mxu0 0.0
        %2058 = vmatpush1.msra.mxu0 0.0
        %2059 = vmatprep.subr.mxu0 0.0
        %2060 = vmatpush1.msra.mxu0 0.0
        %2061 = vmatprep.subr.mxu0 0.0
        %2062 = vmatpush1.msra.mxu0 0.0
        %2063 = vmatprep.subr.mxu0 0.0
        %2064 = vmatpush1.msra.mxu0 0.0
        %2065 = vmatprep.subr.mxu0 0.0
        %2066 = vmatpush1.msra.mxu0 0.0
        %2067 = vmatprep.subr.mxu0 0.0
        %2068 = vmatpush1.msra.mxu0 0.0
        %2069 = vmatprep.subr.mxu0 0.0
        %2070 = vmatpush1.msra.mxu0 0.0
        %2071 = vmatprep.mubr.f32.mxu0 0.0
        %2072 = vmatmul.mubr.f32.gmra.mrb[0].mxu0 %v1882
        %v2073 = vpop.f32.mrb[0].mxu0
        %v2074 = vadd.f32 %v1999, %v2073
        %v2075 = vpop.f32.mrb[0].mxu0
        %2076 = vmatprep.mubr.f32.mxu0 0.0
        %2077 = vmatmul.mubr.f32.gmra.mrb[0].mxu0 %v1883
        %v2078 = vpop.f32.mrb[0].mxu0
        %v2079 = vadd.f32 %v2004, %v2078
        %v2080 = vpop.f32.mrb[0].mxu0
        %2081 = vdwg.mxu0
        %v2082 = vld [vmem:[#allocation5 + $0x5] sm:$0xff]
        %v2083 = vld [vmem:[#allocation5 + $0xd] sm:$0xff]
        %s2084 = scalar_lea.vmem [#allocation12], 1408
        %v2085 = vld [vmem:[%s2084] sm:$0xff]
        %v2086 = vld [vmem:[%s2084 + $0x8] sm:$0xff]
        %v2087 = vld [vmem:[%s2084 + $0x10] sm:$0xff]
        %v2088 = vld [vmem:[%s2084 + $0x18] sm:$0xff]
        %v2089 = vld [vmem:[%s2084 + $0x20] sm:$0xff]
        %v2090 = vld [vmem:[%s2084 + $0x28] sm:$0xff]
        %v2091 = vld [vmem:[%s2084 + $0x30] sm:$0xff]
        %v2092 = vld [vmem:[%s2084 + $0x38] sm:$0xff]
        %v2093 = vld [vmem:[%s2084 + $0x40] sm:$0xff]
        %v2094 = vld [vmem:[%s2084 + $0x48] sm:$0xff]
        %v2095 = vld [vmem:[%s2084 + $0x50] sm:$0xff]
        %v2096 = vld [vmem:[%s2084 + $0x58] sm:$0xff]
        %v2097 = vld [vmem:[%s2084 + $0x60] sm:$0xff]
        %v2098 = vld [vmem:[%s2084 + $0x68] sm:$0xff]
        %v2099 = vld [vmem:[%s2084 + $0x70] sm:$0xff]
        %v2100 = vld [vmem:[%s2084 + $0x78] sm:$0xff]
        %2101 = vmatprep.subr.mxu0 0.0
        %2102 = vmatpush1.msra.mxu0 %v2085
        %2103 = vmatprep.subr.mxu0 0.0
        %2104 = vmatpush1.msra.mxu0 %v2086
        %2105 = vmatprep.subr.mxu0 0.0
        %2106 = vmatpush1.msra.mxu0 %v2087
        %2107 = vmatprep.subr.mxu0 0.0
        %2108 = vmatpush1.msra.mxu0 %v2088
        %2109 = vmatprep.subr.mxu0 0.0
        %2110 = vmatpush1.msra.mxu0 %v2089
        %2111 = vmatprep.subr.mxu0 0.0
        %2112 = vmatpush1.msra.mxu0 %v2090
        %2113 = vmatprep.subr.mxu0 0.0
        %2114 = vmatpush1.msra.mxu0 %v2091
        %2115 = vmatprep.subr.mxu0 0.0
        %2116 = vmatpush1.msra.mxu0 %v2092
        %2117 = vmatprep.subr.mxu0 0.0
        %2118 = vmatpush1.msra.mxu0 %v2093
        %2119 = vmatprep.subr.mxu0 0.0
        %2120 = vmatpush1.msra.mxu0 %v2094
        %2121 = vmatprep.subr.mxu0 0.0
        %2122 = vmatpush1.msra.mxu0 %v2095
        %2123 = vmatprep.subr.mxu0 0.0
        %2124 = vmatpush1.msra.mxu0 %v2096
        %2125 = vmatprep.subr.mxu0 0.0
        %2126 = vmatpush1.msra.mxu0 %v2097
        %2127 = vmatprep.subr.mxu0 0.0
        %2128 = vmatpush1.msra.mxu0 %v2098
        %2129 = vmatprep.subr.mxu0 0.0
        %2130 = vmatpush1.msra.mxu0 %v2099
        %2131 = vmatprep.subr.mxu0 0.0
        %2132 = vmatpush1.msra.mxu0 %v2100
        %2133 = vmatprep.subr.mxu0 0.0
        %2134 = vmatpush1.msra.mxu0 0.0
        %2135 = vmatprep.subr.mxu0 0.0
        %2136 = vmatpush1.msra.mxu0 0.0
        %2137 = vmatprep.subr.mxu0 0.0
        %2138 = vmatpush1.msra.mxu0 0.0
        %2139 = vmatprep.subr.mxu0 0.0
        %2140 = vmatpush1.msra.mxu0 0.0
        %2141 = vmatprep.subr.mxu0 0.0
        %2142 = vmatpush1.msra.mxu0 0.0
        %2143 = vmatprep.subr.mxu0 0.0
        %2144 = vmatpush1.msra.mxu0 0.0
        %2145 = vmatprep.subr.mxu0 0.0
        %2146 = vmatpush1.msra.mxu0 0.0
        %2147 = vmatprep.subr.mxu0 0.0
        %2148 = vmatpush1.msra.mxu0 0.0
        %2149 = vmatprep.subr.mxu0 0.0
        %2150 = vmatpush1.msra.mxu0 0.0
        %2151 = vmatprep.subr.mxu0 0.0
        %2152 = vmatpush1.msra.mxu0 0.0
        %2153 = vmatprep.subr.mxu0 0.0
        %2154 = vmatpush1.msra.mxu0 0.0
        %2155 = vmatprep.subr.mxu0 0.0
        %2156 = vmatpush1.msra.mxu0 0.0
        %2157 = vmatprep.subr.mxu0 0.0
        %2158 = vmatpush1.msra.mxu0 0.0
        %2159 = vmatprep.subr.mxu0 0.0
        %2160 = vmatpush1.msra.mxu0 0.0
        %2161 = vmatprep.subr.mxu0 0.0
        %2162 = vmatpush1.msra.mxu0 0.0
        %2163 = vmatprep.subr.mxu0 0.0
        %2164 = vmatpush1.msra.mxu0 0.0
        %2165 = vmatprep.mubr.f32.mxu0 0.0
        %2166 = vmatmul.mubr.f32.gmra.mrb[0].mxu0 %v2082
        %v2167 = vpop.f32.mrb[0].mxu0
        %v2168 = vadd.f32 0.0, %v2167
        %v2169 = vpop.f32.mrb[0].mxu0
        %2170 = vmatprep.mubr.f32.mxu0 0.0
        %2171 = vmatmul.mubr.f32.gmra.mrb[0].mxu0 %v2083
        %v2172 = vpop.f32.mrb[0].mxu0
        %v2173 = vadd.f32 0.0, %v2172
        %v2174 = vpop.f32.mrb[0].mxu0
        %2175 = vdwg.mxu0
        %v2176 = vadd.f32 %v2074, %v2168
        %v2177 = vadd.f32 %v2079, %v2173
        %v2178 = vld [vmem:[#allocation5 + $0x6] sm:$0xff]
        %v2179 = vld [vmem:[#allocation5 + $0xe] sm:$0xff]
        %s2180 = scalar_lea.vmem [#allocation12], 1536
        %v2181 = vld [vmem:[%s2180] sm:$0xff]
        %v2182 = vld [vmem:[%s2180 + $0x8] sm:$0xff]
        %v2183 = vld [vmem:[%s2180 + $0x10] sm:$0xff]
        %v2184 = vld [vmem:[%s2180 + $0x18] sm:$0xff]
        %v2185 = vld [vmem:[%s2180 + $0x20] sm:$0xff]
        %v2186 = vld [vmem:[%s2180 + $0x28] sm:$0xff]
        %v2187 = vld [vmem:[%s2180 + $0x30] sm:$0xff]
        %v2188 = vld [vmem:[%s2180 + $0x38] sm:$0xff]
        %v2189 = vld [vmem:[%s2180 + $0x40] sm:$0xff]
        %v2190 = vld [vmem:[%s2180 + $0x48] sm:$0xff]
        %v2191 = vld [vmem:[%s2180 + $0x50] sm:$0xff]
        %v2192 = vld [vmem:[%s2180 + $0x58] sm:$0xff]
        %v2193 = vld [vmem:[%s2180 + $0x60] sm:$0xff]
        %v2194 = vld [vmem:[%s2180 + $0x68] sm:$0xff]
        %v2195 = vld [vmem:[%s2180 + $0x70] sm:$0xff]
        %v2196 = vld [vmem:[%s2180 + $0x78] sm:$0xff]
        %2197 = vmatprep.subr.mxu0 0.0
        %2198 = vmatpush1.msra.mxu0 %v2181
        %2199 = vmatprep.subr.mxu0 0.0
        %2200 = vmatpush1.msra.mxu0 %v2182
        %2201 = vmatprep.subr.mxu0 0.0
        %2202 = vmatpush1.msra.mxu0 %v2183
        %2203 = vmatprep.subr.mxu0 0.0
        %2204 = vmatpush1.msra.mxu0 %v2184
        %2205 = vmatprep.subr.mxu0 0.0
        %2206 = vmatpush1.msra.mxu0 %v2185
        %2207 = vmatprep.subr.mxu0 0.0
        %2208 = vmatpush1.msra.mxu0 %v2186
        %2209 = vmatprep.subr.mxu0 0.0
        %2210 = vmatpush1.msra.mxu0 %v2187
        %2211 = vmatprep.subr.mxu0 0.0
        %2212 = vmatpush1.msra.mxu0 %v2188
        %2213 = vmatprep.subr.mxu0 0.0
        %2214 = vmatpush1.msra.mxu0 %v2189
        %2215 = vmatprep.subr.mxu0 0.0
        %2216 = vmatpush1.msra.mxu0 %v2190
        %2217 = vmatprep.subr.mxu0 0.0
        %2218 = vmatpush1.msra.mxu0 %v2191
        %2219 = vmatprep.subr.mxu0 0.0
        %2220 = vmatpush1.msra.mxu0 %v2192
        %2221 = vmatprep.subr.mxu0 0.0
        %2222 = vmatpush1.msra.mxu0 %v2193
        %2223 = vmatprep.subr.mxu0 0.0
        %2224 = vmatpush1.msra.mxu0 %v2194
        %2225 = vmatprep.subr.mxu0 0.0
        %2226 = vmatpush1.msra.mxu0 %v2195
        %2227 = vmatprep.subr.mxu0 0.0
        %2228 = vmatpush1.msra.mxu0 %v2196
        %2229 = vmatprep.subr.mxu0 0.0
        %2230 = vmatpush1.msra.mxu0 0.0
        %2231 = vmatprep.subr.mxu0 0.0
        %2232 = vmatpush1.msra.mxu0 0.0
        %2233 = vmatprep.subr.mxu0 0.0
        %2234 = vmatpush1.msra.mxu0 0.0
        %2235 = vmatprep.subr.mxu0 0.0
        %2236 = vmatpush1.msra.mxu0 0.0
        %2237 = vmatprep.subr.mxu0 0.0
        %2238 = vmatpush1.msra.mxu0 0.0
        %2239 = vmatprep.subr.mxu0 0.0
        %2240 = vmatpush1.msra.mxu0 0.0
        %2241 = vmatprep.subr.mxu0 0.0
        %2242 = vmatpush1.msra.mxu0 0.0
        %2243 = vmatprep.subr.mxu0 0.0
        %2244 = vmatpush1.msra.mxu0 0.0
        %2245 = vmatprep.subr.mxu0 0.0
        %2246 = vmatpush1.msra.mxu0 0.0
        %2247 = vmatprep.subr.mxu0 0.0
        %2248 = vmatpush1.msra.mxu0 0.0
        %2249 = vmatprep.subr.mxu0 0.0
        %2250 = vmatpush1.msra.mxu0 0.0
        %2251 = vmatprep.subr.mxu0 0.0
        %2252 = vmatpush1.msra.mxu0 0.0
        %2253 = vmatprep.subr.mxu0 0.0
        %2254 = vmatpush1.msra.mxu0 0.0
        %2255 = vmatprep.subr.mxu0 0.0
        %2256 = vmatpush1.msra.mxu0 0.0
        %2257 = vmatprep.subr.mxu0 0.0
        %2258 = vmatpush1.msra.mxu0 0.0
        %2259 = vmatprep.subr.mxu0 0.0
        %2260 = vmatpush1.msra.mxu0 0.0
        %2261 = vmatprep.mubr.f32.mxu0 0.0
        %2262 = vmatmul.mubr.f32.gmra.mrb[0].mxu0 %v2178
        %v2263 = vpop.f32.mrb[0].mxu0
        %v2264 = vadd.f32 0.0, %v2263
        %v2265 = vpop.f32.mrb[0].mxu0
        %2266 = vmatprep.mubr.f32.mxu0 0.0
        %2267 = vmatmul.mubr.f32.gmra.mrb[0].mxu0 %v2179
        %v2268 = vpop.f32.mrb[0].mxu0
        %v2269 = vadd.f32 0.0, %v2268
        %v2270 = vpop.f32.mrb[0].mxu0
        %2271 = vdwg.mxu0
        %v2272 = vadd.f32 %v2176, %v2264
        %v2273 = vadd.f32 %v2177, %v2269
        %v2274 = vld [vmem:[#allocation5 + $0x7] sm:$0xff]
        %v2275 = vld [vmem:[#allocation5 + $0xf] sm:$0xff]
        %s2276 = scalar_lea.vmem [#allocation12], 1664
        %v2277 = vld [vmem:[%s2276] sm:$0xff]
        %v2278 = vld [vmem:[%s2276 + $0x8] sm:$0xff]
        %v2279 = vld [vmem:[%s2276 + $0x10] sm:$0xff]
        %v2280 = vld [vmem:[%s2276 + $0x18] sm:$0xff]
        %v2281 = vld [vmem:[%s2276 + $0x20] sm:$0xff]
        %v2282 = vld [vmem:[%s2276 + $0x28] sm:$0xff]
        %v2283 = vld [vmem:[%s2276 + $0x30] sm:$0xff]
        %v2284 = vld [vmem:[%s2276 + $0x38] sm:$0xff]
        %v2285 = vld [vmem:[%s2276 + $0x40] sm:$0xff]
        %v2286 = vld [vmem:[%s2276 + $0x48] sm:$0xff]
        %v2287 = vld [vmem:[%s2276 + $0x50] sm:$0xff]
        %v2288 = vld [vmem:[%s2276 + $0x58] sm:$0xff]
        %v2289 = vld [vmem:[%s2276 + $0x60] sm:$0xff]
        %v2290 = vld [vmem:[%s2276 + $0x68] sm:$0xff]
        %v2291 = vld [vmem:[%s2276 + $0x70] sm:$0xff]
        %v2292 = vld [vmem:[%s2276 + $0x78] sm:$0xff]
        %2293 = vmatprep.subr.mxu0 0.0
        %2294 = vmatpush1.msra.mxu0 %v2277
        %2295 = vmatprep.subr.mxu0 0.0
        %2296 = vmatpush1.msra.mxu0 %v2278
        %2297 = vmatprep.subr.mxu0 0.0
        %2298 = vmatpush1.msra.mxu0 %v2279
        %2299 = vmatprep.subr.mxu0 0.0
        %2300 = vmatpush1.msra.mxu0 %v2280
        %2301 = vmatprep.subr.mxu0 0.0
        %2302 = vmatpush1.msra.mxu0 %v2281
        %2303 = vmatprep.subr.mxu0 0.0
        %2304 = vmatpush1.msra.mxu0 %v2282
        %2305 = vmatprep.subr.mxu0 0.0
        %2306 = vmatpush1.msra.mxu0 %v2283
        %2307 = vmatprep.subr.mxu0 0.0
        %2308 = vmatpush1.msra.mxu0 %v2284
        %2309 = vmatprep.subr.mxu0 0.0
        %2310 = vmatpush1.msra.mxu0 %v2285
        %2311 = vmatprep.subr.mxu0 0.0
        %2312 = vmatpush1.msra.mxu0 %v2286
        %2313 = vmatprep.subr.mxu0 0.0
        %2314 = vmatpush1.msra.mxu0 %v2287
        %2315 = vmatprep.subr.mxu0 0.0
        %2316 = vmatpush1.msra.mxu0 %v2288
        %2317 = vmatprep.subr.mxu0 0.0
        %2318 = vmatpush1.msra.mxu0 %v2289
        %2319 = vmatprep.subr.mxu0 0.0
        %2320 = vmatpush1.msra.mxu0 %v2290
        %2321 = vmatprep.subr.mxu0 0.0
        %2322 = vmatpush1.msra.mxu0 %v2291
        %2323 = vmatprep.subr.mxu0 0.0
        %2324 = vmatpush1.msra.mxu0 %v2292
        %2325 = vmatprep.subr.mxu0 0.0
        %2326 = vmatpush1.msra.mxu0 0.0
        %2327 = vmatprep.subr.mxu0 0.0
        %2328 = vmatpush1.msra.mxu0 0.0
        %2329 = vmatprep.subr.mxu0 0.0
        %2330 = vmatpush1.msra.mxu0 0.0
        %2331 = vmatprep.subr.mxu0 0.0
        %2332 = vmatpush1.msra.mxu0 0.0
        %2333 = vmatprep.subr.mxu0 0.0
        %2334 = vmatpush1.msra.mxu0 0.0
        %2335 = vmatprep.subr.mxu0 0.0
        %2336 = vmatpush1.msra.mxu0 0.0
        %2337 = vmatprep.subr.mxu0 0.0
        %2338 = vmatpush1.msra.mxu0 0.0
        %2339 = vmatprep.subr.mxu0 0.0
        %2340 = vmatpush1.msra.mxu0 0.0
        %2341 = vmatprep.subr.mxu0 0.0
        %2342 = vmatpush1.msra.mxu0 0.0
        %2343 = vmatprep.subr.mxu0 0.0
        %2344 = vmatpush1.msra.mxu0 0.0
        %2345 = vmatprep.subr.mxu0 0.0
        %2346 = vmatpush1.msra.mxu0 0.0
        %2347 = vmatprep.subr.mxu0 0.0
        %2348 = vmatpush1.msra.mxu0 0.0
        %2349 = vmatprep.subr.mxu0 0.0
        %2350 = vmatpush1.msra.mxu0 0.0
        %2351 = vmatprep.subr.mxu0 0.0
        %2352 = vmatpush1.msra.mxu0 0.0
        %2353 = vmatprep.subr.mxu0 0.0
        %2354 = vmatpush1.msra.mxu0 0.0
        %2355 = vmatprep.subr.mxu0 0.0
        %2356 = vmatpush1.msra.mxu0 0.0
        %2357 = vmatprep.mubr.f32.mxu0 0.0
        %2358 = vmatmul.mubr.f32.gmra.mrb[0].mxu0 %v2274
        %v2359 = vpop.f32.mrb[0].mxu0
        %v2360 = vadd.f32 0.0, %v2359
        %v2361 = vpop.f32.mrb[0].mxu0
        %2362 = vmatprep.mubr.f32.mxu0 0.0
        %2363 = vmatmul.mubr.f32.gmra.mrb[0].mxu0 %v2275
        %v2364 = vpop.f32.mrb[0].mxu0
        %v2365 = vadd.f32 0.0, %v2364
        %v2366 = vpop.f32.mrb[0].mxu0
        %2367 = vdwg.mxu0
        %v2368 = vadd.f32 %v2272, %v2360
        %v2369 = vadd.f32 %v2273, %v2365
        %v2370 = vlaneseq
        %v2371 = vshrl.u32 %v2370, 7
        %v2372 = vsub.s32 0, %v2371
        %v2373 = vrot.slane %v1884, %v2372
        %v2374 = vadd.f32 %v2368, %v2373
        %v2375 = vadd.f32 %v2369, %v2373
        %v2376 = vtanh.pop %v2374
        %v2377 = vtanh.pop %v2375
        %v2378 = vld [vmem:[#allocation18] sm:$0x1]
        // Predicated region
        $region109: #{tpu_custom_call.1} parent=47 // pred_check
          %p2379 = pneg %p401
        $region110: #{tpu_custom_call.1} parent=47 // pred_check_branch
          %2381 = sbr.rel (%p2379) target = $region112
        $region111: #{tpu_custom_call.1} parent=47 // pred_region
          %2382 = vst [vmem:[#allocation6 + $0x4] sm:$0xf] 0.0
        $region112: #{tpu_custom_call.1} parent=47 // pred_fallthru
          _
        // Predicated region
        $region113: #{tpu_custom_call.1} parent=47 // pred_check
          %p2383 = pneg %p406
        $region114: #{tpu_custom_call.1} parent=47 // pred_check_branch
          %2385 = sbr.rel (%p2383) target = $region116
        $region115: #{tpu_custom_call.1} parent=47 // pred_region
          %v2386 = vld [vmem:[#allocation6 + $0x14] sm:$0xf]
          %2387 = vst [vmem:[#allocation6 + $0x4] sm:$0xf] %v2386
        $region116: #{tpu_custom_call.1} parent=47 // pred_fallthru
          _
        %2388 = vst [vmem:[#allocation6 + $0x8] sm:$0xff] %v2376
        %2389 = vst [vmem:[#allocation6 + $0x10] sm:$0xff] %v2377
        %s2390 = scalar_lea.vmem [#allocation13], 512
        %v2391 = vld [vmem:[%s2390] sm:$0xff]
        %v2392 = vld [vmem:[%s2390 + $0x8] sm:$0xff]
        %v2393 = vld [vmem:[%s2390 + $0x10] sm:$0xff]
        %v2394 = vld [vmem:[%s2390 + $0x18] sm:$0xff]
        %v2395 = vld [vmem:[%s2390 + $0x20] sm:$0xff]
        %v2396 = vld [vmem:[%s2390 + $0x28] sm:$0xff]
        %v2397 = vld [vmem:[%s2390 + $0x30] sm:$0xff]
        %v2398 = vld [vmem:[%s2390 + $0x38] sm:$0xff]
        %v2399 = vld [vmem:[%s2390 + $0x40] sm:$0xff]
        %v2400 = vld [vmem:[%s2390 + $0x48] sm:$0xff]
        %v2401 = vld [vmem:[%s2390 + $0x50] sm:$0xff]
        %v2402 = vld [vmem:[%s2390 + $0x58] sm:$0xff]
        %v2403 = vld [vmem:[%s2390 + $0x60] sm:$0xff]
        %v2404 = vld [vmem:[%s2390 + $0x68] sm:$0xff]
        %v2405 = vld [vmem:[%s2390 + $0x70] sm:$0xff]
        %v2406 = vld [vmem:[%s2390 + $0x78] sm:$0xff]
        %v2407 = vld [vmem:[#allocation6 + $0x4] sm:$0xff]
        %v2408 = vld [vmem:[#allocation6 + $0xc] sm:$0xff]
        %v2409 = vld [vmem:[#allocation13] sm:$0xff]
        %v2410 = vld [vmem:[#allocation13 + $0x8] sm:$0xff]
        %v2411 = vld [vmem:[#allocation13 + $0x10] sm:$0xff]
        %v2412 = vld [vmem:[#allocation13 + $0x18] sm:$0xff]
        %v2413 = vld [vmem:[#allocation13 + $0x20] sm:$0xff]
        %v2414 = vld [vmem:[#allocation13 + $0x28] sm:$0xff]
        %v2415 = vld [vmem:[#allocation13 + $0x30] sm:$0xff]
        %v2416 = vld [vmem:[#allocation13 + $0x38] sm:$0xff]
        %v2417 = vld [vmem:[#allocation13 + $0x40] sm:$0xff]
        %v2418 = vld [vmem:[#allocation13 + $0x48] sm:$0xff]
        %v2419 = vld [vmem:[#allocation13 + $0x50] sm:$0xff]
        %v2420 = vld [vmem:[#allocation13 + $0x58] sm:$0xff]
        %v2421 = vld [vmem:[#allocation13 + $0x60] sm:$0xff]
        %v2422 = vld [vmem:[#allocation13 + $0x68] sm:$0xff]
        %v2423 = vld [vmem:[#allocation13 + $0x70] sm:$0xff]
        %v2424 = vld [vmem:[#allocation13 + $0x78] sm:$0xff]
        %2425 = vmatprep.subr.mxu0 0.0
        %2426 = vmatpush1.msra.mxu0 %v2409
        %2427 = vmatprep.subr.mxu0 0.0
        %2428 = vmatpush1.msra.mxu0 %v2410
        %2429 = vmatprep.subr.mxu0 0.0
        %2430 = vmatpush1.msra.mxu0 %v2411
        %2431 = vmatprep.subr.mxu0 0.0
        %2432 = vmatpush1.msra.mxu0 %v2412
        %2433 = vmatprep.subr.mxu0 0.0
        %2434 = vmatpush1.msra.mxu0 %v2413
        %2435 = vmatprep.subr.mxu0 0.0
        %2436 = vmatpush1.msra.mxu0 %v2414
        %2437 = vmatprep.subr.mxu0 0.0
        %2438 = vmatpush1.msra.mxu0 %v2415
        %2439 = vmatprep.subr.mxu0 0.0
        %2440 = vmatpush1.msra.mxu0 %v2416
        %2441 = vmatprep.subr.mxu0 0.0
        %2442 = vmatpush1.msra.mxu0 %v2417
        %2443 = vmatprep.subr.mxu0 0.0
        %2444 = vmatpush1.msra.mxu0 %v2418
        %2445 = vmatprep.subr.mxu0 0.0
        %2446 = vmatpush1.msra.mxu0 %v2419
        %2447 = vmatprep.subr.mxu0 0.0
        %2448 = vmatpush1.msra.mxu0 %v2420
        %2449 = vmatprep.subr.mxu0 0.0
        %2450 = vmatpush1.msra.mxu0 %v2421
        %2451 = vmatprep.subr.mxu0 0.0
        %2452 = vmatpush1.msra.mxu0 %v2422
        %2453 = vmatprep.subr.mxu0 0.0
        %2454 = vmatpush1.msra.mxu0 %v2423
        %2455 = vmatprep.subr.mxu0 0.0
        %2456 = vmatpush1.msra.mxu0 %v2424
        %2457 = vmatprep.subr.mxu0 0.0
        %2458 = vmatpush1.msra.mxu0 0.0
        %2459 = vmatprep.subr.mxu0 0.0
        %2460 = vmatpush1.msra.mxu0 0.0
        %2461 = vmatprep.subr.mxu0 0.0
        %2462 = vmatpush1.msra.mxu0 0.0
        %2463 = vmatprep.subr.mxu0 0.0
        %2464 = vmatpush1.msra.mxu0 0.0
        %2465 = vmatprep.subr.mxu0 0.0
        %2466 = vmatpush1.msra.mxu0 0.0
        %2467 = vmatprep.subr.mxu0 0.0
        %2468 = vmatpush1.msra.mxu0 0.0
        %2469 = vmatprep.subr.mxu0 0.0
        %2470 = vmatpush1.msra.mxu0 0.0
        %2471 = vmatprep.subr.mxu0 0.0
        %2472 = vmatpush1.msra.mxu0 0.0
        %2473 = vmatprep.subr.mxu0 0.0
        %2474 = vmatpush1.msra.mxu0 0.0
        %2475 = vmatprep.subr.mxu0 0.0
        %2476 = vmatpush1.msra.mxu0 0.0
        %2477 = vmatprep.subr.mxu0 0.0
        %2478 = vmatpush1.msra.mxu0 0.0
        %2479 = vmatprep.subr.mxu0 0.0
        %2480 = vmatpush1.msra.mxu0 0.0
        %2481 = vmatprep.subr.mxu0 0.0
        %2482 = vmatpush1.msra.mxu0 0.0
        %2483 = vmatprep.subr.mxu0 0.0
        %2484 = vmatpush1.msra.mxu0 0.0
        %2485 = vmatprep.subr.mxu0 0.0
        %2486 = vmatpush1.msra.mxu0 0.0
        %2487 = vmatprep.subr.mxu0 0.0
        %2488 = vmatpush1.msra.mxu0 0.0
        %2489 = vmatprep.mubr.f32.mxu0 0.0
        %2490 = vmatmul.mubr.f32.gmra.mrb[0].mxu0 %v2407
        %v2491 = vpop.f32.mrb[0].mxu0
        %v2492 = vadd.f32 0.0, %v2491
        %v2493 = vpop.f32.mrb[0].mxu0
        %2494 = vmatprep.mubr.f32.mxu0 0.0
        %2495 = vmatmul.mubr.f32.gmra.mrb[0].mxu0 %v2408
        %v2496 = vpop.f32.mrb[0].mxu0
        %v2497 = vadd.f32 0.0, %v2496
        %v2498 = vpop.f32.mrb[0].mxu0
        %2499 = vdwg.mxu0
        %2500 = vmatprep.subr.mxu0 0.0
        %2501 = vmatpush1.msra.mxu0 %v2391
        %2502 = vmatprep.subr.mxu0 0.0
        %2503 = vmatpush1.msra.mxu0 %v2392
        %2504 = vmatprep.subr.mxu0 0.0
        %2505 = vmatpush1.msra.mxu0 %v2393
        %2506 = vmatprep.subr.mxu0 0.0
        %2507 = vmatpush1.msra.mxu0 %v2394
        %2508 = vmatprep.subr.mxu0 0.0
        %2509 = vmatpush1.msra.mxu0 %v2395
        %2510 = vmatprep.subr.mxu0 0.0
        %2511 = vmatpush1.msra.mxu0 %v2396
        %2512 = vmatprep.subr.mxu0 0.0
        %2513 = vmatpush1.msra.mxu0 %v2397
        %2514 = vmatprep.subr.mxu0 0.0
        %2515 = vmatpush1.msra.mxu0 %v2398
        %2516 = vmatprep.subr.mxu0 0.0
        %2517 = vmatpush1.msra.mxu0 %v2399
        %2518 = vmatprep.subr.mxu0 0.0
        %2519 = vmatpush1.msra.mxu0 %v2400
        %2520 = vmatprep.subr.mxu0 0.0
        %2521 = vmatpush1.msra.mxu0 %v2401
        %2522 = vmatprep.subr.mxu0 0.0
        %2523 = vmatpush1.msra.mxu0 %v2402
        %2524 = vmatprep.subr.mxu0 0.0
        %2525 = vmatpush1.msra.mxu0 %v2403
        %2526 = vmatprep.subr.mxu0 0.0
        %2527 = vmatpush1.msra.mxu0 %v2404
        %2528 = vmatprep.subr.mxu0 0.0
        %2529 = vmatpush1.msra.mxu0 %v2405
        %2530 = vmatprep.subr.mxu0 0.0
        %2531 = vmatpush1.msra.mxu0 %v2406
        %2532 = vmatprep.subr.mxu0 0.0
        %2533 = vmatpush1.msra.mxu0 0.0
        %2534 = vmatprep.subr.mxu0 0.0
        %2535 = vmatpush1.msra.mxu0 0.0
        %2536 = vmatprep.subr.mxu0 0.0
        %2537 = vmatpush1.msra.mxu0 0.0
        %2538 = vmatprep.subr.mxu0 0.0
        %2539 = vmatpush1.msra.mxu0 0.0
        %2540 = vmatprep.subr.mxu0 0.0
        %2541 = vmatpush1.msra.mxu0 0.0
        %2542 = vmatprep.subr.mxu0 0.0
        %2543 = vmatpush1.msra.mxu0 0.0
        %2544 = vmatprep.subr.mxu0 0.0
        %2545 = vmatpush1.msra.mxu0 0.0
        %2546 = vmatprep.subr.mxu0 0.0
        %2547 = vmatpush1.msra.mxu0 0.0
        %2548 = vmatprep.subr.mxu0 0.0
        %2549 = vmatpush1.msra.mxu0 0.0
        %2550 = vmatprep.subr.mxu0 0.0
        %2551 = vmatpush1.msra.mxu0 0.0
        %2552 = vmatprep.subr.mxu0 0.0
        %2553 = vmatpush1.msra.mxu0 0.0
        %2554 = vmatprep.subr.mxu0 0.0
        %2555 = vmatpush1.msra.mxu0 0.0
        %2556 = vmatprep.subr.mxu0 0.0
        %2557 = vmatpush1.msra.mxu0 0.0
        %2558 = vmatprep.subr.mxu0 0.0
        %2559 = vmatpush1.msra.mxu0 0.0
        %2560 = vmatprep.subr.mxu0 0.0
        %2561 = vmatpush1.msra.mxu0 0.0
        %2562 = vmatprep.subr.mxu0 0.0
        %2563 = vmatpush1.msra.mxu0 0.0
        %2564 = vmatprep.mubr.f32.mxu0 0.0
        %2565 = vmatmul.mubr.f32.gmra.mrb[0].mxu0 %v2376
        %v2566 = vpop.f32.mrb[0].mxu0
        %v2567 = vadd.f32 %v2492, %v2566
        %v2568 = vpop.f32.mrb[0].mxu0
        %2569 = vmatprep.mubr.f32.mxu0 0.0
        %2570 = vmatmul.mubr.f32.gmra.mrb[0].mxu0 %v2377
        %v2571 = vpop.f32.mrb[0].mxu0
        %v2572 = vadd.f32 %v2497, %v2571
        %v2573 = vpop.f32.mrb[0].mxu0
        %2574 = vdwg.mxu0
        %v2575 = vld [vmem:[#allocation6 + $0x5] sm:$0xff]
        %v2576 = vld [vmem:[#allocation6 + $0xd] sm:$0xff]
        %s2577 = scalar_lea.vmem [#allocation13], 128
        %v2578 = vld [vmem:[%s2577] sm:$0xff]
        %v2579 = vld [vmem:[%s2577 + $0x8] sm:$0xff]
        %v2580 = vld [vmem:[%s2577 + $0x10] sm:$0xff]
        %v2581 = vld [vmem:[%s2577 + $0x18] sm:$0xff]
        %v2582 = vld [vmem:[%s2577 + $0x20] sm:$0xff]
        %v2583 = vld [vmem:[%s2577 + $0x28] sm:$0xff]
        %v2584 = vld [vmem:[%s2577 + $0x30] sm:$0xff]
        %v2585 = vld [vmem:[%s2577 + $0x38] sm:$0xff]
        %v2586 = vld [vmem:[%s2577 + $0x40] sm:$0xff]
        %v2587 = vld [vmem:[%s2577 + $0x48] sm:$0xff]
        %v2588 = vld [vmem:[%s2577 + $0x50] sm:$0xff]
        %v2589 = vld [vmem:[%s2577 + $0x58] sm:$0xff]
        %v2590 = vld [vmem:[%s2577 + $0x60] sm:$0xff]
        %v2591 = vld [vmem:[%s2577 + $0x68] sm:$0xff]
        %v2592 = vld [vmem:[%s2577 + $0x70] sm:$0xff]
        %v2593 = vld [vmem:[%s2577 + $0x78] sm:$0xff]
        %2594 = vmatprep.subr.mxu0 0.0
        %2595 = vmatpush1.msra.mxu0 %v2578
        %2596 = vmatprep.subr.mxu0 0.0
        %2597 = vmatpush1.msra.mxu0 %v2579
        %2598 = vmatprep.subr.mxu0 0.0
        %2599 = vmatpush1.msra.mxu0 %v2580
        %2600 = vmatprep.subr.mxu0 0.0
        %2601 = vmatpush1.msra.mxu0 %v2581
        %2602 = vmatprep.subr.mxu0 0.0
        %2603 = vmatpush1.msra.mxu0 %v2582
        %2604 = vmatprep.subr.mxu0 0.0
        %2605 = vmatpush1.msra.mxu0 %v2583
        %2606 = vmatprep.subr.mxu0 0.0
        %2607 = vmatpush1.msra.mxu0 %v2584
        %2608 = vmatprep.subr.mxu0 0.0
        %2609 = vmatpush1.msra.mxu0 %v2585
        %2610 = vmatprep.subr.mxu0 0.0
        %2611 = vmatpush1.msra.mxu0 %v2586
        %2612 = vmatprep.subr.mxu0 0.0
        %2613 = vmatpush1.msra.mxu0 %v2587
        %2614 = vmatprep.subr.mxu0 0.0
        %2615 = vmatpush1.msra.mxu0 %v2588
        %2616 = vmatprep.subr.mxu0 0.0
        %2617 = vmatpush1.msra.mxu0 %v2589
        %2618 = vmatprep.subr.mxu0 0.0
        %2619 = vmatpush1.msra.mxu0 %v2590
        %2620 = vmatprep.subr.mxu0 0.0
        %2621 = vmatpush1.msra.mxu0 %v2591
        %2622 = vmatprep.subr.mxu0 0.0
        %2623 = vmatpush1.msra.mxu0 %v2592
        %2624 = vmatprep.subr.mxu0 0.0
        %2625 = vmatpush1.msra.mxu0 %v2593
        %2626 = vmatprep.subr.mxu0 0.0
        %2627 = vmatpush1.msra.mxu0 0.0
        %2628 = vmatprep.subr.mxu0 0.0
        %2629 = vmatpush1.msra.mxu0 0.0
        %2630 = vmatprep.subr.mxu0 0.0
        %2631 = vmatpush1.msra.mxu0 0.0
        %2632 = vmatprep.subr.mxu0 0.0
        %2633 = vmatpush1.msra.mxu0 0.0
        %2634 = vmatprep.subr.mxu0 0.0
        %2635 = vmatpush1.msra.mxu0 0.0
        %2636 = vmatprep.subr.mxu0 0.0
        %2637 = vmatpush1.msra.mxu0 0.0
        %2638 = vmatprep.subr.mxu0 0.0
        %2639 = vmatpush1.msra.mxu0 0.0
        %2640 = vmatprep.subr.mxu0 0.0
        %2641 = vmatpush1.msra.mxu0 0.0
        %2642 = vmatprep.subr.mxu0 0.0
        %2643 = vmatpush1.msra.mxu0 0.0
        %2644 = vmatprep.subr.mxu0 0.0
        %2645 = vmatpush1.msra.mxu0 0.0
        %2646 = vmatprep.subr.mxu0 0.0
        %2647 = vmatpush1.msra.mxu0 0.0
        %2648 = vmatprep.subr.mxu0 0.0
        %2649 = vmatpush1.msra.mxu0 0.0
        %2650 = vmatprep.subr.mxu0 0.0
        %2651 = vmatpush1.msra.mxu0 0.0
        %2652 = vmatprep.subr.mxu0 0.0
        %2653 = vmatpush1.msra.mxu0 0.0
        %2654 = vmatprep.subr.mxu0 0.0
        %2655 = vmatpush1.msra.mxu0 0.0
        %2656 = vmatprep.subr.mxu0 0.0
        %2657 = vmatpush1.msra.mxu0 0.0
        %2658 = vmatprep.mubr.f32.mxu0 0.0
        %2659 = vmatmul.mubr.f32.gmra.mrb[0].mxu0 %v2575
        %v2660 = vpop.f32.mrb[0].mxu0
        %v2661 = vadd.f32 0.0, %v2660
        %v2662 = vpop.f32.mrb[0].mxu0
        %2663 = vmatprep.mubr.f32.mxu0 0.0
        %2664 = vmatmul.mubr.f32.gmra.mrb[0].mxu0 %v2576
        %v2665 = vpop.f32.mrb[0].mxu0
        %v2666 = vadd.f32 0.0, %v2665
        %v2667 = vpop.f32.mrb[0].mxu0
        %2668 = vdwg.mxu0
        %v2669 = vadd.f32 %v2567, %v2661
        %v2670 = vadd.f32 %v2572, %v2666
        %v2671 = vld [vmem:[#allocation6 + $0x6] sm:$0xff]
        %v2672 = vld [vmem:[#allocation6 + $0xe] sm:$0xff]
        %s2673 = scalar_lea.vmem [#allocation13], 256
        %v2674 = vld [vmem:[%s2673] sm:$0xff]
        %v2675 = vld [vmem:[%s2673 + $0x8] sm:$0xff]
        %v2676 = vld [vmem:[%s2673 + $0x10] sm:$0xff]
        %v2677 = vld [vmem:[%s2673 + $0x18] sm:$0xff]
        %v2678 = vld [vmem:[%s2673 + $0x20] sm:$0xff]
        %v2679 = vld [vmem:[%s2673 + $0x28] sm:$0xff]
        %v2680 = vld [vmem:[%s2673 + $0x30] sm:$0xff]
        %v2681 = vld [vmem:[%s2673 + $0x38] sm:$0xff]
        %v2682 = vld [vmem:[%s2673 + $0x40] sm:$0xff]
        %v2683 = vld [vmem:[%s2673 + $0x48] sm:$0xff]
        %v2684 = vld [vmem:[%s2673 + $0x50] sm:$0xff]
        %v2685 = vld [vmem:[%s2673 + $0x58] sm:$0xff]
        %v2686 = vld [vmem:[%s2673 + $0x60] sm:$0xff]
        %v2687 = vld [vmem:[%s2673 + $0x68] sm:$0xff]
        %v2688 = vld [vmem:[%s2673 + $0x70] sm:$0xff]
        %v2689 = vld [vmem:[%s2673 + $0x78] sm:$0xff]
        %2690 = vmatprep.subr.mxu0 0.0
        %2691 = vmatpush1.msra.mxu0 %v2674
        %2692 = vmatprep.subr.mxu0 0.0
        %2693 = vmatpush1.msra.mxu0 %v2675
        %2694 = vmatprep.subr.mxu0 0.0
        %2695 = vmatpush1.msra.mxu0 %v2676
        %2696 = vmatprep.subr.mxu0 0.0
        %2697 = vmatpush1.msra.mxu0 %v2677
        %2698 = vmatprep.subr.mxu0 0.0
        %2699 = vmatpush1.msra.mxu0 %v2678
        %2700 = vmatprep.subr.mxu0 0.0
        %2701 = vmatpush1.msra.mxu0 %v2679
        %2702 = vmatprep.subr.mxu0 0.0
        %2703 = vmatpush1.msra.mxu0 %v2680
        %2704 = vmatprep.subr.mxu0 0.0
        %2705 = vmatpush1.msra.mxu0 %v2681
        %2706 = vmatprep.subr.mxu0 0.0
        %2707 = vmatpush1.msra.mxu0 %v2682
        %2708 = vmatprep.subr.mxu0 0.0
        %2709 = vmatpush1.msra.mxu0 %v2683
        %2710 = vmatprep.subr.mxu0 0.0
        %2711 = vmatpush1.msra.mxu0 %v2684
        %2712 = vmatprep.subr.mxu0 0.0
        %2713 = vmatpush1.msra.mxu0 %v2685
        %2714 = vmatprep.subr.mxu0 0.0
        %2715 = vmatpush1.msra.mxu0 %v2686
        %2716 = vmatprep.subr.mxu0 0.0
        %2717 = vmatpush1.msra.mxu0 %v2687
        %2718 = vmatprep.subr.mxu0 0.0
        %2719 = vmatpush1.msra.mxu0 %v2688
        %2720 = vmatprep.subr.mxu0 0.0
        %2721 = vmatpush1.msra.mxu0 %v2689
        %2722 = vmatprep.subr.mxu0 0.0
        %2723 = vmatpush1.msra.mxu0 0.0
        %2724 = vmatprep.subr.mxu0 0.0
        %2725 = vmatpush1.msra.mxu0 0.0
        %2726 = vmatprep.subr.mxu0 0.0
        %2727 = vmatpush1.msra.mxu0 0.0
        %2728 = vmatprep.subr.mxu0 0.0
        %2729 = vmatpush1.msra.mxu0 0.0
        %2730 = vmatprep.subr.mxu0 0.0
        %2731 = vmatpush1.msra.mxu0 0.0
        %2732 = vmatprep.subr.mxu0 0.0
        %2733 = vmatpush1.msra.mxu0 0.0
        %2734 = vmatprep.subr.mxu0 0.0
        %2735 = vmatpush1.msra.mxu0 0.0
        %2736 = vmatprep.subr.mxu0 0.0
        %2737 = vmatpush1.msra.mxu0 0.0
        %2738 = vmatprep.subr.mxu0 0.0
        %2739 = vmatpush1.msra.mxu0 0.0
        %2740 = vmatprep.subr.mxu0 0.0
        %2741 = vmatpush1.msra.mxu0 0.0
        %2742 = vmatprep.subr.mxu0 0.0
        %2743 = vmatpush1.msra.mxu0 0.0
        %2744 = vmatprep.subr.mxu0 0.0
        %2745 = vmatpush1.msra.mxu0 0.0
        %2746 = vmatprep.subr.mxu0 0.0
        %2747 = vmatpush1.msra.mxu0 0.0
        %2748 = vmatprep.subr.mxu0 0.0
        %2749 = vmatpush1.msra.mxu0 0.0
        %2750 = vmatprep.subr.mxu0 0.0
        %2751 = vmatpush1.msra.mxu0 0.0
        %2752 = vmatprep.subr.mxu0 0.0
        %2753 = vmatpush1.msra.mxu0 0.0
        %2754 = vmatprep.mubr.f32.mxu0 0.0
        %2755 = vmatmul.mubr.f32.gmra.mrb[0].mxu0 %v2671
        %v2756 = vpop.f32.mrb[0].mxu0
        %v2757 = vadd.f32 0.0, %v2756
        %v2758 = vpop.f32.mrb[0].mxu0
        %2759 = vmatprep.mubr.f32.mxu0 0.0
        %2760 = vmatmul.mubr.f32.gmra.mrb[0].mxu0 %v2672
        %v2761 = vpop.f32.mrb[0].mxu0
        %v2762 = vadd.f32 0.0, %v2761
        %v2763 = vpop.f32.mrb[0].mxu0
        %2764 = vdwg.mxu0
        %v2765 = vadd.f32 %v2669, %v2757
        %v2766 = vadd.f32 %v2670, %v2762
        %v2767 = vld [vmem:[#allocation6 + $0x7] sm:$0xff]
        %v2768 = vld [vmem:[#allocation6 + $0xf] sm:$0xff]
        %s2769 = scalar_lea.vmem [#allocation13], 384
        %v2770 = vld [vmem:[%s2769] sm:$0xff]
        %v2771 = vld [vmem:[%s2769 + $0x8] sm:$0xff]
        %v2772 = vld [vmem:[%s2769 + $0x10] sm:$0xff]
        %v2773 = vld [vmem:[%s2769 + $0x18] sm:$0xff]
        %v2774 = vld [vmem:[%s2769 + $0x20] sm:$0xff]
        %v2775 = vld [vmem:[%s2769 + $0x28] sm:$0xff]
        %v2776 = vld [vmem:[%s2769 + $0x30] sm:$0xff]
        %v2777 = vld [vmem:[%s2769 + $0x38] sm:$0xff]
        %v2778 = vld [vmem:[%s2769 + $0x40] sm:$0xff]
        %v2779 = vld [vmem:[%s2769 + $0x48] sm:$0xff]
        %v2780 = vld [vmem:[%s2769 + $0x50] sm:$0xff]
        %v2781 = vld [vmem:[%s2769 + $0x58] sm:$0xff]
        %v2782 = vld [vmem:[%s2769 + $0x60] sm:$0xff]
        %v2783 = vld [vmem:[%s2769 + $0x68] sm:$0xff]
        %v2784 = vld [vmem:[%s2769 + $0x70] sm:$0xff]
        %v2785 = vld [vmem:[%s2769 + $0x78] sm:$0xff]
        %2786 = vmatprep.subr.mxu0 0.0
        %2787 = vmatpush1.msra.mxu0 %v2770
        %2788 = vmatprep.subr.mxu0 0.0
        %2789 = vmatpush1.msra.mxu0 %v2771
        %2790 = vmatprep.subr.mxu0 0.0
        %2791 = vmatpush1.msra.mxu0 %v2772
        %2792 = vmatprep.subr.mxu0 0.0
        %2793 = vmatpush1.msra.mxu0 %v2773
        %2794 = vmatprep.subr.mxu0 0.0
        %2795 = vmatpush1.msra.mxu0 %v2774
        %2796 = vmatprep.subr.mxu0 0.0
        %2797 = vmatpush1.msra.mxu0 %v2775
        %2798 = vmatprep.subr.mxu0 0.0
        %2799 = vmatpush1.msra.mxu0 %v2776
        %2800 = vmatprep.subr.mxu0 0.0
        %2801 = vmatpush1.msra.mxu0 %v2777
        %2802 = vmatprep.subr.mxu0 0.0
        %2803 = vmatpush1.msra.mxu0 %v2778
        %2804 = vmatprep.subr.mxu0 0.0
        %2805 = vmatpush1.msra.mxu0 %v2779
        %2806 = vmatprep.subr.mxu0 0.0
        %2807 = vmatpush1.msra.mxu0 %v2780
        %2808 = vmatprep.subr.mxu0 0.0
        %2809 = vmatpush1.msra.mxu0 %v2781
        %2810 = vmatprep.subr.mxu0 0.0
        %2811 = vmatpush1.msra.mxu0 %v2782
        %2812 = vmatprep.subr.mxu0 0.0
        %2813 = vmatpush1.msra.mxu0 %v2783
        %2814 = vmatprep.subr.mxu0 0.0
        %2815 = vmatpush1.msra.mxu0 %v2784
        %2816 = vmatprep.subr.mxu0 0.0
        %2817 = vmatpush1.msra.mxu0 %v2785
        %2818 = vmatprep.subr.mxu0 0.0
        %2819 = vmatpush1.msra.mxu0 0.0
        %2820 = vmatprep.subr.mxu0 0.0
        %2821 = vmatpush1.msra.mxu0 0.0
        %2822 = vmatprep.subr.mxu0 0.0
        %2823 = vmatpush1.msra.mxu0 0.0
        %2824 = vmatprep.subr.mxu0 0.0
        %2825 = vmatpush1.msra.mxu0 0.0
        %2826 = vmatprep.subr.mxu0 0.0
        %2827 = vmatpush1.msra.mxu0 0.0
        %2828 = vmatprep.subr.mxu0 0.0
        %2829 = vmatpush1.msra.mxu0 0.0
        %2830 = vmatprep.subr.mxu0 0.0
        %2831 = vmatpush1.msra.mxu0 0.0
        %2832 = vmatprep.subr.mxu0 0.0
        %2833 = vmatpush1.msra.mxu0 0.0
        %2834 = vmatprep.subr.mxu0 0.0
        %2835 = vmatpush1.msra.mxu0 0.0
        %2836 = vmatprep.subr.mxu0 0.0
        %2837 = vmatpush1.msra.mxu0 0.0
        %2838 = vmatprep.subr.mxu0 0.0
        %2839 = vmatpush1.msra.mxu0 0.0
        %2840 = vmatprep.subr.mxu0 0.0
        %2841 = vmatpush1.msra.mxu0 0.0
        %2842 = vmatprep.subr.mxu0 0.0
        %2843 = vmatpush1.msra.mxu0 0.0
        %2844 = vmatprep.subr.mxu0 0.0
        %2845 = vmatpush1.msra.mxu0 0.0
        %2846 = vmatprep.subr.mxu0 0.0
        %2847 = vmatpush1.msra.mxu0 0.0
        %2848 = vmatprep.subr.mxu0 0.0
        %2849 = vmatpush1.msra.mxu0 0.0
        %2850 = vmatprep.mubr.f32.mxu0 0.0
        %2851 = vmatmul.mubr.f32.gmra.mrb[0].mxu0 %v2767
        %v2852 = vpop.f32.mrb[0].mxu0
        %v2853 = vadd.f32 0.0, %v2852
        %v2854 = vpop.f32.mrb[0].mxu0
        %2855 = vmatprep.mubr.f32.mxu0 0.0
        %2856 = vmatmul.mubr.f32.gmra.mrb[0].mxu0 %v2768
        %v2857 = vpop.f32.mrb[0].mxu0
        %v2858 = vadd.f32 0.0, %v2857
        %v2859 = vpop.f32.mrb[0].mxu0
        %2860 = vdwg.mxu0
        %v2861 = vadd.f32 %v2765, %v2853
        %v2862 = vadd.f32 %v2766, %v2858
        %v2864 = vlaneseq
        %v2865 = vshrl.u32 %v2864, 7
        %v2866 = vsub.s32 0, %v2865
        %v2867 = vrot.slane %v2378, %v2866
        %v2869 = vadd.f32 %v2861, %v2867
        %v2870 = vadd.f32 %v2862, %v2867
        %2871 = vst [vmem:[%s395] sm:$0xff] %v2869
        %2872 = vst [vmem:[%s395 + $0x8] sm:$0xff] %v2870
        %s2873 = sand.u32 %s203, 1
        %s2874 = scalar_lea.sflag [#allocation9], %s2873
        %s2875 = sand.u32 %s203, 1
        %s2876 = smul.addr %s2875, 16
        %s2877 = scalar_lea.vmem [#allocation19], %s2876
        // Predicated region
        $region117: #{tpu_custom_call.1} parent=47 // pred_check
          %p2878 = pneg %p213
        $region118: #{tpu_custom_call.1} parent=47 // pred_check_branch
          %2880 = sbr.rel (%p2878) target = $region120
        $region119: #{tpu_custom_call.1} parent=47 // pred_region
          %s2881 = smul.u32 2, %s32
          %s2883 = ssub.s32 256, 256
          %2884 = vsyncadd %s2874, %s2883
          %s2885 = smul.addr %s31, 2
          %s2886 = sadd.s32 %s2881, %s2885
          %s2887 = smul.addr %s2886, 128
          %s2888 = scalar_lea.hbm %s7, %s2887
          %s2889 = sshll.u32 %s2877, 4
          %s2890 = int_to_ptr.vmem [resolvable:$true] %s2889
          %2895 = dma.vmem_to_hbm [thread:$0]  %s2890, 256, %s2888, %s2874, 128, 128, 8
        $region120: #{tpu_custom_call.1} parent=47 // pred_fallthru
          _
      $region48: #{tpu_custom_call.1} parent=5 // pred_fallthru
        _
      %p2896 = scmp.le.s32.totalorder 2, %s22
      // Predicated region
      $region121: #{tpu_custom_call.1} parent=5 // pred_check
        %p2897 = pneg %p2896
      $region122: #{tpu_custom_call.1} parent=5 // pred_check_branch
        %2899 = sbr.rel (%p2897) target = $region124
      $region123: #{tpu_custom_call.1} parent=5 // pred_region
        %s2900 = ssub.s32 %s22, 2
        // Predicated region
        $region125: #{tpu_custom_call.1} parent=123 // pred_check
          %p2901 = pneg %p219
        $region126: #{tpu_custom_call.1} parent=123 // pred_check_branch
          %2903 = sbr.rel (%p2901) target = $region128
        $region127: #{tpu_custom_call.1} parent=123 // pred_region
          %s2904 = sand.u32 %s204, 1
          %s2905 = scalar_lea.sflag [#allocation9], %s2904
          %s2906 = sand.u32 %s204, 1
          %s2907 = smul.addr %s2906, 16
          %s2908 = scalar_lea.vmem [#allocation19], %s2907
          %2909 = dma.done %s2905, 256
        $region128: #{tpu_custom_call.1} parent=123 // pred_fallthru
          _
      $region124: #{tpu_custom_call.1} parent=5 // pred_fallthru
        _
    $region6: #{tpu_custom_call.1} parent=1 // loop_footer
      %s26 = sadd.s32 1, %s22
    $region7: #{tpu_custom_call.1} parent=1 // loop_footer_branch
      %21 = sbr.rel target = $region3
    $region8: #{tpu_custom_call.1} parent=1 // loop_exit
      _
    %2910 = vsyncpa [#allocation8], 1
    %s2911 = scalar_lea.sflag [#allocation8], 1
    %2912 = vsyncpa %s2911, 1
    %2913 = vsyncpa [#allocation11], 1
    %2914 = vsyncpa [#allocation14], 1
    %2915 = vsyncpa [#allocation17], 1
    %2916 = vsyncpa [#allocation9], 1
    %s2917 = scalar_lea.sflag [#allocation9], 1
    %2918 = vsyncpa %s2917, 1

</llo_original>
